<compile_context>
chip_gen: v5e
topology: v5e:2x2
jax: 0.10.0
libtpu: 0.0.40
codegen_flags: <defaults>
</compile_context>

<pallas_src>
import functools

import jax
import jax.numpy as jnp
import numpy as np
from jax import lax
from jax.experimental import pallas as pl
from jax.experimental.pallas import tpu as pltpu


# ----------------------------- Pallas kernel -------------------------------

def _lstm_fc_kernel(num_layers, batch, *refs):
    """All-in-VMEM multi-layer LSTM + final Linear (single grid point).

    refs = [x2d, h0, c0,
            (w_ihT_p, w_hhT_p, b_p) * num_layers,
            w_fcT_p, b_fc_p,
            out2d, h_n, c_n,
            proj_scr, seq_scr]

    Shapes (Hp = hidden padded to a multiple of 128, Op = output padded):
      x2d      (S*B, I)      time-major rows: row index = t*B + b
      h0, c0   (L, B, Hp)    zero-padded initial hidden/cell state
      w_ihT_p  (in_l, 4*Hp)  each gate block zero-padded to Hp lanes
      w_hhT_p  (Hp, 4*Hp)
      b_p      (1, 4*Hp)     b_ih + b_hh, gate blocks padded
      w_fcT_p  (Hp, Op), b_fc_p (1, Op)
      out2d    (S*B, Op)     lane-dense output, sliced back to O in the wrapper
      proj_scr (S*B, 4*Hp)   precomputed x @ W_ih + b for all timesteps
      seq_scr  (S*B, Hp)     per-layer output sequence (next layer's input)
    """
    idx = 0
    x_ref = refs[idx]; idx += 1
    h0_ref = refs[idx]; idx += 1
    c0_ref = refs[idx]; idx += 1
    layer_refs = []
    for _ in range(num_layers):
        layer_refs.append((refs[idx], refs[idx + 1], refs[idx + 2]))
        idx += 3
    wfc_ref = refs[idx]; idx += 1
    bfc_ref = refs[idx]; idx += 1
    out_ref = refs[idx]; idx += 1
    hn_ref = refs[idx]; idx += 1
    cn_ref = refs[idx]; idx += 1
    proj_scr = refs[idx]; idx += 1
    seq_scr = refs[idx]; idx += 1

    B = batch
    SB, Hp = seq_scr.shape
    S = SB // B

    for layer in range(num_layers):
        w_ih_ref, w_hh_ref, b_ref = layer_refs[layer]

        # (1) Input projection for every timestep in one batched matmul with
        #     the bias folded in.  Entirely off the serial critical path.
        xin = x_ref[...] if layer == 0 else seq_scr[...]
        proj_scr[...] = (
            jnp.dot(xin, w_ih_ref[...], preferred_element_type=jnp.float32)
            + b_ref[...])

        # (2) Serial recurrence: h/c carried as values, fully unrolled static
        #     time loop, only static slices.  Each step: one MXU matmul,
        #     whole-vreg gate slices, EUP sigmoid/tanh, VPU combines.
        h = h0_ref[layer]                      # (B, Hp), padded lanes == 0
        c = c0_ref[layer]
        for t in range(S):
            r0, r1 = t * B, (t + 1) * B
            gates = proj_scr[r0:r1, :] + jnp.dot(
                h, w_hh_ref[...], preferred_element_type=jnp.float32)
            # Gate blocks are padded to Hp lanes -> vreg-aligned slices.
            i_g = jax.nn.sigmoid(gates[:, 0 * Hp:1 * Hp])
            f_g = jax.nn.sigmoid(gates[:, 1 * Hp:2 * Hp])
            g_g = jnp.tanh(gates[:, 2 * Hp:3 * Hp])
            o_g = jax.nn.sigmoid(gates[:, 3 * Hp:4 * Hp])
            c = f_g * c + i_g * g_g            # padded lanes stay exactly 0
            h = o_g * jnp.tanh(c)
            seq_scr[r0:r1, :] = h              # consumed by next layer / fc
        hn_ref[layer] = h
        cn_ref[layer] = c

    # (3) Final Linear hoisted out of the time loop: one lane-dense matmul.
    out_ref[...] = (
        jnp.dot(seq_scr[...], wfc_ref[...], preferred_element_type=jnp.float32)
        + bfc_ref[...])


# ------------------------------- wrapper ------------------------------------

def _round_up(n, m):
    return ((n + m - 1) // m) * m


def _gate_pad_cols(wT, H, Hp):
    """(rows, 4H) -> (rows, 4*Hp): each of the 4 gate blocks zero-padded."""
    if Hp == H:
        return wT
    blocks = [jnp.pad(wT[:, g * H:(g + 1) * H], ((0, 0), (0, Hp - H)))
              for g in range(4)]
    return jnp.concatenate(blocks, axis=1)


def lstm_model_forward(x, hidden_state, params, *, num_layers, hidden_size,
                       output_size):
    """Matches LSTM_Model.forward: returns (out, (h_n, c_n))."""
    h0, c0 = hidden_state
    B, S, I = x.shape
    L, H, O = num_layers, hidden_size, output_size
    Hp = _round_up(H, 128)          # lane-aligned hidden width
    Op = _round_up(O, 128)          # lane-dense output width

    # Time-major rows (row t*B + b) so per-timestep slices inside the kernel
    # are contiguous sublane blocks (tiny HBM copy at these shapes).
    x2d = jnp.transpose(x, (1, 0, 2)).reshape(S * B, I).astype(jnp.float32)
    pad_h = ((0, 0), (0, 0), (0, Hp - H))
    h0_p = jnp.pad(h0.astype(jnp.float32), pad_h)
    c0_p = jnp.pad(c0.astype(jnp.float32), pad_h)

    kernel_inputs = [x2d, h0_p, c0_p]
    for l in range(L):
        in_l = I if l == 0 else H
        in_lp = I if l == 0 else Hp
        w_ih = _gate_pad_cols(params[f"w_ih_{l}"].T.astype(jnp.float32), H, Hp)
        w_hh = _gate_pad_cols(params[f"w_hh_{l}"].T.astype(jnp.float32), H, Hp)
        w_ih = jnp.pad(w_ih, ((0, in_lp - in_l), (0, 0)))
        w_hh = jnp.pad(w_hh, ((0, Hp - H), (0, 0)))
        b = (params[f"b_ih_{l}"] + params[f"b_hh_{l}"]).astype(jnp.float32)
        b = _gate_pad_cols(b.reshape(1, 4 * H), H, Hp)
        kernel_inputs += [w_ih, w_hh, b]
    w_fc = jnp.pad(params["w_fc"].T.astype(jnp.float32),
                   ((0, Hp - H), (0, Op - O)))
    b_fc = jnp.pad(params["b_fc"].astype(jnp.float32).reshape(1, O),
                   ((0, 0), (0, Op - O)))
    kernel_inputs += [w_fc, b_fc]

    vmem = pl.BlockSpec(memory_space=pltpu.MemorySpace.VMEM)
    out2d, h_n, c_n = pl.pallas_call(
        functools.partial(_lstm_fc_kernel, L, B),
        out_shape=(
            jax.ShapeDtypeStruct((S * B, Op), jnp.float32),
            jax.ShapeDtypeStruct((L, B, Hp), jnp.float32),
            jax.ShapeDtypeStruct((L, B, Hp), jnp.float32),
        ),
        in_specs=[vmem] * len(kernel_inputs),
        out_specs=(vmem, vmem, vmem),
        scratch_shapes=[
            pltpu.VMEM((S * B, 4 * Hp), jnp.float32),   # x @ W_ih + b, all t
            pltpu.VMEM((S * B, Hp), jnp.float32),       # per-layer h sequence
        ],
        # Explicit VMEM budget (usage here is ~1.5 MiB; 16 MiB fits the scoped
        # default on every generation, incl. v7x's smaller 64 MiB VMEM).
        compiler_params=pltpu.CompilerParams(vmem_limit_bytes=16 * 1024 * 1024),
    )(*kernel_inputs)

    out = out2d[:, :O].reshape(S, B, O).transpose(1, 0, 2)   # (B, S, O)
    return out, (h_n[:, :, :H], c_n[:, :, :H])


# --------------------------- pure-JAX reference ------------------------------

def lstm_model_reference(x, hidden_state, params, *, num_layers, hidden_size,
                         output_size):
    h0, c0 = hidden_state
    H = hidden_size
    seq = x.astype(jnp.float32)
    hs, cs = [], []
    for l in range(num_layers):
        w_ih = params[f"w_ih_{l}"]
        w_hh = params[f"w_hh_{l}"]
        b = params[f"b_ih_{l}"] + params[f"b_hh_{l}"]

        def step(carry, x_t, w_ih=w_ih, w_hh=w_hh, b=b):
            h, c = carry
            gates = x_t @ w_ih.T + h @ w_hh.T + b
            i = jax.nn.sigmoid(gates[:, 0:H])
            f = jax.nn.sigmoid(gates[:, H:2 * H])
            g = jnp.tanh(gates[:, 2 * H:3 * H])
            o = jax.nn.sigmoid(gates[:, 3 * H:4 * H])
            c = f * c + i * g
            h = o * jnp.tanh(c)
            return (h, c), h

        (h_f, c_f), out_tm = lax.scan(step, (h0[l], c0[l]),
                                      jnp.transpose(seq, (1, 0, 2)))
        seq = jnp.transpose(out_tm, (1, 0, 2))
        hs.append(h_f)
        cs.append(c_f)
    out = seq @ params["w_fc"].T + params["b_fc"]
    return out, (jnp.stack(hs), jnp.stack(cs))


# --------------------------------- main --------------------------------------

if __name__ == "__main__":
    input_size, hidden_size, num_layers, output_size = 16, 32, 2, 8
    batch, seq_len = 2, 8

    key = jax.random.PRNGKey(0)
    k = 1.0 / np.sqrt(hidden_size)   # nn.LSTM / nn.Linear default init range

    params = {}
    for l in range(num_layers):
        in_l = input_size if l == 0 else hidden_size
        key, k1, k2, k3, k4 = jax.random.split(key, 5)
        params[f"w_ih_{l}"] = jax.random.uniform(
            k1, (4 * hidden_size, in_l), jnp.float32, -k, k)
        params[f"w_hh_{l}"] = jax.random.uniform(
            k2, (4 * hidden_size, hidden_size), jnp.float32, -k, k)
        params[f"b_ih_{l}"] = jax.random.uniform(
            k3, (4 * hidden_size,), jnp.float32, -k, k)
        params[f"b_hh_{l}"] = jax.random.uniform(
            k4, (4 * hidden_size,), jnp.float32, -k, k)
    key, k5, k6, kx = jax.random.split(key, 4)
    params["w_fc"] = jax.random.uniform(
        k5, (output_size, hidden_size), jnp.float32, -k, k)
    params["b_fc"] = jax.random.uniform(k6, (output_size,), jnp.float32, -k, k)

    x = jax.random.normal(kx, (batch, seq_len, input_size), jnp.float32)
    # init_hidden: zeros of shape (num_layers, batch, hidden)
    h0 = jnp.zeros((num_layers, batch, hidden_size), jnp.float32)
    c0 = jnp.zeros((num_layers, batch, hidden_size), jnp.float32)

    out, (h_n, c_n) = lstm_model_forward(
        x, (h0, c0), params,
        num_layers=num_layers, hidden_size=hidden_size, output_size=output_size)
    jax.block_until_ready((out, h_n, c_n))

    out_ref, (h_ref, c_ref) = lstm_model_reference(
        x, (h0, c0), params,
        num_layers=num_layers, hidden_size=hidden_size, output_size=output_size)

    np.testing.assert_allclose(np.asarray(out), np.asarray(out_ref),
                               rtol=1e-4, atol=1e-4)
    np.testing.assert_allclose(np.asarray(h_n), np.asarray(h_ref),
                               rtol=1e-4, atol=1e-4)
    np.testing.assert_allclose(np.asarray(c_n), np.asarray(c_ref),
                               rtol=1e-4, atol=1e-4)

    print("KERNEL_OK")
</pallas_src>

<mosaic_0001>
module attributes {stable_mosaic.version = 11 : i64} {
  func.func @_lstm_fc_kernel(%arg0: memref<16x16xf32, #tpu.memory_space<vmem>>, %arg1: memref<2x2x128xf32, #tpu.memory_space<vmem>>, %arg2: memref<2x2x128xf32, #tpu.memory_space<vmem>>, %arg3: memref<16x512xf32, #tpu.memory_space<vmem>>, %arg4: memref<128x512xf32, #tpu.memory_space<vmem>>, %arg5: memref<1x512xf32, #tpu.memory_space<vmem>>, %arg6: memref<128x512xf32, #tpu.memory_space<vmem>>, %arg7: memref<128x512xf32, #tpu.memory_space<vmem>>, %arg8: memref<1x512xf32, #tpu.memory_space<vmem>>, %arg9: memref<128x128xf32, #tpu.memory_space<vmem>>, %arg10: memref<1x128xf32, #tpu.memory_space<vmem>>, %arg11: memref<16x128xf32, #tpu.memory_space<vmem>>, %arg12: memref<2x2x128xf32, #tpu.memory_space<vmem>>, %arg13: memref<2x2x128xf32, #tpu.memory_space<vmem>>, %arg14: memref<16x512xf32, #tpu.memory_space<vmem>>, %arg15: memref<16x128xf32, #tpu.memory_space<vmem>>) attributes {dimension_semantics = [], scalar_prefetch = 0 : i64, scratch_operands = 2 : i64, tpu.core_type = #tpu.core_type<tc>} {
    %c0 = arith.constant 0 : index
    %c0_0 = arith.constant 0 : index
    %0 = vector.load %arg0[%c0, %c0_0] : memref<16x16xf32, #tpu.memory_space<vmem>>, vector<16x16xf32>
    %c0_1 = arith.constant 0 : index
    %c0_2 = arith.constant 0 : index
    %1 = vector.load %arg3[%c0_1, %c0_2] : memref<16x512xf32, #tpu.memory_space<vmem>>, vector<16x512xf32>
    %cst = arith.constant dense<0.000000e+00> : vector<16x512xf32>
    %2 = tpu.matmul %0, %1, %cst {dimension_numbers = #tpu.dot_dimension_numbers<[1], [0], [0], [1], [0, 0, 1, 1], [], []>} : vector<16x16xf32>, vector<16x512xf32>, vector<16x512xf32> -> vector<16x512xf32>
    %c0_3 = arith.constant 0 : index
    %c0_4 = arith.constant 0 : index
    %3 = vector.load %arg5[%c0_3, %c0_4] : memref<1x512xf32, #tpu.memory_space<vmem>>, vector<1x512xf32>
    %4 = vector.broadcast %3 : vector<1x512xf32> to vector<16x512xf32>
    %5 = arith.addf %2, %4 : vector<16x512xf32>
    %c0_5 = arith.constant 0 : index
    %c0_6 = arith.constant 0 : index
    %6 = vector.load %arg14[%c0_5, %c0_6] : memref<16x512xf32, #tpu.memory_space<vmem>>, vector<16x512xf32>
    tpu.vector_store %arg14[%c0_5, %c0_6], %5 {strides = array<i32>} : memref<16x512xf32, #tpu.memory_space<vmem>>, vector<16x512xf32>,
    %c0_7 = arith.constant 0 : index
    %c0_8 = arith.constant 0 : index
    %c0_9 = arith.constant 0 : index
    %7 = vector.load %arg1[%c0_7, %c0_8, %c0_9] : memref<2x2x128xf32, #tpu.memory_space<vmem>>, vector<1x2x128xf32>
    %8 = vector.shape_cast %7 : vector<1x2x128xf32> to vector<2x128xf32>
    %c0_10 = arith.constant 0 : index
    %c0_11 = arith.constant 0 : index
    %c0_12 = arith.constant 0 : index
    %9 = vector.load %arg2[%c0_10, %c0_11, %c0_12] : memref<2x2x128xf32, #tpu.memory_space<vmem>>, vector<1x2x128xf32>
    %10 = vector.shape_cast %9 : vector<1x2x128xf32> to vector<2x128xf32>
    %c0_13 = arith.constant 0 : index
    %c0_14 = arith.constant 0 : index
    %11 = vector.load %arg14[%c0_13, %c0_14] : memref<16x512xf32, #tpu.memory_space<vmem>>, vector<2x512xf32>
    %c0_15 = arith.constant 0 : index
    %c0_16 = arith.constant 0 : index
    %12 = vector.load %arg4[%c0_15, %c0_16] : memref<128x512xf32, #tpu.memory_space<vmem>>, vector<128x512xf32>
    %cst_17 = arith.constant dense<0.000000e+00> : vector<2x512xf32>
    %13 = tpu.matmul %8, %12, %cst_17 {dimension_numbers = #tpu.dot_dimension_numbers<[1], [0], [0], [1], [0, 0, 1, 1], [], []>} : vector<2x128xf32>, vector<128x512xf32>, vector<2x512xf32> -> vector<2x512xf32>
    %14 = arith.addf %11, %13 : vector<2x512xf32>
    %15 = vector.extract_strided_slice %14 {offsets = [0, 0], sizes = [2, 128], strides = [1, 1]} : vector<2x512xf32> to vector<2x128xf32>
    %16 = arith.negf %15 : vector<2x128xf32>
    %17 = math.exp %16 : vector<2x128xf32>
    %cst_18 = arith.constant 1.000000e+00 : f32
    %18 = vector.broadcast %cst_18 : f32 to vector<2x128xf32>
    %19 = arith.addf %18, %17 : vector<2x128xf32>
    %20 = arith.divf %18, %19 : vector<2x128xf32>
    %21 = vector.extract_strided_slice %14 {offsets = [0, 128], sizes = [2, 128], strides = [1, 1]} : vector<2x512xf32> to vector<2x128xf32>
    %22 = arith.negf %21 : vector<2x128xf32>
    %23 = math.exp %22 : vector<2x128xf32>
    %cst_19 = arith.constant 1.000000e+00 : f32
    %24 = vector.broadcast %cst_19 : f32 to vector<2x128xf32>
    %25 = arith.addf %24, %23 : vector<2x128xf32>
    %26 = arith.divf %24, %25 : vector<2x128xf32>
    %27 = vector.extract_strided_slice %14 {offsets = [0, 256], sizes = [2, 128], strides = [1, 1]} : vector<2x512xf32> to vector<2x128xf32>
    %28 = math.tanh %27 : vector<2x128xf32>
    %29 = vector.extract_strided_slice %14 {offsets = [0, 384], sizes = [2, 128], strides = [1, 1]} : vector<2x512xf32> to vector<2x128xf32>
    %30 = arith.negf %29 : vector<2x128xf32>
    %31 = math.exp %30 : vector<2x128xf32>
    %cst_20 = arith.constant 1.000000e+00 : f32
    %32 = vector.broadcast %cst_20 : f32 to vector<2x128xf32>
    %33 = arith.addf %32, %31 : vector<2x128xf32>
    %34 = arith.divf %32, %33 : vector<2x128xf32>
    %35 = arith.mulf %26, %10 : vector<2x128xf32>
    %36 = arith.mulf %20, %28 : vector<2x128xf32>
    %37 = arith.addf %35, %36 : vector<2x128xf32>
    %38 = math.tanh %37 : vector<2x128xf32>
    %39 = arith.mulf %34, %38 : vector<2x128xf32>
    %c0_21 = arith.constant 0 : index
    %c0_22 = arith.constant 0 : index
    %40 = vector.load %arg15[%c0_21, %c0_22] : memref<16x128xf32, #tpu.memory_space<vmem>>, vector<2x128xf32>
    tpu.vector_store %arg15[%c0_21, %c0_22], %39 {strides = array<i32>} : memref<16x128xf32, #tpu.memory_space<vmem>>, vector<2x128xf32>,
    %c2 = arith.constant 2 : index
    %c0_23 = arith.constant 0 : index
    %41 = vector.load %arg14[%c2, %c0_23] : memref<16x512xf32, #tpu.memory_space<vmem>>, vector<2x512xf32>
    %c0_24 = arith.constant 0 : index
    %c0_25 = arith.constant 0 : index
    %42 = vector.load %arg4[%c0_24, %c0_25] : memref<128x512xf32, #tpu.memory_space<vmem>>, vector<128x512xf32>
    %cst_26 = arith.constant dense<0.000000e+00> : vector<2x512xf32>
    %43 = tpu.matmul %39, %42, %cst_26 {dimension_numbers = #tpu.dot_dimension_numbers<[1], [0], [0], [1], [0, 0, 1, 1], [], []>} : vector<2x128xf32>, vector<128x512xf32>, vector<2x512xf32> -> vector<2x512xf32>
    %44 = arith.addf %41, %43 : vector<2x512xf32>
    %45 = vector.extract_strided_slice %44 {offsets = [0, 0], sizes = [2, 128], strides = [1, 1]} : vector<2x512xf32> to vector<2x128xf32>
    %46 = arith.negf %45 : vector<2x128xf32>
    %47 = math.exp %46 : vector<2x128xf32>
    %cst_27 = arith.constant 1.000000e+00 : f32
    %48 = vector.broadcast %cst_27 : f32 to vector<2x128xf32>
    %49 = arith.addf %48, %47 : vector<2x128xf32>
    %50 = arith.divf %48, %49 : vector<2x128xf32>
    %51 = vector.extract_strided_slice %44 {offsets = [0, 128], sizes = [2, 128], strides = [1, 1]} : vector<2x512xf32> to vector<2x128xf32>
    %52 = arith.negf %51 : vector<2x128xf32>
    %53 = math.exp %52 : vector<2x128xf32>
    %cst_28 = arith.constant 1.000000e+00 : f32
    %54 = vector.broadcast %cst_28 : f32 to vector<2x128xf32>
    %55 = arith.addf %54, %53 : vector<2x128xf32>
    %56 = arith.divf %54, %55 : vector<2x128xf32>
    %57 = vector.extract_strided_slice %44 {offsets = [0, 256], sizes = [2, 128], strides = [1, 1]} : vector<2x512xf32> to vector<2x128xf32>
    %58 = math.tanh %57 : vector<2x128xf32>
    %59 = vector.extract_strided_slice %44 {offsets = [0, 384], sizes = [2, 128], strides = [1, 1]} : vector<2x512xf32> to vector<2x128xf32>
    %60 = arith.negf %59 : vector<2x128xf32>
    %61 = math.exp %60 : vector<2x128xf32>
    %cst_29 = arith.constant 1.000000e+00 : f32
    %62 = vector.broadcast %cst_29 : f32 to vector<2x128xf32>
    %63 = arith.addf %62, %61 : vector<2x128xf32>
    %64 = arith.divf %62, %63 : vector<2x128xf32>
    %65 = arith.mulf %56, %37 : vector<2x128xf32>
    %66 = arith.mulf %50, %58 : vector<2x128xf32>
    %67 = arith.addf %65, %66 : vector<2x128xf32>
    %68 = math.tanh %67 : vector<2x128xf32>
    %69 = arith.mulf %64, %68 : vector<2x128xf32>
    %c2_30 = arith.constant 2 : index
    %c0_31 = arith.constant 0 : index
    %70 = vector.load %arg15[%c2_30, %c0_31] : memref<16x128xf32, #tpu.memory_space<vmem>>, vector<2x128xf32>
    tpu.vector_store %arg15[%c2_30, %c0_31], %69 {strides = array<i32>} : memref<16x128xf32, #tpu.memory_space<vmem>>, vector<2x128xf32>,
    %c4 = arith.constant 4 : index
    %c0_32 = arith.constant 0 : index
    %71 = vector.load %arg14[%c4, %c0_32] : memref<16x512xf32, #tpu.memory_space<vmem>>, vector<2x512xf32>
    %c0_33 = arith.constant 0 : index
    %c0_34 = arith.constant 0 : index
    %72 = vector.load %arg4[%c0_33, %c0_34] : memref<128x512xf32, #tpu.memory_space<vmem>>, vector<128x512xf32>
    %cst_35 = arith.constant dense<0.000000e+00> : vector<2x512xf32>
    %73 = tpu.matmul %69, %72, %cst_35 {dimension_numbers = #tpu.dot_dimension_numbers<[1], [0], [0], [1], [0, 0, 1, 1], [], []>} : vector<2x128xf32>, vector<128x512xf32>, vector<2x512xf32> -> vector<2x512xf32>
    %74 = arith.addf %71, %73 : vector<2x512xf32>
    %75 = vector.extract_strided_slice %74 {offsets = [0, 0], sizes = [2, 128], strides = [1, 1]} : vector<2x512xf32> to vector<2x128xf32>
    %76 = arith.negf %75 : vector<2x128xf32>
    %77 = math.exp %76 : vector<2x128xf32>
    %cst_36 = arith.constant 1.000000e+00 : f32
    %78 = vector.broadcast %cst_36 : f32 to vector<2x128xf32>
    %79 = arith.addf %78, %77 : vector<2x128xf32>
    %80 = arith.divf %78, %79 : vector<2x128xf32>
    %81 = vector.extract_strided_slice %74 {offsets = [0, 128], sizes = [2, 128], strides = [1, 1]} : vector<2x512xf32> to vector<2x128xf32>
    %82 = arith.negf %81 : vector<2x128xf32>
    %83 = math.exp %82 : vector<2x128xf32>
    %cst_37 = arith.constant 1.000000e+00 : f32
    %84 = vector.broadcast %cst_37 : f32 to vector<2x128xf32>
    %85 = arith.addf %84, %83 : vector<2x128xf32>
    %86 = arith.divf %84, %85 : vector<2x128xf32>
    %87 = vector.extract_strided_slice %74 {offsets = [0, 256], sizes = [2, 128], strides = [1, 1]} : vector<2x512xf32> to vector<2x128xf32>
    %88 = math.tanh %87 : vector<2x128xf32>
    %89 = vector.extract_strided_slice %74 {offsets = [0, 384], sizes = [2, 128], strides = [1, 1]} : vector<2x512xf32> to vector<2x128xf32>
    %90 = arith.negf %89 : vector<2x128xf32>
    %91 = math.exp %90 : vector<2x128xf32>
    %cst_38 = arith.constant 1.000000e+00 : f32
    %92 = vector.broadcast %cst_38 : f32 to vector<2x128xf32>
    %93 = arith.addf %92, %91 : vector<2x128xf32>
    %94 = arith.divf %92, %93 : vector<2x128xf32>
    %95 = arith.mulf %86, %67 : vector<2x128xf32>
    %96 = arith.mulf %80, %88 : vector<2x128xf32>
    %97 = arith.addf %95, %96 : vector<2x128xf32>
    %98 = math.tanh %97 : vector<2x128xf32>
    %99 = arith.mulf %94, %98 : vector<2x128xf32>
    %c4_39 = arith.constant 4 : index
    %c0_40 = arith.constant 0 : index
    %100 = vector.load %arg15[%c4_39, %c0_40] : memref<16x128xf32, #tpu.memory_space<vmem>>, vector<2x128xf32>
    tpu.vector_store %arg15[%c4_39, %c0_40], %99 {strides = array<i32>} : memref<16x128xf32, #tpu.memory_space<vmem>>, vector<2x128xf32>,
    %c6 = arith.constant 6 : index
    %c0_41 = arith.constant 0 : index
    %101 = vector.load %arg14[%c6, %c0_41] : memref<16x512xf32, #tpu.memory_space<vmem>>, vector<2x512xf32>
    %c0_42 = arith.constant 0 : index
    %c0_43 = arith.constant 0 : index
    %102 = vector.load %arg4[%c0_42, %c0_43] : memref<128x512xf32, #tpu.memory_space<vmem>>, vector<128x512xf32>
    %cst_44 = arith.constant dense<0.000000e+00> : vector<2x512xf32>
    %103 = tpu.matmul %99, %102, %cst_44 {dimension_numbers = #tpu.dot_dimension_numbers<[1], [0], [0], [1], [0, 0, 1, 1], [], []>} : vector<2x128xf32>, vector<128x512xf32>, vector<2x512xf32> -> vector<2x512xf32>
    %104 = arith.addf %101, %103 : vector<2x512xf32>
    %105 = vector.extract_strided_slice %104 {offsets = [0, 0], sizes = [2, 128], strides = [1, 1]} : vector<2x512xf32> to vector<2x128xf32>
    %106 = arith.negf %105 : vector<2x128xf32>
    %107 = math.exp %106 : vector<2x128xf32>
    %cst_45 = arith.constant 1.000000e+00 : f32
    %108 = vector.broadcast %cst_45 : f32 to vector<2x128xf32>
    %109 = arith.addf %108, %107 : vector<2x128xf32>
    %110 = arith.divf %108, %109 : vector<2x128xf32>
    %111 = vector.extract_strided_slice %104 {offsets = [0, 128], sizes = [2, 128], strides = [1, 1]} : vector<2x512xf32> to vector<2x128xf32>
    %112 = arith.negf %111 : vector<2x128xf32>
    %113 = math.exp %112 : vector<2x128xf32>
    %cst_46 = arith.constant 1.000000e+00 : f32
    %114 = vector.broadcast %cst_46 : f32 to vector<2x128xf32>
    %115 = arith.addf %114, %113 : vector<2x128xf32>
    %116 = arith.divf %114, %115 : vector<2x128xf32>
    %117 = vector.extract_strided_slice %104 {offsets = [0, 256], sizes = [2, 128], strides = [1, 1]} : vector<2x512xf32> to vector<2x128xf32>
    %118 = math.tanh %117 : vector<2x128xf32>
    %119 = vector.extract_strided_slice %104 {offsets = [0, 384], sizes = [2, 128], strides = [1, 1]} : vector<2x512xf32> to vector<2x128xf32>
    %120 = arith.negf %119 : vector<2x128xf32>
    %121 = math.exp %120 : vector<2x128xf32>
    %cst_47 = arith.constant 1.000000e+00 : f32
    %122 = vector.broadcast %cst_47 : f32 to vector<2x128xf32>
    %123 = arith.addf %122, %121 : vector<2x128xf32>
    %124 = arith.divf %122, %123 : vector<2x128xf32>
    %125 = arith.mulf %116, %97 : vector<2x128xf32>
    %126 = arith.mulf %110, %118 : vector<2x128xf32>
    %127 = arith.addf %125, %126 : vector<2x128xf32>
    %128 = math.tanh %127 : vector<2x128xf32>
    %129 = arith.mulf %124, %128 : vector<2x128xf32>
    %c6_48 = arith.constant 6 : index
    %c0_49 = arith.constant 0 : index
    %130 = vector.load %arg15[%c6_48, %c0_49] : memref<16x128xf32, #tpu.memory_space<vmem>>, vector<2x128xf32>
    tpu.vector_store %arg15[%c6_48, %c0_49], %129 {strides = array<i32>} : memref<16x128xf32, #tpu.memory_space<vmem>>, vector<2x128xf32>,
    %c8 = arith.constant 8 : index
    %c0_50 = arith.constant 0 : index
    %131 = vector.load %arg14[%c8, %c0_50] : memref<16x512xf32, #tpu.memory_space<vmem>>, vector<2x512xf32>
    %c0_51 = arith.constant 0 : index
    %c0_52 = arith.constant 0 : index
    %132 = vector.load %arg4[%c0_51, %c0_52] : memref<128x512xf32, #tpu.memory_space<vmem>>, vector<128x512xf32>
    %cst_53 = arith.constant dense<0.000000e+00> : vector<2x512xf32>
    %133 = tpu.matmul %129, %132, %cst_53 {dimension_numbers = #tpu.dot_dimension_numbers<[1], [0], [0], [1], [0, 0, 1, 1], [], []>} : vector<2x128xf32>, vector<128x512xf32>, vector<2x512xf32> -> vector<2x512xf32>
    %134 = arith.addf %131, %133 : vector<2x512xf32>
    %135 = vector.extract_strided_slice %134 {offsets = [0, 0], sizes = [2, 128], strides = [1, 1]} : vector<2x512xf32> to vector<2x128xf32>
    %136 = arith.negf %135 : vector<2x128xf32>
    %137 = math.exp %136 : vector<2x128xf32>
    %cst_54 = arith.constant 1.000000e+00 : f32
    %138 = vector.broadcast %cst_54 : f32 to vector<2x128xf32>
    %139 = arith.addf %138, %137 : vector<2x128xf32>
    %140 = arith.divf %138, %139 : vector<2x128xf32>
    %141 = vector.extract_strided_slice %134 {offsets = [0, 128], sizes = [2, 128], strides = [1, 1]} : vector<2x512xf32> to vector<2x128xf32>
    %142 = arith.negf %141 : vector<2x128xf32>
    %143 = math.exp %142 : vector<2x128xf32>
    %cst_55 = arith.constant 1.000000e+00 : f32
    %144 = vector.broadcast %cst_55 : f32 to vector<2x128xf32>
    %145 = arith.addf %144, %143 : vector<2x128xf32>
    %146 = arith.divf %144, %145 : vector<2x128xf32>
    %147 = vector.extract_strided_slice %134 {offsets = [0, 256], sizes = [2, 128], strides = [1, 1]} : vector<2x512xf32> to vector<2x128xf32>
    %148 = math.tanh %147 : vector<2x128xf32>
    %149 = vector.extract_strided_slice %134 {offsets = [0, 384], sizes = [2, 128], strides = [1, 1]} : vector<2x512xf32> to vector<2x128xf32>
    %150 = arith.negf %149 : vector<2x128xf32>
    %151 = math.exp %150 : vector<2x128xf32>
    %cst_56 = arith.constant 1.000000e+00 : f32
    %152 = vector.broadcast %cst_56 : f32 to vector<2x128xf32>
    %153 = arith.addf %152, %151 : vector<2x128xf32>
    %154 = arith.divf %152, %153 : vector<2x128xf32>
    %155 = arith.mulf %146, %127 : vector<2x128xf32>
    %156 = arith.mulf %140, %148 : vector<2x128xf32>
    %157 = arith.addf %155, %156 : vector<2x128xf32>
    %158 = math.tanh %157 : vector<2x128xf32>
    %159 = arith.mulf %154, %158 : vector<2x128xf32>
    %c8_57 = arith.constant 8 : index
    %c0_58 = arith.constant 0 : index
    %160 = vector.load %arg15[%c8_57, %c0_58] : memref<16x128xf32, #tpu.memory_space<vmem>>, vector<2x128xf32>
    tpu.vector_store %arg15[%c8_57, %c0_58], %159 {strides = array<i32>} : memref<16x128xf32, #tpu.memory_space<vmem>>, vector<2x128xf32>,
    %c10 = arith.constant 10 : index
    %c0_59 = arith.constant 0 : index
    %161 = vector.load %arg14[%c10, %c0_59] : memref<16x512xf32, #tpu.memory_space<vmem>>, vector<2x512xf32>
    %c0_60 = arith.constant 0 : index
    %c0_61 = arith.constant 0 : index
    %162 = vector.load %arg4[%c0_60, %c0_61] : memref<128x512xf32, #tpu.memory_space<vmem>>, vector<128x512xf32>
    %cst_62 = arith.constant dense<0.000000e+00> : vector<2x512xf32>
    %163 = tpu.matmul %159, %162, %cst_62 {dimension_numbers = #tpu.dot_dimension_numbers<[1], [0], [0], [1], [0, 0, 1, 1], [], []>} : vector<2x128xf32>, vector<128x512xf32>, vector<2x512xf32> -> vector<2x512xf32>
    %164 = arith.addf %161, %163 : vector<2x512xf32>
    %165 = vector.extract_strided_slice %164 {offsets = [0, 0], sizes = [2, 128], strides = [1, 1]} : vector<2x512xf32> to vector<2x128xf32>
    %166 = arith.negf %165 : vector<2x128xf32>
    %167 = math.exp %166 : vector<2x128xf32>
    %cst_63 = arith.constant 1.000000e+00 : f32
    %168 = vector.broadcast %cst_63 : f32 to vector<2x128xf32>
    %169 = arith.addf %168, %167 : vector<2x128xf32>
    %170 = arith.divf %168, %169 : vector<2x128xf32>
    %171 = vector.extract_strided_slice %164 {offsets = [0, 128], sizes = [2, 128], strides = [1, 1]} : vector<2x512xf32> to vector<2x128xf32>
    %172 = arith.negf %171 : vector<2x128xf32>
    %173 = math.exp %172 : vector<2x128xf32>
    %cst_64 = arith.constant 1.000000e+00 : f32
    %174 = vector.broadcast %cst_64 : f32 to vector<2x128xf32>
    %175 = arith.addf %174, %173 : vector<2x128xf32>
    %176 = arith.divf %174, %175 : vector<2x128xf32>
    %177 = vector.extract_strided_slice %164 {offsets = [0, 256], sizes = [2, 128], strides = [1, 1]} : vector<2x512xf32> to vector<2x128xf32>
    %178 = math.tanh %177 : vector<2x128xf32>
    %179 = vector.extract_strided_slice %164 {offsets = [0, 384], sizes = [2, 128], strides = [1, 1]} : vector<2x512xf32> to vector<2x128xf32>
    %180 = arith.negf %179 : vector<2x128xf32>
    %181 = math.exp %180 : vector<2x128xf32>
    %cst_65 = arith.constant 1.000000e+00 : f32
    %182 = vector.broadcast %cst_65 : f32 to vector<2x128xf32>
    %183 = arith.addf %182, %181 : vector<2x128xf32>
    %184 = arith.divf %182, %183 : vector<2x128xf32>
    %185 = arith.mulf %176, %157 : vector<2x128xf32>
    %186 = arith.mulf %170, %178 : vector<2x128xf32>
    %187 = arith.addf %185, %186 : vector<2x128xf32>
    %188 = math.tanh %187 : vector<2x128xf32>
    %189 = arith.mulf %184, %188 : vector<2x128xf32>
    %c10_66 = arith.constant 10 : index
    %c0_67 = arith.constant 0 : index
    %190 = vector.load %arg15[%c10_66, %c0_67] : memref<16x128xf32, #tpu.memory_space<vmem>>, vector<2x128xf32>
    tpu.vector_store %arg15[%c10_66, %c0_67], %189 {strides = array<i32>} : memref<16x128xf32, #tpu.memory_space<vmem>>, vector<2x128xf32>,
    %c12 = arith.constant 12 : index
    %c0_68 = arith.constant 0 : index
    %191 = vector.load %arg14[%c12, %c0_68] : memref<16x512xf32, #tpu.memory_space<vmem>>, vector<2x512xf32>
    %c0_69 = arith.constant 0 : index
    %c0_70 = arith.constant 0 : index
    %192 = vector.load %arg4[%c0_69, %c0_70] : memref<128x512xf32, #tpu.memory_space<vmem>>, vector<128x512xf32>
    %cst_71 = arith.constant dense<0.000000e+00> : vector<2x512xf32>
    %193 = tpu.matmul %189, %192, %cst_71 {dimension_numbers = #tpu.dot_dimension_numbers<[1], [0], [0], [1], [0, 0, 1, 1], [], []>} : vector<2x128xf32>, vector<128x512xf32>, vector<2x512xf32> -> vector<2x512xf32>
    %194 = arith.addf %191, %193 : vector<2x512xf32>
    %195 = vector.extract_strided_slice %194 {offsets = [0, 0], sizes = [2, 128], strides = [1, 1]} : vector<2x512xf32> to vector<2x128xf32>
    %196 = arith.negf %195 : vector<2x128xf32>
    %197 = math.exp %196 : vector<2x128xf32>
    %cst_72 = arith.constant 1.000000e+00 : f32
    %198 = vector.broadcast %cst_72 : f32 to vector<2x128xf32>
    %199 = arith.addf %198, %197 : vector<2x128xf32>
    %200 = arith.divf %198, %199 : vector<2x128xf32>
    %201 = vector.extract_strided_slice %194 {offsets = [0, 128], sizes = [2, 128], strides = [1, 1]} : vector<2x512xf32> to vector<2x128xf32>
    %202 = arith.negf %201 : vector<2x128xf32>
    %203 = math.exp %202 : vector<2x128xf32>
    %cst_73 = arith.constant 1.000000e+00 : f32
    %204 = vector.broadcast %cst_73 : f32 to vector<2x128xf32>
    %205 = arith.addf %204, %203 : vector<2x128xf32>
    %206 = arith.divf %204, %205 : vector<2x128xf32>
    %207 = vector.extract_strided_slice %194 {offsets = [0, 256], sizes = [2, 128], strides = [1, 1]} : vector<2x512xf32> to vector<2x128xf32>
    %208 = math.tanh %207 : vector<2x128xf32>
    %209 = vector.extract_strided_slice %194 {offsets = [0, 384], sizes = [2, 128], strides = [1, 1]} : vector<2x512xf32> to vector<2x128xf32>
    %210 = arith.negf %209 : vector<2x128xf32>
    %211 = math.exp %210 : vector<2x128xf32>
    %cst_74 = arith.constant 1.000000e+00 : f32
    %212 = vector.broadcast %cst_74 : f32 to vector<2x128xf32>
    %213 = arith.addf %212, %211 : vector<2x128xf32>
    %214 = arith.divf %212, %213 : vector<2x128xf32>
    %215 = arith.mulf %206, %187 : vector<2x128xf32>
    %216 = arith.mulf %200, %208 : vector<2x128xf32>
    %217 = arith.addf %215, %216 : vector<2x128xf32>
    %218 = math.tanh %217 : vector<2x128xf32>
    %219 = arith.mulf %214, %218 : vector<2x128xf32>
    %c12_75 = arith.constant 12 : index
    %c0_76 = arith.constant 0 : index
    %220 = vector.load %arg15[%c12_75, %c0_76] : memref<16x128xf32, #tpu.memory_space<vmem>>, vector<2x128xf32>
    tpu.vector_store %arg15[%c12_75, %c0_76], %219 {strides = array<i32>} : memref<16x128xf32, #tpu.memory_space<vmem>>, vector<2x128xf32>,
    %c14 = arith.constant 14 : index
    %c0_77 = arith.constant 0 : index
    %221 = vector.load %arg14[%c14, %c0_77] : memref<16x512xf32, #tpu.memory_space<vmem>>, vector<2x512xf32>
    %c0_78 = arith.constant 0 : index
    %c0_79 = arith.constant 0 : index
    %222 = vector.load %arg4[%c0_78, %c0_79] : memref<128x512xf32, #tpu.memory_space<vmem>>, vector<128x512xf32>
    %cst_80 = arith.constant dense<0.000000e+00> : vector<2x512xf32>
    %223 = tpu.matmul %219, %222, %cst_80 {dimension_numbers = #tpu.dot_dimension_numbers<[1], [0], [0], [1], [0, 0, 1, 1], [], []>} : vector<2x128xf32>, vector<128x512xf32>, vector<2x512xf32> -> vector<2x512xf32>
    %224 = arith.addf %221, %223 : vector<2x512xf32>
    %225 = vector.extract_strided_slice %224 {offsets = [0, 0], sizes = [2, 128], strides = [1, 1]} : vector<2x512xf32> to vector<2x128xf32>
    %226 = arith.negf %225 : vector<2x128xf32>
    %227 = math.exp %226 : vector<2x128xf32>
    %cst_81 = arith.constant 1.000000e+00 : f32
    %228 = vector.broadcast %cst_81 : f32 to vector<2x128xf32>
    %229 = arith.addf %228, %227 : vector<2x128xf32>
    %230 = arith.divf %228, %229 : vector<2x128xf32>
    %231 = vector.extract_strided_slice %224 {offsets = [0, 128], sizes = [2, 128], strides = [1, 1]} : vector<2x512xf32> to vector<2x128xf32>
    %232 = arith.negf %231 : vector<2x128xf32>
    %233 = math.exp %232 : vector<2x128xf32>
    %cst_82 = arith.constant 1.000000e+00 : f32
    %234 = vector.broadcast %cst_82 : f32 to vector<2x128xf32>
    %235 = arith.addf %234, %233 : vector<2x128xf32>
    %236 = arith.divf %234, %235 : vector<2x128xf32>
    %237 = vector.extract_strided_slice %224 {offsets = [0, 256], sizes = [2, 128], strides = [1, 1]} : vector<2x512xf32> to vector<2x128xf32>
    %238 = math.tanh %237 : vector<2x128xf32>
    %239 = vector.extract_strided_slice %224 {offsets = [0, 384], sizes = [2, 128], strides = [1, 1]} : vector<2x512xf32> to vector<2x128xf32>
    %240 = arith.negf %239 : vector<2x128xf32>
    %241 = math.exp %240 : vector<2x128xf32>
    %cst_83 = arith.constant 1.000000e+00 : f32
    %242 = vector.broadcast %cst_83 : f32 to vector<2x128xf32>
    %243 = arith.addf %242, %241 : vector<2x128xf32>
    %244 = arith.divf %242, %243 : vector<2x128xf32>
    %245 = arith.mulf %236, %217 : vector<2x128xf32>
    %246 = arith.mulf %230, %238 : vector<2x128xf32>
    %247 = arith.addf %245, %246 : vector<2x128xf32>
    %248 = math.tanh %247 : vector<2x128xf32>
    %249 = arith.mulf %244, %248 : vector<2x128xf32>
    %c14_84 = arith.constant 14 : index
    %c0_85 = arith.constant 0 : index
    %250 = vector.load %arg15[%c14_84, %c0_85] : memref<16x128xf32, #tpu.memory_space<vmem>>, vector<2x128xf32>
    tpu.vector_store %arg15[%c14_84, %c0_85], %249 {strides = array<i32>} : memref<16x128xf32, #tpu.memory_space<vmem>>, vector<2x128xf32>,
    %c0_86 = arith.constant 0 : index
    %c0_87 = arith.constant 0 : index
    %c0_88 = arith.constant 0 : index
    %251 = vector.load %arg12[%c0_86, %c0_87, %c0_88] : memref<2x2x128xf32, #tpu.memory_space<vmem>>, vector<1x2x128xf32>
    %252 = vector.shape_cast %251 : vector<1x2x128xf32> to vector<2x128xf32>
    %253 = vector.shape_cast %249 : vector<2x128xf32> to vector<1x2x128xf32>
    tpu.vector_store %arg12[%c0_86, %c0_87, %c0_88], %253 {strides = array<i32>} : memref<2x2x128xf32, #tpu.memory_space<vmem>>, vector<1x2x128xf32>,
    %c0_89 = arith.constant 0 : index
    %c0_90 = arith.constant 0 : index
    %c0_91 = arith.constant 0 : index
    %254 = vector.load %arg13[%c0_89, %c0_90, %c0_91] : memref<2x2x128xf32, #tpu.memory_space<vmem>>, vector<1x2x128xf32>
    %255 = vector.shape_cast %254 : vector<1x2x128xf32> to vector<2x128xf32>
    %256 = vector.shape_cast %247 : vector<2x128xf32> to vector<1x2x128xf32>
    tpu.vector_store %arg13[%c0_89, %c0_90, %c0_91], %256 {strides = array<i32>} : memref<2x2x128xf32, #tpu.memory_space<vmem>>, vector<1x2x128xf32>,
    %c0_92 = arith.constant 0 : index
    %c0_93 = arith.constant 0 : index
    %257 = vector.load %arg15[%c0_92, %c0_93] : memref<16x128xf32, #tpu.memory_space<vmem>>, vector<16x128xf32>
    %c0_94 = arith.constant 0 : index
    %c0_95 = arith.constant 0 : index
    %258 = vector.load %arg6[%c0_94, %c0_95] : memref<128x512xf32, #tpu.memory_space<vmem>>, vector<128x512xf32>
    %cst_96 = arith.constant dense<0.000000e+00> : vector<16x512xf32>
    %259 = tpu.matmul %257, %258, %cst_96 {dimension_numbers = #tpu.dot_dimension_numbers<[1], [0], [0], [1], [0, 0, 1, 1], [], []>} : vector<16x128xf32>, vector<128x512xf32>, vector<16x512xf32> -> vector<16x512xf32>
    %c0_97 = arith.constant 0 : index
    %c0_98 = arith.constant 0 : index
    %260 = vector.load %arg8[%c0_97, %c0_98] : memref<1x512xf32, #tpu.memory_space<vmem>>, vector<1x512xf32>
    %261 = vector.broadcast %260 : vector<1x512xf32> to vector<16x512xf32>
    %262 = arith.addf %259, %261 : vector<16x512xf32>
    %c0_99 = arith.constant 0 : index
    %c0_100 = arith.constant 0 : index
    %263 = vector.load %arg14[%c0_99, %c0_100] : memref<16x512xf32, #tpu.memory_space<vmem>>, vector<16x512xf32>
    tpu.vector_store %arg14[%c0_99, %c0_100], %262 {strides = array<i32>} : memref<16x512xf32, #tpu.memory_space<vmem>>, vector<16x512xf32>,
    %c1 = arith.constant 1 : index
    %c0_101 = arith.constant 0 : index
    %c0_102 = arith.constant 0 : index
    %264 = vector.load %arg1[%c1, %c0_101, %c0_102] : memref<2x2x128xf32, #tpu.memory_space<vmem>>, vector<1x2x128xf32>
    %265 = vector.shape_cast %264 : vector<1x2x128xf32> to vector<2x128xf32>
    %c1_103 = arith.constant 1 : index
    %c0_104 = arith.constant 0 : index
    %c0_105 = arith.constant 0 : index
    %266 = vector.load %arg2[%c1_103, %c0_104, %c0_105] : memref<2x2x128xf32, #tpu.memory_space<vmem>>, vector<1x2x128xf32>
    %267 = vector.shape_cast %266 : vector<1x2x128xf32> to vector<2x128xf32>
    %c0_106 = arith.constant 0 : index
    %c0_107 = arith.constant 0 : index
    %268 = vector.load %arg14[%c0_106, %c0_107] : memref<16x512xf32, #tpu.memory_space<vmem>>, vector<2x512xf32>
    %c0_108 = arith.constant 0 : index
    %c0_109 = arith.constant 0 : index
    %269 = vector.load %arg7[%c0_108, %c0_109] : memref<128x512xf32, #tpu.memory_space<vmem>>, vector<128x512xf32>
    %cst_110 = arith.constant dense<0.000000e+00> : vector<2x512xf32>
    %270 = tpu.matmul %265, %269, %cst_110 {dimension_numbers = #tpu.dot_dimension_numbers<[1], [0], [0], [1], [0, 0, 1, 1], [], []>} : vector<2x128xf32>, vector<128x512xf32>, vector<2x512xf32> -> vector<2x512xf32>
    %271 = arith.addf %268, %270 : vector<2x512xf32>
    %272 = vector.extract_strided_slice %271 {offsets = [0, 0], sizes = [2, 128], strides = [1, 1]} : vector<2x512xf32> to vector<2x128xf32>
    %273 = arith.negf %272 : vector<2x128xf32>
    %274 = math.exp %273 : vector<2x128xf32>
    %cst_111 = arith.constant 1.000000e+00 : f32
    %275 = vector.broadcast %cst_111 : f32 to vector<2x128xf32>
    %276 = arith.addf %275, %274 : vector<2x128xf32>
    %277 = arith.divf %275, %276 : vector<2x128xf32>
    %278 = vector.extract_strided_slice %271 {offsets = [0, 128], sizes = [2, 128], strides = [1, 1]} : vector<2x512xf32> to vector<2x128xf32>
    %279 = arith.negf %278 : vector<2x128xf32>
    %280 = math.exp %279 : vector<2x128xf32>
    %cst_112 = arith.constant 1.000000e+00 : f32
    %281 = vector.broadcast %cst_112 : f32 to vector<2x128xf32>
    %282 = arith.addf %281, %280 : vector<2x128xf32>
    %283 = arith.divf %281, %282 : vector<2x128xf32>
    %284 = vector.extract_strided_slice %271 {offsets = [0, 256], sizes = [2, 128], strides = [1, 1]} : vector<2x512xf32> to vector<2x128xf32>
    %285 = math.tanh %284 : vector<2x128xf32>
    %286 = vector.extract_strided_slice %271 {offsets = [0, 384], sizes = [2, 128], strides = [1, 1]} : vector<2x512xf32> to vector<2x128xf32>
    %287 = arith.negf %286 : vector<2x128xf32>
    %288 = math.exp %287 : vector<2x128xf32>
    %cst_113 = arith.constant 1.000000e+00 : f32
    %289 = vector.broadcast %cst_113 : f32 to vector<2x128xf32>
    %290 = arith.addf %289, %288 : vector<2x128xf32>
    %291 = arith.divf %289, %290 : vector<2x128xf32>
    %292 = arith.mulf %283, %267 : vector<2x128xf32>
    %293 = arith.mulf %277, %285 : vector<2x128xf32>
    %294 = arith.addf %292, %293 : vector<2x128xf32>
    %295 = math.tanh %294 : vector<2x128xf32>
    %296 = arith.mulf %291, %295 : vector<2x128xf32>
    %c0_114 = arith.constant 0 : index
    %c0_115 = arith.constant 0 : index
    %297 = vector.load %arg15[%c0_114, %c0_115] : memref<16x128xf32, #tpu.memory_space<vmem>>, vector<2x128xf32>
    tpu.vector_store %arg15[%c0_114, %c0_115], %296 {strides = array<i32>} : memref<16x128xf32, #tpu.memory_space<vmem>>, vector<2x128xf32>,
    %c2_116 = arith.constant 2 : index
    %c0_117 = arith.constant 0 : index
    %298 = vector.load %arg14[%c2_116, %c0_117] : memref<16x512xf32, #tpu.memory_space<vmem>>, vector<2x512xf32>
    %c0_118 = arith.constant 0 : index
    %c0_119 = arith.constant 0 : index
    %299 = vector.load %arg7[%c0_118, %c0_119] : memref<128x512xf32, #tpu.memory_space<vmem>>, vector<128x512xf32>
    %cst_120 = arith.constant dense<0.000000e+00> : vector<2x512xf32>
    %300 = tpu.matmul %296, %299, %cst_120 {dimension_numbers = #tpu.dot_dimension_numbers<[1], [0], [0], [1], [0, 0, 1, 1], [], []>} : vector<2x128xf32>, vector<128x512xf32>, vector<2x512xf32> -> vector<2x512xf32>
    %301 = arith.addf %298, %300 : vector<2x512xf32>
    %302 = vector.extract_strided_slice %301 {offsets = [0, 0], sizes = [2, 128], strides = [1, 1]} : vector<2x512xf32> to vector<2x128xf32>
    %303 = arith.negf %302 : vector<2x128xf32>
    %304 = math.exp %303 : vector<2x128xf32>
    %cst_121 = arith.constant 1.000000e+00 : f32
    %305 = vector.broadcast %cst_121 : f32 to vector<2x128xf32>
    %306 = arith.addf %305, %304 : vector<2x128xf32>
    %307 = arith.divf %305, %306 : vector<2x128xf32>
    %308 = vector.extract_strided_slice %301 {offsets = [0, 128], sizes = [2, 128], strides = [1, 1]} : vector<2x512xf32> to vector<2x128xf32>
    %309 = arith.negf %308 : vector<2x128xf32>
    %310 = math.exp %309 : vector<2x128xf32>
    %cst_122 = arith.constant 1.000000e+00 : f32
    %311 = vector.broadcast %cst_122 : f32 to vector<2x128xf32>
    %312 = arith.addf %311, %310 : vector<2x128xf32>
    %313 = arith.divf %311, %312 : vector<2x128xf32>
    %314 = vector.extract_strided_slice %301 {offsets = [0, 256], sizes = [2, 128], strides = [1, 1]} : vector<2x512xf32> to vector<2x128xf32>
    %315 = math.tanh %314 : vector<2x128xf32>
    %316 = vector.extract_strided_slice %301 {offsets = [0, 384], sizes = [2, 128], strides = [1, 1]} : vector<2x512xf32> to vector<2x128xf32>
    %317 = arith.negf %316 : vector<2x128xf32>
    %318 = math.exp %317 : vector<2x128xf32>
    %cst_123 = arith.constant 1.000000e+00 : f32
    %319 = vector.broadcast %cst_123 : f32 to vector<2x128xf32>
    %320 = arith.addf %319, %318 : vector<2x128xf32>
    %321 = arith.divf %319, %320 : vector<2x128xf32>
    %322 = arith.mulf %313, %294 : vector<2x128xf32>
    %323 = arith.mulf %307, %315 : vector<2x128xf32>
    %324 = arith.addf %322, %323 : vector<2x128xf32>
    %325 = math.tanh %324 : vector<2x128xf32>
    %326 = arith.mulf %321, %325 : vector<2x128xf32>
    %c2_124 = arith.constant 2 : index
    %c0_125 = arith.constant 0 : index
    %327 = vector.load %arg15[%c2_124, %c0_125] : memref<16x128xf32, #tpu.memory_space<vmem>>, vector<2x128xf32>
    tpu.vector_store %arg15[%c2_124, %c0_125], %326 {strides = array<i32>} : memref<16x128xf32, #tpu.memory_space<vmem>>, vector<2x128xf32>,
    %c4_126 = arith.constant 4 : index
    %c0_127 = arith.constant 0 : index
    %328 = vector.load %arg14[%c4_126, %c0_127] : memref<16x512xf32, #tpu.memory_space<vmem>>, vector<2x512xf32>
    %c0_128 = arith.constant 0 : index
    %c0_129 = arith.constant 0 : index
    %329 = vector.load %arg7[%c0_128, %c0_129] : memref<128x512xf32, #tpu.memory_space<vmem>>, vector<128x512xf32>
    %cst_130 = arith.constant dense<0.000000e+00> : vector<2x512xf32>
    %330 = tpu.matmul %326, %329, %cst_130 {dimension_numbers = #tpu.dot_dimension_numbers<[1], [0], [0], [1], [0, 0, 1, 1], [], []>} : vector<2x128xf32>, vector<128x512xf32>, vector<2x512xf32> -> vector<2x512xf32>
    %331 = arith.addf %328, %330 : vector<2x512xf32>
    %332 = vector.extract_strided_slice %331 {offsets = [0, 0], sizes = [2, 128], strides = [1, 1]} : vector<2x512xf32> to vector<2x128xf32>
    %333 = arith.negf %332 : vector<2x128xf32>
    %334 = math.exp %333 : vector<2x128xf32>
    %cst_131 = arith.constant 1.000000e+00 : f32
    %335 = vector.broadcast %cst_131 : f32 to vector<2x128xf32>
    %336 = arith.addf %335, %334 : vector<2x128xf32>
    %337 = arith.divf %335, %336 : vector<2x128xf32>
    %338 = vector.extract_strided_slice %331 {offsets = [0, 128], sizes = [2, 128], strides = [1, 1]} : vector<2x512xf32> to vector<2x128xf32>
    %339 = arith.negf %338 : vector<2x128xf32>
    %340 = math.exp %339 : vector<2x128xf32>
    %cst_132 = arith.constant 1.000000e+00 : f32
    %341 = vector.broadcast %cst_132 : f32 to vector<2x128xf32>
    %342 = arith.addf %341, %340 : vector<2x128xf32>
    %343 = arith.divf %341, %342 : vector<2x128xf32>
    %344 = vector.extract_strided_slice %331 {offsets = [0, 256], sizes = [2, 128], strides = [1, 1]} : vector<2x512xf32> to vector<2x128xf32>
    %345 = math.tanh %344 : vector<2x128xf32>
    %346 = vector.extract_strided_slice %331 {offsets = [0, 384], sizes = [2, 128], strides = [1, 1]} : vector<2x512xf32> to vector<2x128xf32>
    %347 = arith.negf %346 : vector<2x128xf32>
    %348 = math.exp %347 : vector<2x128xf32>
    %cst_133 = arith.constant 1.000000e+00 : f32
    %349 = vector.broadcast %cst_133 : f32 to vector<2x128xf32>
    %350 = arith.addf %349, %348 : vector<2x128xf32>
    %351 = arith.divf %349, %350 : vector<2x128xf32>
    %352 = arith.mulf %343, %324 : vector<2x128xf32>
    %353 = arith.mulf %337, %345 : vector<2x128xf32>
    %354 = arith.addf %352, %353 : vector<2x128xf32>
    %355 = math.tanh %354 : vector<2x128xf32>
    %356 = arith.mulf %351, %355 : vector<2x128xf32>
    %c4_134 = arith.constant 4 : index
    %c0_135 = arith.constant 0 : index
    %357 = vector.load %arg15[%c4_134, %c0_135] : memref<16x128xf32, #tpu.memory_space<vmem>>, vector<2x128xf32>
    tpu.vector_store %arg15[%c4_134, %c0_135], %356 {strides = array<i32>} : memref<16x128xf32, #tpu.memory_space<vmem>>, vector<2x128xf32>,
    %c6_136 = arith.constant 6 : index
    %c0_137 = arith.constant 0 : index
    %358 = vector.load %arg14[%c6_136, %c0_137] : memref<16x512xf32, #tpu.memory_space<vmem>>, vector<2x512xf32>
    %c0_138 = arith.constant 0 : index
    %c0_139 = arith.constant 0 : index
    %359 = vector.load %arg7[%c0_138, %c0_139] : memref<128x512xf32, #tpu.memory_space<vmem>>, vector<128x512xf32>
    %cst_140 = arith.constant dense<0.000000e+00> : vector<2x512xf32>
    %360 = tpu.matmul %356, %359, %cst_140 {dimension_numbers = #tpu.dot_dimension_numbers<[1], [0], [0], [1], [0, 0, 1, 1], [], []>} : vector<2x128xf32>, vector<128x512xf32>, vector<2x512xf32> -> vector<2x512xf32>
    %361 = arith.addf %358, %360 : vector<2x512xf32>
    %362 = vector.extract_strided_slice %361 {offsets = [0, 0], sizes = [2, 128], strides = [1, 1]} : vector<2x512xf32> to vector<2x128xf32>
    %363 = arith.negf %362 : vector<2x128xf32>
    %364 = math.exp %363 : vector<2x128xf32>
    %cst_141 = arith.constant 1.000000e+00 : f32
    %365 = vector.broadcast %cst_141 : f32 to vector<2x128xf32>
    %366 = arith.addf %365, %364 : vector<2x128xf32>
    %367 = arith.divf %365, %366 : vector<2x128xf32>
    %368 = vector.extract_strided_slice %361 {offsets = [0, 128], sizes = [2, 128], strides = [1, 1]} : vector<2x512xf32> to vector<2x128xf32>
    %369 = arith.negf %368 : vector<2x128xf32>
    %370 = math.exp %369 : vector<2x128xf32>
    %cst_142 = arith.constant 1.000000e+00 : f32
    %371 = vector.broadcast %cst_142 : f32 to vector<2x128xf32>
    %372 = arith.addf %371, %370 : vector<2x128xf32>
    %373 = arith.divf %371, %372 : vector<2x128xf32>
    %374 = vector.extract_strided_slice %361 {offsets = [0, 256], sizes = [2, 128], strides = [1, 1]} : vector<2x512xf32> to vector<2x128xf32>
    %375 = math.tanh %374 : vector<2x128xf32>
    %376 = vector.extract_strided_slice %361 {offsets = [0, 384], sizes = [2, 128], strides = [1, 1]} : vector<2x512xf32> to vector<2x128xf32>
    %377 = arith.negf %376 : vector<2x128xf32>
    %378 = math.exp %377 : vector<2x128xf32>
    %cst_143 = arith.constant 1.000000e+00 : f32
    %379 = vector.broadcast %cst_143 : f32 to vector<2x128xf32>
    %380 = arith.addf %379, %378 : vector<2x128xf32>
    %381 = arith.divf %379, %380 : vector<2x128xf32>
    %382 = arith.mulf %373, %354 : vector<2x128xf32>
    %383 = arith.mulf %367, %375 : vector<2x128xf32>
    %384 = arith.addf %382, %383 : vector<2x128xf32>
    %385 = math.tanh %384 : vector<2x128xf32>
    %386 = arith.mulf %381, %385 : vector<2x128xf32>
    %c6_144 = arith.constant 6 : index
    %c0_145 = arith.constant 0 : index
    %387 = vector.load %arg15[%c6_144, %c0_145] : memref<16x128xf32, #tpu.memory_space<vmem>>, vector<2x128xf32>
    tpu.vector_store %arg15[%c6_144, %c0_145], %386 {strides = array<i32>} : memref<16x128xf32, #tpu.memory_space<vmem>>, vector<2x128xf32>,
    %c8_146 = arith.constant 8 : index
    %c0_147 = arith.constant 0 : index
    %388 = vector.load %arg14[%c8_146, %c0_147] : memref<16x512xf32, #tpu.memory_space<vmem>>, vector<2x512xf32>
    %c0_148 = arith.constant 0 : index
    %c0_149 = arith.constant 0 : index
    %389 = vector.load %arg7[%c0_148, %c0_149] : memref<128x512xf32, #tpu.memory_space<vmem>>, vector<128x512xf32>
    %cst_150 = arith.constant dense<0.000000e+00> : vector<2x512xf32>
    %390 = tpu.matmul %386, %389, %cst_150 {dimension_numbers = #tpu.dot_dimension_numbers<[1], [0], [0], [1], [0, 0, 1, 1], [], []>} : vector<2x128xf32>, vector<128x512xf32>, vector<2x512xf32> -> vector<2x512xf32>
    %391 = arith.addf %388, %390 : vector<2x512xf32>
    %392 = vector.extract_strided_slice %391 {offsets = [0, 0], sizes = [2, 128], strides = [1, 1]} : vector<2x512xf32> to vector<2x128xf32>
    %393 = arith.negf %392 : vector<2x128xf32>
    %394 = math.exp %393 : vector<2x128xf32>
    %cst_151 = arith.constant 1.000000e+00 : f32
    %395 = vector.broadcast %cst_151 : f32 to vector<2x128xf32>
    %396 = arith.addf %395, %394 : vector<2x128xf32>
    %397 = arith.divf %395, %396 : vector<2x128xf32>
    %398 = vector.extract_strided_slice %391 {offsets = [0, 128], sizes = [2, 128], strides = [1, 1]} : vector<2x512xf32> to vector<2x128xf32>
    %399 = arith.negf %398 : vector<2x128xf32>
    %400 = math.exp %399 : vector<2x128xf32>
    %cst_152 = arith.constant 1.000000e+00 : f32
    %401 = vector.broadcast %cst_152 : f32 to vector<2x128xf32>
    %402 = arith.addf %401, %400 : vector<2x128xf32>
    %403 = arith.divf %401, %402 : vector<2x128xf32>
    %404 = vector.extract_strided_slice %391 {offsets = [0, 256], sizes = [2, 128], strides = [1, 1]} : vector<2x512xf32> to vector<2x128xf32>
    %405 = math.tanh %404 : vector<2x128xf32>
    %406 = vector.extract_strided_slice %391 {offsets = [0, 384], sizes = [2, 128], strides = [1, 1]} : vector<2x512xf32> to vector<2x128xf32>
    %407 = arith.negf %406 : vector<2x128xf32>
    %408 = math.exp %407 : vector<2x128xf32>
    %cst_153 = arith.constant 1.000000e+00 : f32
    %409 = vector.broadcast %cst_153 : f32 to vector<2x128xf32>
    %410 = arith.addf %409, %408 : vector<2x128xf32>
    %411 = arith.divf %409, %410 : vector<2x128xf32>
    %412 = arith.mulf %403, %384 : vector<2x128xf32>
    %413 = arith.mulf %397, %405 : vector<2x128xf32>
    %414 = arith.addf %412, %413 : vector<2x128xf32>
    %415 = math.tanh %414 : vector<2x128xf32>
    %416 = arith.mulf %411, %415 : vector<2x128xf32>
    %c8_154 = arith.constant 8 : index
    %c0_155 = arith.constant 0 : index
    %417 = vector.load %arg15[%c8_154, %c0_155] : memref<16x128xf32, #tpu.memory_space<vmem>>, vector<2x128xf32>
    tpu.vector_store %arg15[%c8_154, %c0_155], %416 {strides = array<i32>} : memref<16x128xf32, #tpu.memory_space<vmem>>, vector<2x128xf32>,
    %c10_156 = arith.constant 10 : index
    %c0_157 = arith.constant 0 : index
    %418 = vector.load %arg14[%c10_156, %c0_157] : memref<16x512xf32, #tpu.memory_space<vmem>>, vector<2x512xf32>
    %c0_158 = arith.constant 0 : index
    %c0_159 = arith.constant 0 : index
    %419 = vector.load %arg7[%c0_158, %c0_159] : memref<128x512xf32, #tpu.memory_space<vmem>>, vector<128x512xf32>
    %cst_160 = arith.constant dense<0.000000e+00> : vector<2x512xf32>
    %420 = tpu.matmul %416, %419, %cst_160 {dimension_numbers = #tpu.dot_dimension_numbers<[1], [0], [0], [1], [0, 0, 1, 1], [], []>} : vector<2x128xf32>, vector<128x512xf32>, vector<2x512xf32> -> vector<2x512xf32>
    %421 = arith.addf %418, %420 : vector<2x512xf32>
    %422 = vector.extract_strided_slice %421 {offsets = [0, 0], sizes = [2, 128], strides = [1, 1]} : vector<2x512xf32> to vector<2x128xf32>
    %423 = arith.negf %422 : vector<2x128xf32>
    %424 = math.exp %423 : vector<2x128xf32>
    %cst_161 = arith.constant 1.000000e+00 : f32
    %425 = vector.broadcast %cst_161 : f32 to vector<2x128xf32>
    %426 = arith.addf %425, %424 : vector<2x128xf32>
    %427 = arith.divf %425, %426 : vector<2x128xf32>
    %428 = vector.extract_strided_slice %421 {offsets = [0, 128], sizes = [2, 128], strides = [1, 1]} : vector<2x512xf32> to vector<2x128xf32>
    %429 = arith.negf %428 : vector<2x128xf32>
    %430 = math.exp %429 : vector<2x128xf32>
    %cst_162 = arith.constant 1.000000e+00 : f32
    %431 = vector.broadcast %cst_162 : f32 to vector<2x128xf32>
    %432 = arith.addf %431, %430 : vector<2x128xf32>
    %433 = arith.divf %431, %432 : vector<2x128xf32>
    %434 = vector.extract_strided_slice %421 {offsets = [0, 256], sizes = [2, 128], strides = [1, 1]} : vector<2x512xf32> to vector<2x128xf32>
    %435 = math.tanh %434 : vector<2x128xf32>
    %436 = vector.extract_strided_slice %421 {offsets = [0, 384], sizes = [2, 128], strides = [1, 1]} : vector<2x512xf32> to vector<2x128xf32>
    %437 = arith.negf %436 : vector<2x128xf32>
    %438 = math.exp %437 : vector<2x128xf32>
    %cst_163 = arith.constant 1.000000e+00 : f32
    %439 = vector.broadcast %cst_163 : f32 to vector<2x128xf32>
    %440 = arith.addf %439, %438 : vector<2x128xf32>
    %441 = arith.divf %439, %440 : vector<2x128xf32>
    %442 = arith.mulf %433, %414 : vector<2x128xf32>
    %443 = arith.mulf %427, %435 : vector<2x128xf32>
    %444 = arith.addf %442, %443 : vector<2x128xf32>
    %445 = math.tanh %444 : vector<2x128xf32>
    %446 = arith.mulf %441, %445 : vector<2x128xf32>
    %c10_164 = arith.constant 10 : index
    %c0_165 = arith.constant 0 : index
    %447 = vector.load %arg15[%c10_164, %c0_165] : memref<16x128xf32, #tpu.memory_space<vmem>>, vector<2x128xf32>
    tpu.vector_store %arg15[%c10_164, %c0_165], %446 {strides = array<i32>} : memref<16x128xf32, #tpu.memory_space<vmem>>, vector<2x128xf32>,
    %c12_166 = arith.constant 12 : index
    %c0_167 = arith.constant 0 : index
    %448 = vector.load %arg14[%c12_166, %c0_167] : memref<16x512xf32, #tpu.memory_space<vmem>>, vector<2x512xf32>
    %c0_168 = arith.constant 0 : index
    %c0_169 = arith.constant 0 : index
    %449 = vector.load %arg7[%c0_168, %c0_169] : memref<128x512xf32, #tpu.memory_space<vmem>>, vector<128x512xf32>
    %cst_170 = arith.constant dense<0.000000e+00> : vector<2x512xf32>
    %450 = tpu.matmul %446, %449, %cst_170 {dimension_numbers = #tpu.dot_dimension_numbers<[1], [0], [0], [1], [0, 0, 1, 1], [], []>} : vector<2x128xf32>, vector<128x512xf32>, vector<2x512xf32> -> vector<2x512xf32>
    %451 = arith.addf %448, %450 : vector<2x512xf32>
    %452 = vector.extract_strided_slice %451 {offsets = [0, 0], sizes = [2, 128], strides = [1, 1]} : vector<2x512xf32> to vector<2x128xf32>
    %453 = arith.negf %452 : vector<2x128xf32>
    %454 = math.exp %453 : vector<2x128xf32>
    %cst_171 = arith.constant 1.000000e+00 : f32
    %455 = vector.broadcast %cst_171 : f32 to vector<2x128xf32>
    %456 = arith.addf %455, %454 : vector<2x128xf32>
    %457 = arith.divf %455, %456 : vector<2x128xf32>
    %458 = vector.extract_strided_slice %451 {offsets = [0, 128], sizes = [2, 128], strides = [1, 1]} : vector<2x512xf32> to vector<2x128xf32>
    %459 = arith.negf %458 : vector<2x128xf32>
    %460 = math.exp %459 : vector<2x128xf32>
    %cst_172 = arith.constant 1.000000e+00 : f32
    %461 = vector.broadcast %cst_172 : f32 to vector<2x128xf32>
    %462 = arith.addf %461, %460 : vector<2x128xf32>
    %463 = arith.divf %461, %462 : vector<2x128xf32>
    %464 = vector.extract_strided_slice %451 {offsets = [0, 256], sizes = [2, 128], strides = [1, 1]} : vector<2x512xf32> to vector<2x128xf32>
    %465 = math.tanh %464 : vector<2x128xf32>
    %466 = vector.extract_strided_slice %451 {offsets = [0, 384], sizes = [2, 128], strides = [1, 1]} : vector<2x512xf32> to vector<2x128xf32>
    %467 = arith.negf %466 : vector<2x128xf32>
    %468 = math.exp %467 : vector<2x128xf32>
    %cst_173 = arith.constant 1.000000e+00 : f32
    %469 = vector.broadcast %cst_173 : f32 to vector<2x128xf32>
    %470 = arith.addf %469, %468 : vector<2x128xf32>
    %471 = arith.divf %469, %470 : vector<2x128xf32>
    %472 = arith.mulf %463, %444 : vector<2x128xf32>
    %473 = arith.mulf %457, %465 : vector<2x128xf32>
    %474 = arith.addf %472, %473 : vector<2x128xf32>
    %475 = math.tanh %474 : vector<2x128xf32>
    %476 = arith.mulf %471, %475 : vector<2x128xf32>
    %c12_174 = arith.constant 12 : index
    %c0_175 = arith.constant 0 : index
    %477 = vector.load %arg15[%c12_174, %c0_175] : memref<16x128xf32, #tpu.memory_space<vmem>>, vector<2x128xf32>
    tpu.vector_store %arg15[%c12_174, %c0_175], %476 {strides = array<i32>} : memref<16x128xf32, #tpu.memory_space<vmem>>, vector<2x128xf32>,
    %c14_176 = arith.constant 14 : index
    %c0_177 = arith.constant 0 : index
    %478 = vector.load %arg14[%c14_176, %c0_177] : memref<16x512xf32, #tpu.memory_space<vmem>>, vector<2x512xf32>
    %c0_178 = arith.constant 0 : index
    %c0_179 = arith.constant 0 : index
    %479 = vector.load %arg7[%c0_178, %c0_179] : memref<128x512xf32, #tpu.memory_space<vmem>>, vector<128x512xf32>
    %cst_180 = arith.constant dense<0.000000e+00> : vector<2x512xf32>
    %480 = tpu.matmul %476, %479, %cst_180 {dimension_numbers = #tpu.dot_dimension_numbers<[1], [0], [0], [1], [0, 0, 1, 1], [], []>} : vector<2x128xf32>, vector<128x512xf32>, vector<2x512xf32> -> vector<2x512xf32>
    %481 = arith.addf %478, %480 : vector<2x512xf32>
    %482 = vector.extract_strided_slice %481 {offsets = [0, 0], sizes = [2, 128], strides = [1, 1]} : vector<2x512xf32> to vector<2x128xf32>
    %483 = arith.negf %482 : vector<2x128xf32>
    %484 = math.exp %483 : vector<2x128xf32>
    %cst_181 = arith.constant 1.000000e+00 : f32
    %485 = vector.broadcast %cst_181 : f32 to vector<2x128xf32>
    %486 = arith.addf %485, %484 : vector<2x128xf32>
    %487 = arith.divf %485, %486 : vector<2x128xf32>
    %488 = vector.extract_strided_slice %481 {offsets = [0, 128], sizes = [2, 128], strides = [1, 1]} : vector<2x512xf32> to vector<2x128xf32>
    %489 = arith.negf %488 : vector<2x128xf32>
    %490 = math.exp %489 : vector<2x128xf32>
    %cst_182 = arith.constant 1.000000e+00 : f32
    %491 = vector.broadcast %cst_182 : f32 to vector<2x128xf32>
    %492 = arith.addf %491, %490 : vector<2x128xf32>
    %493 = arith.divf %491, %492 : vector<2x128xf32>
    %494 = vector.extract_strided_slice %481 {offsets = [0, 256], sizes = [2, 128], strides = [1, 1]} : vector<2x512xf32> to vector<2x128xf32>
    %495 = math.tanh %494 : vector<2x128xf32>
    %496 = vector.extract_strided_slice %481 {offsets = [0, 384], sizes = [2, 128], strides = [1, 1]} : vector<2x512xf32> to vector<2x128xf32>
    %497 = arith.negf %496 : vector<2x128xf32>
    %498 = math.exp %497 : vector<2x128xf32>
    %cst_183 = arith.constant 1.000000e+00 : f32
    %499 = vector.broadcast %cst_183 : f32 to vector<2x128xf32>
    %500 = arith.addf %499, %498 : vector<2x128xf32>
    %501 = arith.divf %499, %500 : vector<2x128xf32>
    %502 = arith.mulf %493, %474 : vector<2x128xf32>
    %503 = arith.mulf %487, %495 : vector<2x128xf32>
    %504 = arith.addf %502, %503 : vector<2x128xf32>
    %505 = math.tanh %504 : vector<2x128xf32>
    %506 = arith.mulf %501, %505 : vector<2x128xf32>
    %c14_184 = arith.constant 14 : index
    %c0_185 = arith.constant 0 : index
    %507 = vector.load %arg15[%c14_184, %c0_185] : memref<16x128xf32, #tpu.memory_space<vmem>>, vector<2x128xf32>
    tpu.vector_store %arg15[%c14_184, %c0_185], %506 {strides = array<i32>} : memref<16x128xf32, #tpu.memory_space<vmem>>, vector<2x128xf32>,
    %c1_186 = arith.constant 1 : index
    %c0_187 = arith.constant 0 : index
    %c0_188 = arith.constant 0 : index
    %508 = vector.load %arg12[%c1_186, %c0_187, %c0_188] : memref<2x2x128xf32, #tpu.memory_space<vmem>>, vector<1x2x128xf32>
    %509 = vector.shape_cast %508 : vector<1x2x128xf32> to vector<2x128xf32>
    %510 = vector.shape_cast %506 : vector<2x128xf32> to vector<1x2x128xf32>
    tpu.vector_store %arg12[%c1_186, %c0_187, %c0_188], %510 {strides = array<i32>} : memref<2x2x128xf32, #tpu.memory_space<vmem>>, vector<1x2x128xf32>,
    %c1_189 = arith.constant 1 : index
    %c0_190 = arith.constant 0 : index
    %c0_191 = arith.constant 0 : index
    %511 = vector.load %arg13[%c1_189, %c0_190, %c0_191] : memref<2x2x128xf32, #tpu.memory_space<vmem>>, vector<1x2x128xf32>
    %512 = vector.shape_cast %511 : vector<1x2x128xf32> to vector<2x128xf32>
    %513 = vector.shape_cast %504 : vector<2x128xf32> to vector<1x2x128xf32>
    tpu.vector_store %arg13[%c1_189, %c0_190, %c0_191], %513 {strides = array<i32>} : memref<2x2x128xf32, #tpu.memory_space<vmem>>, vector<1x2x128xf32>,
    %c0_192 = arith.constant 0 : index
    %c0_193 = arith.constant 0 : index
    %514 = vector.load %arg15[%c0_192, %c0_193] : memref<16x128xf32, #tpu.memory_space<vmem>>, vector<16x128xf32>
    %c0_194 = arith.constant 0 : index
    %c0_195 = arith.constant 0 : index
    %515 = vector.load %arg9[%c0_194, %c0_195] : memref<128x128xf32, #tpu.memory_space<vmem>>, vector<128x128xf32>
    %cst_196 = arith.constant dense<0.000000e+00> : vector<16x128xf32>
    %516 = tpu.matmul %514, %515, %cst_196 {dimension_numbers = #tpu.dot_dimension_numbers<[1], [0], [0], [1], [0, 0, 1, 1], [], []>} : vector<16x128xf32>, vector<128x128xf32>, vector<16x128xf32> -> vector<16x128xf32>
    %c0_197 = arith.constant 0 : index
    %c0_198 = arith.constant 0 : index
    %517 = vector.load %arg10[%c0_197, %c0_198] : memref<1x128xf32, #tpu.memory_space<vmem>>, vector<1x128xf32>
    %518 = vector.broadcast %517 : vector<1x128xf32> to vector<16x128xf32>
    %519 = arith.addf %516, %518 : vector<16x128xf32>
    %c0_199 = arith.constant 0 : index
    %c0_200 = arith.constant 0 : index
    %520 = vector.load %arg11[%c0_199, %c0_200] : memref<16x128xf32, #tpu.memory_space<vmem>>, vector<16x128xf32>
    tpu.vector_store %arg11[%c0_199, %c0_200], %519 {strides = array<i32>} : memref<16x128xf32, #tpu.memory_space<vmem>>, vector<16x128xf32>,
    return
  }
}

</mosaic_0001>

<llo_original>
// kernel: tpu_custom_call.1
$region0: #{tpu_custom_call.1}
  #allocation0 [shape = 'u32[]', space=smem, size = 0x4, offset = 0x4, fixed_abs, tag = 'smem constant byte address 0x4 - core index']
  #allocation1 [shape = 'u32[72,128]{1,0:T(1,128)}', space=vmem, size = 0x9000, scoped, tag = 'internal scratch']
  #allocation2 [shape = 'f32[16,512]{1,0:T(8,128)}', space=vmem, size = 0x8000, scoped, tag = 'scratch operand']
  #allocation3 [shape = 'f32[16,128]{1,0:T(8,128)}', space=vmem, size = 0x2000, scoped, tag = 'scratch operand']
  %s0 = inlined_call_operand.hbm [shape: f32[16,16], index: 0, kind: input, shape index: {}]
  %s1 = inlined_call_operand.hbm [shape: f32[2,2,128], index: 1, kind: input, shape index: {}]
  %s2 = inlined_call_operand.hbm [shape: f32[2,2,128], index: 2, kind: input, shape index: {}]
  %s3 = inlined_call_operand.hbm [shape: f32[16,512], index: 3, kind: input, shape index: {}]
  %s4 = inlined_call_operand.hbm [shape: f32[128,512], index: 4, kind: input, shape index: {}]
  %s5 = inlined_call_operand.vmem [shape: f32[1,512], index: 5, kind: input, shape index: {}]
  %s6 = inlined_call_operand.hbm [shape: f32[128,512], index: 6, kind: input, shape index: {}]
  %s7 = inlined_call_operand.hbm [shape: f32[128,512], index: 7, kind: input, shape index: {}]
  %s8 = inlined_call_operand.hbm [shape: f32[1,512], index: 8, kind: input, shape index: {}]
  %s9 = inlined_call_operand.hbm [shape: f32[128,128], index: 9, kind: input, shape index: {}]
  %s10 = inlined_call_operand.vmem [shape: f32[1,128], index: 10, kind: input, shape index: {}]
  %s11 = inlined_call_operand.hbm [shape: f32[16,128], index: 11, kind: output, shape index: {0}]
  %s12 = inlined_call_operand.hbm [shape: f32[2,2,128], index: 12, kind: output, shape index: {1}]
  %s13 = inlined_call_operand.hbm [shape: f32[2,2,128], index: 13, kind: output, shape index: {2}]
  %14 = xla_tuple %s11, %s12, %s13
  %s15 = sld [smem:[#allocation0]]
  $region106: #{tpu_custom_call.1} parent=0
    _
  %s17 = ssub.s32 1, %s15
  %s18 = scalar_select 0, %s17, %s15
  $region1: #{tpu_custom_call.1} parent=0
    #allocation4 [shape = 'u8[8192]{0}', space=vmem, size = 0x2000, scoped, tag = 'input window, operand 0, single buffered']
    #allocation5 [shape = 's32[1]{0}', space=sflag, size = 0x4, scoped, tag = 'scoped memory for tpu_custom_call.1']
    #allocation6 [shape = 's32[1]{0}', space=sflag, size = 0x4, scoped, tag = 'scoped memory for tpu_custom_call.1']
    #allocation7 [shape = 'u8[2048]{0}', space=vmem, size = 0x800, scoped, tag = 'input window, operand 1, single buffered']
    #allocation8 [shape = 's32[1]{0}', space=sflag, size = 0x4, scoped, tag = 'scoped memory for tpu_custom_call.1']
    #allocation9 [shape = 'u8[2048]{0}', space=vmem, size = 0x800, scoped, tag = 'input window, operand 2, single buffered']
    #allocation10 [shape = 'u8[32768]{0}', space=vmem, size = 0x8000, scoped, tag = 'input window, operand 3, single buffered']
    #allocation11 [shape = 's32[1]{0}', space=sflag, size = 0x4, scoped, tag = 'scoped memory for tpu_custom_call.1']
    #allocation12 [shape = 'u8[262144]{0}', space=vmem, size = 0x40000, scoped, tag = 'input window, operand 4, single buffered']
    #allocation13 [shape = 'u8[262144]{0}', space=vmem, size = 0x40000, scoped, tag = 'input window, operand 6, single buffered']
    #allocation14 [shape = 's32[1]{0}', space=sflag, size = 0x4, scoped, tag = 'scoped memory for tpu_custom_call.1']
    #allocation15 [shape = 'u8[262144]{0}', space=vmem, size = 0x40000, scoped, tag = 'input window, operand 7, single buffered']
    #allocation16 [shape = 'u8[2048]{0}', space=vmem, size = 0x800, scoped, tag = 'input window, operand 8, single buffered']
    #allocation17 [shape = 's32[1]{0}', space=sflag, size = 0x4, scoped, tag = 'scoped memory for tpu_custom_call.1']
    #allocation18 [shape = 'u8[65536]{0}', space=vmem, size = 0x10000, scoped, tag = 'input window, operand 9, single buffered']
    #allocation19 [shape = 'u8[8192]{0}', space=vmem, size = 0x2000, scoped, tag = 'output window, operand 0, single buffered']
    #allocation20 [shape = 'u8[2048]{0}', space=vmem, size = 0x800, scoped, tag = 'output window, operand 1, single buffered']
    #allocation21 [shape = 's32[1]{0}', space=sflag, size = 0x4, scoped, tag = 'scoped memory for tpu_custom_call.1']
    #allocation22 [shape = 'u8[2048]{0}', space=vmem, size = 0x800, scoped, tag = 'output window, operand 2, single buffered']
    %19 = vsyncpa [#allocation5], 0
    %20 = vsyncpa [#allocation8], 0
    %21 = vsyncpa [#allocation11], 0
    %22 = vsyncpa [#allocation14], 0
    %23 = vsyncpa [#allocation17], 0
    %24 = vsyncpa [#allocation6], 0
    %25 = vsyncpa [#allocation21], 0
    // Predicated region
    $region2: #{tpu_custom_call.1} parent=1 // pred_check
      _
    $region3: #{tpu_custom_call.1} parent=1 // pred_check_branch
      %27 = sbr.rel (0) target = $region5
    $region4: #{tpu_custom_call.1} parent=1 // pred_region
      %29 = vsyncadd [#allocation5], 0
      %s30 = sshll.u32 %s0, 4
      %s31 = int_to_ptr.hbm [resolvable:$true] %s30
      %s32 = sshll.u32 [#allocation4], 4
      %s33 = int_to_ptr.vmem [resolvable:$true] %s32
      %38 = dma.hbm_to_vmem [thread:$0]  %s31, 256, %s33, [#allocation5], 128, 128, 8
    $region5: #{tpu_custom_call.1} parent=1 // pred_fallthru
      _
    // Predicated region
    $region6: #{tpu_custom_call.1} parent=1 // pred_check
      _
    $region7: #{tpu_custom_call.1} parent=1 // pred_check_branch
      %40 = sbr.rel (0) target = $region9
    $region8: #{tpu_custom_call.1} parent=1 // pred_region
      %42 = vsyncadd [#allocation8], 0
      %s43 = sshll.u32 %s1, 4
      %s44 = int_to_ptr.hbm [resolvable:$true] %s43
      %s45 = sshll.u32 [#allocation7], 4
      %s46 = int_to_ptr.vmem [resolvable:$true] %s45
      %51 = dma.hbm_to_vmem [thread:$0]  %s44, 64, %s46, [#allocation8], 32, 32, 2
    $region9: #{tpu_custom_call.1} parent=1 // pred_fallthru
      _
    // Predicated region
    $region10: #{tpu_custom_call.1} parent=1 // pred_check
      _
    $region11: #{tpu_custom_call.1} parent=1 // pred_check_branch
      %53 = sbr.rel (0) target = $region13
    $region12: #{tpu_custom_call.1} parent=1 // pred_region
      %55 = vsyncadd [#allocation8], 0
      %s56 = sshll.u32 %s2, 4
      %s57 = int_to_ptr.hbm [resolvable:$true] %s56
      %s58 = sshll.u32 [#allocation9], 4
      %s59 = int_to_ptr.vmem [resolvable:$true] %s58
      %64 = dma.hbm_to_vmem [thread:$0]  %s57, 64, %s59, [#allocation8], 32, 32, 2
    $region13: #{tpu_custom_call.1} parent=1 // pred_fallthru
      _
    // Predicated region
    $region14: #{tpu_custom_call.1} parent=1 // pred_check
      _
    $region15: #{tpu_custom_call.1} parent=1 // pred_check_branch
      %66 = sbr.rel (0) target = $region17
    $region16: #{tpu_custom_call.1} parent=1 // pred_region
      %68 = vsyncadd [#allocation11], 0
      %s69 = sshll.u32 %s3, 4
      %s70 = int_to_ptr.hbm [resolvable:$true] %s69
      %s71 = sshll.u32 [#allocation10], 4
      %s72 = int_to_ptr.vmem [resolvable:$true] %s71
      %77 = dma.hbm_to_vmem [thread:$0]  %s70, 1024, %s72, [#allocation11], 512, 512, 32
    $region17: #{tpu_custom_call.1} parent=1 // pred_fallthru
      _
    // Predicated region
    $region18: #{tpu_custom_call.1} parent=1 // pred_check
      _
    $region19: #{tpu_custom_call.1} parent=1 // pred_check_branch
      %79 = sbr.rel (0) target = $region21
    $region20: #{tpu_custom_call.1} parent=1 // pred_region
      %81 = vsyncadd [#allocation11], 0
      %s82 = sshll.u32 %s4, 4
      %s83 = int_to_ptr.hbm [resolvable:$true] %s82
      %s84 = sshll.u32 [#allocation12], 4
      %s85 = int_to_ptr.vmem [resolvable:$true] %s84
      %90 = dma.hbm_to_vmem [thread:$0]  %s83, 8192, %s85, [#allocation11], 512, 512, 32
    $region21: #{tpu_custom_call.1} parent=1 // pred_fallthru
      _
    // Predicated region
    $region22: #{tpu_custom_call.1} parent=1 // pred_check
      _
    $region23: #{tpu_custom_call.1} parent=1 // pred_check_branch
      %92 = sbr.rel (0) target = $region25
    $region24: #{tpu_custom_call.1} parent=1 // pred_region
      _
    $region25: #{tpu_custom_call.1} parent=1 // pred_fallthru
      _
    // Predicated region
    $region26: #{tpu_custom_call.1} parent=1 // pred_check
      _
    $region27: #{tpu_custom_call.1} parent=1 // pred_check_branch
      %94 = sbr.rel (0) target = $region29
    $region28: #{tpu_custom_call.1} parent=1 // pred_region
      %96 = vsyncadd [#allocation14], 0
      %s97 = sshll.u32 %s6, 4
      %s98 = int_to_ptr.hbm [resolvable:$true] %s97
      %s99 = sshll.u32 [#allocation13], 4
      %s100 = int_to_ptr.vmem [resolvable:$true] %s99
      %105 = dma.hbm_to_vmem [thread:$0]  %s98, 8192, %s100, [#allocation14], 512, 512, 32
    $region29: #{tpu_custom_call.1} parent=1 // pred_fallthru
      _
    // Predicated region
    $region30: #{tpu_custom_call.1} parent=1 // pred_check
      _
    $region31: #{tpu_custom_call.1} parent=1 // pred_check_branch
      %107 = sbr.rel (0) target = $region33
    $region32: #{tpu_custom_call.1} parent=1 // pred_region
      %109 = vsyncadd [#allocation14], 0
      %s110 = sshll.u32 %s7, 4
      %s111 = int_to_ptr.hbm [resolvable:$true] %s110
      %s112 = sshll.u32 [#allocation15], 4
      %s113 = int_to_ptr.vmem [resolvable:$true] %s112
      %118 = dma.hbm_to_vmem [thread:$0]  %s111, 8192, %s113, [#allocation14], 512, 512, 32
    $region33: #{tpu_custom_call.1} parent=1 // pred_fallthru
      _
    // Predicated region
    $region34: #{tpu_custom_call.1} parent=1 // pred_check
      _
    $region35: #{tpu_custom_call.1} parent=1 // pred_check_branch
      %120 = sbr.rel (0) target = $region37
    $region36: #{tpu_custom_call.1} parent=1 // pred_region
      %122 = vsyncadd [#allocation17], 0
      %s124 = sshll.u32 %s8, 4
      %s125 = int_to_ptr.hbm [resolvable:$true] %s124
      %s126 = sshll.u32 [#allocation16], 4
      %s127 = int_to_ptr.vmem [resolvable:$true] %s126
      %129 = dma.hbm_to_vmem [thread:$0]  %s125, 64, %s127, [#allocation17]
    $region37: #{tpu_custom_call.1} parent=1 // pred_fallthru
      _
    // Predicated region
    $region38: #{tpu_custom_call.1} parent=1 // pred_check
      _
    $region39: #{tpu_custom_call.1} parent=1 // pred_check_branch
      %131 = sbr.rel (0) target = $region41
    $region40: #{tpu_custom_call.1} parent=1 // pred_region
      %133 = vsyncadd [#allocation17], 0
      %s134 = sshll.u32 %s9, 4
      %s135 = int_to_ptr.hbm [resolvable:$true] %s134
      %s136 = sshll.u32 [#allocation18], 4
      %s137 = int_to_ptr.vmem [resolvable:$true] %s136
      %142 = dma.hbm_to_vmem [thread:$0]  %s135, 2048, %s137, [#allocation17], 128, 128, 8
    $region41: #{tpu_custom_call.1} parent=1 // pred_fallthru
      _
    // Predicated region
    $region42: #{tpu_custom_call.1} parent=1 // pred_check
      _
    $region43: #{tpu_custom_call.1} parent=1 // pred_check_branch
      %144 = sbr.rel (0) target = $region45
    $region44: #{tpu_custom_call.1} parent=1 // pred_region
      _
    $region45: #{tpu_custom_call.1} parent=1 // pred_fallthru
      _
    // Predicated region
    $region46: #{tpu_custom_call.1} parent=1 // pred_check
      _
    $region47: #{tpu_custom_call.1} parent=1 // pred_check_branch
      %146 = sbr.rel (0) target = $region49
    $region48: #{tpu_custom_call.1} parent=1 // pred_region
      %148 = dma.done [#allocation5], 256
    $region49: #{tpu_custom_call.1} parent=1 // pred_fallthru
      _
    // Predicated region
    $region50: #{tpu_custom_call.1} parent=1 // pred_check
      _
    $region51: #{tpu_custom_call.1} parent=1 // pred_check_branch
      %150 = sbr.rel (0) target = $region53
    $region52: #{tpu_custom_call.1} parent=1 // pred_region
      %152 = dma.done [#allocation8], 64
    $region53: #{tpu_custom_call.1} parent=1 // pred_fallthru
      _
    // Predicated region
    $region54: #{tpu_custom_call.1} parent=1 // pred_check
      _
    $region55: #{tpu_custom_call.1} parent=1 // pred_check_branch
      %154 = sbr.rel (0) target = $region57
    $region56: #{tpu_custom_call.1} parent=1 // pred_region
      %156 = dma.done [#allocation8], 64
    $region57: #{tpu_custom_call.1} parent=1 // pred_fallthru
      _
    // Predicated region
    $region58: #{tpu_custom_call.1} parent=1 // pred_check
      _
    $region59: #{tpu_custom_call.1} parent=1 // pred_check_branch
      %158 = sbr.rel (0) target = $region61
    $region60: #{tpu_custom_call.1} parent=1 // pred_region
      %160 = dma.done [#allocation11], 1024
    $region61: #{tpu_custom_call.1} parent=1 // pred_fallthru
      _
    // Predicated region
    $region62: #{tpu_custom_call.1} parent=1 // pred_check
      _
    $region63: #{tpu_custom_call.1} parent=1 // pred_check_branch
      %162 = sbr.rel (0) target = $region65
    $region64: #{tpu_custom_call.1} parent=1 // pred_region
      %164 = dma.done [#allocation11], 8192
    $region65: #{tpu_custom_call.1} parent=1 // pred_fallthru
      _
    // Predicated region
    $region66: #{tpu_custom_call.1} parent=1 // pred_check
      _
    $region67: #{tpu_custom_call.1} parent=1 // pred_check_branch
      %166 = sbr.rel (0) target = $region69
    $region68: #{tpu_custom_call.1} parent=1 // pred_region
      %168 = dma.done [#allocation14], 8192
    $region69: #{tpu_custom_call.1} parent=1 // pred_fallthru
      _
    // Predicated region
    $region70: #{tpu_custom_call.1} parent=1 // pred_check
      _
    $region71: #{tpu_custom_call.1} parent=1 // pred_check_branch
      %170 = sbr.rel (0) target = $region73
    $region72: #{tpu_custom_call.1} parent=1 // pred_region
      %172 = dma.done [#allocation14], 8192
    $region73: #{tpu_custom_call.1} parent=1 // pred_fallthru
      _
    // Predicated region
    $region74: #{tpu_custom_call.1} parent=1 // pred_check
      _
    $region75: #{tpu_custom_call.1} parent=1 // pred_check_branch
      %174 = sbr.rel (0) target = $region77
    $region76: #{tpu_custom_call.1} parent=1 // pred_region
      %176 = dma.done [#allocation17], 64
    $region77: #{tpu_custom_call.1} parent=1 // pred_fallthru
      _
    // Predicated region
    $region78: #{tpu_custom_call.1} parent=1 // pred_check
      _
    $region79: #{tpu_custom_call.1} parent=1 // pred_check_branch
      %178 = sbr.rel (0) target = $region81
    $region80: #{tpu_custom_call.1} parent=1 // pred_region
      %180 = dma.done [#allocation17], 2048
    $region81: #{tpu_custom_call.1} parent=1 // pred_fallthru
      _
    %v181 = vld [vmem:[#allocation4] sm:$0xff]
    %v182 = vld [vmem:[#allocation4 + $0x8] sm:$0xff]
    %v183 = vld [vmem:[#allocation10] sm:$0xff]
    %v184 = vld [vmem:[#allocation10 + $0x8] sm:$0xff]
    %v185 = vld [vmem:[#allocation10 + $0x10] sm:$0xff]
    %v186 = vld [vmem:[#allocation10 + $0x18] sm:$0xff]
    %v187 = vld [vmem:[#allocation10 + $0x20] sm:$0xff]
    %v188 = vld [vmem:[#allocation10 + $0x28] sm:$0xff]
    %v189 = vld [vmem:[#allocation10 + $0x30] sm:$0xff]
    %v190 = vld [vmem:[#allocation10 + $0x38] sm:$0xff]
    %v191 = vld [vmem:[%s5] sm:$0xf]
    %v193 = vperm.slane %v191, 0
    %v194 = vperm.slane %v191, 1
    %v195 = vperm.slane %v191, 2
    %v196 = vperm.slane %v191, 3
    %vm201 = vcmask 130048
    %v203 = vsel %vm201, %v181, 0
    %v206 = vsel %vm201, %v182, 0
    %208 = vmatpush.msra.mxu0 0.0
    %209 = vmatpush.msra.mxu0 0.0
    %210 = vmatpush.msra.mxu0 0.0
    %211 = vmatpush.msra.mxu0 0.0
    %212 = vmatpush.msra.mxu0 0.0
    %213 = vmatpush.msra.mxu0 0.0
    %214 = vmatpush.msra.mxu0 0.0
    %215 = vmatpush.msra.mxu0 0.0
    %216 = vmatpush.msra.mxu0 0.0
    %217 = vmatpush.msra.mxu0 0.0
    %218 = vmatpush.msra.mxu0 0.0
    %219 = vmatpush.msra.mxu0 0.0
    %220 = vmatpush.msra.mxu0 0.0
    %221 = vmatpush.msra.mxu0 0.0
    %222 = vmatpush.msra.mxu0 %v187
    %223 = vmatpush.msra.mxu0 %v183
    %224 = vmatmul.f32.gmra.mxu0 %v203
    %v225 = vpop.f32.mrf.mxu0
    %v226 = vadd.f32 %v193, %v225
    %227 = vmatmul.f32.gmra.mxu0 %v206
    %v228 = vpop.f32.mrf.mxu0
    %v229 = vadd.f32 %v193, %v228
    %230 = vdwg.mxu0
    %231 = vmatpush.msra.mxu0 0.0
    %232 = vmatpush.msra.mxu0 0.0
    %233 = vmatpush.msra.mxu0 0.0
    %234 = vmatpush.msra.mxu0 0.0
    %235 = vmatpush.msra.mxu0 0.0
    %236 = vmatpush.msra.mxu0 0.0
    %237 = vmatpush.msra.mxu0 0.0
    %238 = vmatpush.msra.mxu0 0.0
    %239 = vmatpush.msra.mxu0 0.0
    %240 = vmatpush.msra.mxu0 0.0
    %241 = vmatpush.msra.mxu0 0.0
    %242 = vmatpush.msra.mxu0 0.0
    %243 = vmatpush.msra.mxu0 0.0
    %244 = vmatpush.msra.mxu0 0.0
    %245 = vmatpush.msra.mxu0 %v188
    %246 = vmatpush.msra.mxu0 %v184
    %247 = vmatmul.f32.gmra.mxu0 %v203
    %v248 = vpop.f32.mrf.mxu0
    %v249 = vadd.f32 %v194, %v248
    %250 = vmatmul.f32.gmra.mxu0 %v206
    %v251 = vpop.f32.mrf.mxu0
    %v252 = vadd.f32 %v194, %v251
    %253 = vdwg.mxu0
    %254 = vmatpush.msra.mxu0 0.0
    %255 = vmatpush.msra.mxu0 0.0
    %256 = vmatpush.msra.mxu0 0.0
    %257 = vmatpush.msra.mxu0 0.0
    %258 = vmatpush.msra.mxu0 0.0
    %259 = vmatpush.msra.mxu0 0.0
    %260 = vmatpush.msra.mxu0 0.0
    %261 = vmatpush.msra.mxu0 0.0
    %262 = vmatpush.msra.mxu0 0.0
    %263 = vmatpush.msra.mxu0 0.0
    %264 = vmatpush.msra.mxu0 0.0
    %265 = vmatpush.msra.mxu0 0.0
    %266 = vmatpush.msra.mxu0 0.0
    %267 = vmatpush.msra.mxu0 0.0
    %268 = vmatpush.msra.mxu0 %v189
    %269 = vmatpush.msra.mxu0 %v185
    %270 = vmatmul.f32.gmra.mxu0 %v203
    %v271 = vpop.f32.mrf.mxu0
    %v272 = vadd.f32 %v195, %v271
    %273 = vmatmul.f32.gmra.mxu0 %v206
    %v274 = vpop.f32.mrf.mxu0
    %v275 = vadd.f32 %v195, %v274
    %276 = vdwg.mxu0
    %277 = vmatpush.msra.mxu0 0.0
    %278 = vmatpush.msra.mxu0 0.0
    %279 = vmatpush.msra.mxu0 0.0
    %280 = vmatpush.msra.mxu0 0.0
    %281 = vmatpush.msra.mxu0 0.0
    %282 = vmatpush.msra.mxu0 0.0
    %283 = vmatpush.msra.mxu0 0.0
    %284 = vmatpush.msra.mxu0 0.0
    %285 = vmatpush.msra.mxu0 0.0
    %286 = vmatpush.msra.mxu0 0.0
    %287 = vmatpush.msra.mxu0 0.0
    %288 = vmatpush.msra.mxu0 0.0
    %289 = vmatpush.msra.mxu0 0.0
    %290 = vmatpush.msra.mxu0 0.0
    %291 = vmatpush.msra.mxu0 %v190
    %292 = vmatpush.msra.mxu0 %v186
    %293 = vmatmul.f32.gmra.mxu0 %v203
    %v294 = vpop.f32.mrf.mxu0
    %v295 = vadd.f32 %v196, %v294
    %296 = vmatmul.f32.gmra.mxu0 %v206
    %v297 = vpop.f32.mrf.mxu0
    %v298 = vadd.f32 %v196, %v297
    %299 = vdwg.mxu0
    %300 = vst [vmem:[#allocation2] sm:$0xff] %v226
    %301 = vst [vmem:[#allocation2 + $0x8] sm:$0xff] %v249
    %302 = vst [vmem:[#allocation2 + $0x10] sm:$0xff] %v272
    %303 = vst [vmem:[#allocation2 + $0x18] sm:$0xff] %v295
    %304 = vst [vmem:[#allocation2 + $0x20] sm:$0xff] %v229
    %305 = vst [vmem:[#allocation2 + $0x28] sm:$0xff] %v252
    %306 = vst [vmem:[#allocation2 + $0x30] sm:$0xff] %v275
    %307 = vst [vmem:[#allocation2 + $0x38] sm:$0xff] %v298
    %v308 = vld [vmem:[#allocation7] sm:$0x3]
    %v309 = vld [vmem:[#allocation9] sm:$0x3]
    %v310 = vld [vmem:[#allocation2] sm:$0x3]
    %v311 = vld [vmem:[#allocation2 + $0x8] sm:$0x3]
    %v312 = vld [vmem:[#allocation2 + $0x10] sm:$0x3]
    %v313 = vld [vmem:[#allocation2 + $0x18] sm:$0x3]
    %v314 = vld [vmem:[#allocation12] sm:$0xff]
    %v315 = vld [vmem:[#allocation12 + $0x8] sm:$0xff]
    %v316 = vld [vmem:[#allocation12 + $0x10] sm:$0xff]
    %v317 = vld [vmem:[#allocation12 + $0x18] sm:$0xff]
    %v318 = vld [vmem:[#allocation12 + $0x20] sm:$0xff]
    %v319 = vld [vmem:[#allocation12 + $0x28] sm:$0xff]
    %v320 = vld [vmem:[#allocation12 + $0x30] sm:$0xff]
    %v321 = vld [vmem:[#allocation12 + $0x38] sm:$0xff]
    %v322 = vld [vmem:[#allocation12 + $0x40] sm:$0xff]
    %v323 = vld [vmem:[#allocation12 + $0x48] sm:$0xff]
    %v324 = vld [vmem:[#allocation12 + $0x50] sm:$0xff]
    %v325 = vld [vmem:[#allocation12 + $0x58] sm:$0xff]
    %v326 = vld [vmem:[#allocation12 + $0x60] sm:$0xff]
    %v327 = vld [vmem:[#allocation12 + $0x68] sm:$0xff]
    %v328 = vld [vmem:[#allocation12 + $0x70] sm:$0xff]
    %v329 = vld [vmem:[#allocation12 + $0x78] sm:$0xff]
    %v330 = vld [vmem:[#allocation12 + $0x80] sm:$0xff]
    %v331 = vld [vmem:[#allocation12 + $0x88] sm:$0xff]
    %v332 = vld [vmem:[#allocation12 + $0x90] sm:$0xff]
    %v333 = vld [vmem:[#allocation12 + $0x98] sm:$0xff]
    %v334 = vld [vmem:[#allocation12 + $0xa0] sm:$0xff]
    %v335 = vld [vmem:[#allocation12 + $0xa8] sm:$0xff]
    %v336 = vld [vmem:[#allocation12 + $0xb0] sm:$0xff]
    %v337 = vld [vmem:[#allocation12 + $0xb8] sm:$0xff]
    %v338 = vld [vmem:[#allocation12 + $0xc0] sm:$0xff]
    %v339 = vld [vmem:[#allocation12 + $0xc8] sm:$0xff]
    %v340 = vld [vmem:[#allocation12 + $0xd0] sm:$0xff]
    %v341 = vld [vmem:[#allocation12 + $0xd8] sm:$0xff]
    %v342 = vld [vmem:[#allocation12 + $0xe0] sm:$0xff]
    %v343 = vld [vmem:[#allocation12 + $0xe8] sm:$0xff]
    %v344 = vld [vmem:[#allocation12 + $0xf0] sm:$0xff]
    %v345 = vld [vmem:[#allocation12 + $0xf8] sm:$0xff]
    %v346 = vld [vmem:[#allocation12 + $0x100] sm:$0xff]
    %v347 = vld [vmem:[#allocation12 + $0x108] sm:$0xff]
    %v348 = vld [vmem:[#allocation12 + $0x110] sm:$0xff]
    %v349 = vld [vmem:[#allocation12 + $0x118] sm:$0xff]
    %v350 = vld [vmem:[#allocation12 + $0x120] sm:$0xff]
    %v351 = vld [vmem:[#allocation12 + $0x128] sm:$0xff]
    %v352 = vld [vmem:[#allocation12 + $0x130] sm:$0xff]
    %v353 = vld [vmem:[#allocation12 + $0x138] sm:$0xff]
    %v354 = vld [vmem:[#allocation12 + $0x140] sm:$0xff]
    %v355 = vld [vmem:[#allocation12 + $0x148] sm:$0xff]
    %v356 = vld [vmem:[#allocation12 + $0x150] sm:$0xff]
    %v357 = vld [vmem:[#allocation12 + $0x158] sm:$0xff]
    %v358 = vld [vmem:[#allocation12 + $0x160] sm:$0xff]
    %v359 = vld [vmem:[#allocation12 + $0x168] sm:$0xff]
    %v360 = vld [vmem:[#allocation12 + $0x170] sm:$0xff]
    %v361 = vld [vmem:[#allocation12 + $0x178] sm:$0xff]
    %v362 = vld [vmem:[#allocation12 + $0x180] sm:$0xff]
    %v363 = vld [vmem:[#allocation12 + $0x188] sm:$0xff]
    %v364 = vld [vmem:[#allocation12 + $0x190] sm:$0xff]
    %v365 = vld [vmem:[#allocation12 + $0x198] sm:$0xff]
    %v366 = vld [vmem:[#allocation12 + $0x1a0] sm:$0xff]
    %v367 = vld [vmem:[#allocation12 + $0x1a8] sm:$0xff]
    %v368 = vld [vmem:[#allocation12 + $0x1b0] sm:$0xff]
    %v369 = vld [vmem:[#allocation12 + $0x1b8] sm:$0xff]
    %v370 = vld [vmem:[#allocation12 + $0x1c0] sm:$0xff]
    %v371 = vld [vmem:[#allocation12 + $0x1c8] sm:$0xff]
    %v372 = vld [vmem:[#allocation12 + $0x1d0] sm:$0xff]
    %v373 = vld [vmem:[#allocation12 + $0x1d8] sm:$0xff]
    %v374 = vld [vmem:[#allocation12 + $0x1e0] sm:$0xff]
    %v375 = vld [vmem:[#allocation12 + $0x1e8] sm:$0xff]
    %v376 = vld [vmem:[#allocation12 + $0x1f0] sm:$0xff]
    %v377 = vld [vmem:[#allocation12 + $0x1f8] sm:$0xff]
    %378 = vmatpush.msra.mxu0 %v374
    %379 = vmatpush.msra.mxu0 %v370
    %380 = vmatpush.msra.mxu0 %v366
    %381 = vmatpush.msra.mxu0 %v362
    %382 = vmatpush.msra.mxu0 %v358
    %383 = vmatpush.msra.mxu0 %v354
    %384 = vmatpush.msra.mxu0 %v350
    %385 = vmatpush.msra.mxu0 %v346
    %386 = vmatpush.msra.mxu0 %v342
    %387 = vmatpush.msra.mxu0 %v338
    %388 = vmatpush.msra.mxu0 %v334
    %389 = vmatpush.msra.mxu0 %v330
    %390 = vmatpush.msra.mxu0 %v326
    %391 = vmatpush.msra.mxu0 %v322
    %392 = vmatpush.msra.mxu0 %v318
    %393 = vmatpush.msra.mxu0 %v314
    %394 = vmatmul.f32.gmra.mxu0 %v308
    %v395 = vpop.f32.mrf.mxu0
    %v396 = vadd.f32 0.0, %v395
    %397 = vdwg.mxu0
    %398 = vmatpush.msra.mxu0 %v375
    %399 = vmatpush.msra.mxu0 %v371
    %400 = vmatpush.msra.mxu0 %v367
    %401 = vmatpush.msra.mxu0 %v363
    %402 = vmatpush.msra.mxu0 %v359
    %403 = vmatpush.msra.mxu0 %v355
    %404 = vmatpush.msra.mxu0 %v351
    %405 = vmatpush.msra.mxu0 %v347
    %406 = vmatpush.msra.mxu0 %v343
    %407 = vmatpush.msra.mxu0 %v339
    %408 = vmatpush.msra.mxu0 %v335
    %409 = vmatpush.msra.mxu0 %v331
    %410 = vmatpush.msra.mxu0 %v327
    %411 = vmatpush.msra.mxu0 %v323
    %412 = vmatpush.msra.mxu0 %v319
    %413 = vmatpush.msra.mxu0 %v315
    %414 = vmatmul.f32.gmra.mxu0 %v308
    %v415 = vpop.f32.mrf.mxu0
    %v416 = vadd.f32 0.0, %v415
    %417 = vdwg.mxu0
    %418 = vmatpush.msra.mxu0 %v376
    %419 = vmatpush.msra.mxu0 %v372
    %420 = vmatpush.msra.mxu0 %v368
    %421 = vmatpush.msra.mxu0 %v364
    %422 = vmatpush.msra.mxu0 %v360
    %423 = vmatpush.msra.mxu0 %v356
    %424 = vmatpush.msra.mxu0 %v352
    %425 = vmatpush.msra.mxu0 %v348
    %426 = vmatpush.msra.mxu0 %v344
    %427 = vmatpush.msra.mxu0 %v340
    %428 = vmatpush.msra.mxu0 %v336
    %429 = vmatpush.msra.mxu0 %v332
    %430 = vmatpush.msra.mxu0 %v328
    %431 = vmatpush.msra.mxu0 %v324
    %432 = vmatpush.msra.mxu0 %v320
    %433 = vmatpush.msra.mxu0 %v316
    %434 = vmatmul.f32.gmra.mxu0 %v308
    %v435 = vpop.f32.mrf.mxu0
    %v436 = vadd.f32 0.0, %v435
    %437 = vdwg.mxu0
    %438 = vmatpush.msra.mxu0 %v377
    %439 = vmatpush.msra.mxu0 %v373
    %440 = vmatpush.msra.mxu0 %v369
    %441 = vmatpush.msra.mxu0 %v365
    %442 = vmatpush.msra.mxu0 %v361
    %443 = vmatpush.msra.mxu0 %v357
    %444 = vmatpush.msra.mxu0 %v353
    %445 = vmatpush.msra.mxu0 %v349
    %446 = vmatpush.msra.mxu0 %v345
    %447 = vmatpush.msra.mxu0 %v341
    %448 = vmatpush.msra.mxu0 %v337
    %449 = vmatpush.msra.mxu0 %v333
    %450 = vmatpush.msra.mxu0 %v329
    %451 = vmatpush.msra.mxu0 %v325
    %452 = vmatpush.msra.mxu0 %v321
    %453 = vmatpush.msra.mxu0 %v317
    %454 = vmatmul.f32.gmra.mxu0 %v308
    %v455 = vpop.f32.mrf.mxu0
    %v456 = vadd.f32 0.0, %v455
    %457 = vdwg.mxu0
    %v458 = vadd.f32 %v310, %v396
    %v459 = vadd.f32 %v311, %v416
    %v460 = vadd.f32 %v312, %v436
    %v461 = vadd.f32 %v313, %v456
    %v462 = vxor.u32 %v458, 2147483648
    %v463 = vmul.f32 %v462, 1.442695
    %v464 = vpow.pop %v463
    %v465 = vadd.f32 %v464, 1.0
    %v466 = vrcp.pop %v465
    %v467 = vmul.f32 %v465, %v466
    %v468 = vsub.f32 1.0, %v467
    %v469 = vmul.f32 %v466, %v468
    %v470 = vadd.f32 %v466, %v469
    %vm471 = vweird.f32 %v465
    %vm472 = vweird.f32 %v466
    %vm473 = vmor %vm471, %vm472
    %v474 = vsel %vm473, %v466, %v470
    %v475 = vand.u32 2147483647, %v465
    %vm476 = vcmp.eq.f32.partialorder %v475, 8.507059e+37
    %v477 = vand.u32 %v465, 2147483648
    %v478 = vor.u32 1.1754944e-38, %v477
    %v479 = vsel %vm476, %v478, %v474
    %v480 = vmul.f32 1.0, %v479
    %v481 = vxor.u32 %v459, 2147483648
    %v482 = vmul.f32 %v481, 1.442695
    %v483 = vpow.pop %v482
    %v484 = vadd.f32 %v483, 1.0
    %v485 = vrcp.pop %v484
    %v486 = vmul.f32 %v484, %v485
    %v487 = vsub.f32 1.0, %v486
    %v488 = vmul.f32 %v485, %v487
    %v489 = vadd.f32 %v485, %v488
    %vm490 = vweird.f32 %v484
    %vm491 = vweird.f32 %v485
    %vm492 = vmor %vm490, %vm491
    %v493 = vsel %vm492, %v485, %v489
    %v494 = vand.u32 2147483647, %v484
    %vm495 = vcmp.eq.f32.partialorder %v494, 8.507059e+37
    %v496 = vand.u32 %v484, 2147483648
    %v497 = vor.u32 1.1754944e-38, %v496
    %v498 = vsel %vm495, %v497, %v493
    %v499 = vmul.f32 1.0, %v498
    %v500 = vtanh.pop %v460
    %v501 = vxor.u32 %v461, 2147483648
    %v502 = vmul.f32 %v501, 1.442695
    %v503 = vpow.pop %v502
    %v504 = vadd.f32 %v503, 1.0
    %v505 = vrcp.pop %v504
    %v506 = vmul.f32 %v504, %v505
    %v507 = vsub.f32 1.0, %v506
    %v508 = vmul.f32 %v505, %v507
    %v509 = vadd.f32 %v505, %v508
    %vm510 = vweird.f32 %v504
    %vm511 = vweird.f32 %v505
    %vm512 = vmor %vm510, %vm511
    %v513 = vsel %vm512, %v505, %v509
    %v514 = vand.u32 2147483647, %v504
    %vm515 = vcmp.eq.f32.partialorder %v514, 8.507059e+37
    %v516 = vand.u32 %v504, 2147483648
    %v517 = vor.u32 1.1754944e-38, %v516
    %v518 = vsel %vm515, %v517, %v513
    %v519 = vmul.f32 1.0, %v518
    %v520 = vmul.f32 %v499, %v309
    %v521 = vmul.f32 %v480, %v500
    %v522 = vadd.f32 %v520, %v521
    %v523 = vtanh.pop %v522
    %v524 = vmul.f32 %v519, %v523
    %525 = vst [vmem:[#allocation3] sm:$0x3] %v524
    %v526 = vld [vmem:[#allocation2] sm:$0xc]
    %v527 = vld [vmem:[#allocation2 + $0x8] sm:$0xc]
    %v528 = vld [vmem:[#allocation2 + $0x10] sm:$0xc]
    %v529 = vld [vmem:[#allocation2 + $0x18] sm:$0xc]
    %v530 = vld [vmem:[#allocation12] sm:$0xff]
    %v531 = vld [vmem:[#allocation12 + $0x8] sm:$0xff]
    %v532 = vld [vmem:[#allocation12 + $0x10] sm:$0xff]
    %v533 = vld [vmem:[#allocation12 + $0x18] sm:$0xff]
    %v534 = vld [vmem:[#allocation12 + $0x20] sm:$0xff]
    %v535 = vld [vmem:[#allocation12 + $0x28] sm:$0xff]
    %v536 = vld [vmem:[#allocation12 + $0x30] sm:$0xff]
    %v537 = vld [vmem:[#allocation12 + $0x38] sm:$0xff]
    %v538 = vld [vmem:[#allocation12 + $0x40] sm:$0xff]
    %v539 = vld [vmem:[#allocation12 + $0x48] sm:$0xff]
    %v540 = vld [vmem:[#allocation12 + $0x50] sm:$0xff]
    %v541 = vld [vmem:[#allocation12 + $0x58] sm:$0xff]
    %v542 = vld [vmem:[#allocation12 + $0x60] sm:$0xff]
    %v543 = vld [vmem:[#allocation12 + $0x68] sm:$0xff]
    %v544 = vld [vmem:[#allocation12 + $0x70] sm:$0xff]
    %v545 = vld [vmem:[#allocation12 + $0x78] sm:$0xff]
    %v546 = vld [vmem:[#allocation12 + $0x80] sm:$0xff]
    %v547 = vld [vmem:[#allocation12 + $0x88] sm:$0xff]
    %v548 = vld [vmem:[#allocation12 + $0x90] sm:$0xff]
    %v549 = vld [vmem:[#allocation12 + $0x98] sm:$0xff]
    %v550 = vld [vmem:[#allocation12 + $0xa0] sm:$0xff]
    %v551 = vld [vmem:[#allocation12 + $0xa8] sm:$0xff]
    %v552 = vld [vmem:[#allocation12 + $0xb0] sm:$0xff]
    %v553 = vld [vmem:[#allocation12 + $0xb8] sm:$0xff]
    %v554 = vld [vmem:[#allocation12 + $0xc0] sm:$0xff]
    %v555 = vld [vmem:[#allocation12 + $0xc8] sm:$0xff]
    %v556 = vld [vmem:[#allocation12 + $0xd0] sm:$0xff]
    %v557 = vld [vmem:[#allocation12 + $0xd8] sm:$0xff]
    %v558 = vld [vmem:[#allocation12 + $0xe0] sm:$0xff]
    %v559 = vld [vmem:[#allocation12 + $0xe8] sm:$0xff]
    %v560 = vld [vmem:[#allocation12 + $0xf0] sm:$0xff]
    %v561 = vld [vmem:[#allocation12 + $0xf8] sm:$0xff]
    %v562 = vld [vmem:[#allocation12 + $0x100] sm:$0xff]
    %v563 = vld [vmem:[#allocation12 + $0x108] sm:$0xff]
    %v564 = vld [vmem:[#allocation12 + $0x110] sm:$0xff]
    %v565 = vld [vmem:[#allocation12 + $0x118] sm:$0xff]
    %v566 = vld [vmem:[#allocation12 + $0x120] sm:$0xff]
    %v567 = vld [vmem:[#allocation12 + $0x128] sm:$0xff]
    %v568 = vld [vmem:[#allocation12 + $0x130] sm:$0xff]
    %v569 = vld [vmem:[#allocation12 + $0x138] sm:$0xff]
    %v570 = vld [vmem:[#allocation12 + $0x140] sm:$0xff]
    %v571 = vld [vmem:[#allocation12 + $0x148] sm:$0xff]
    %v572 = vld [vmem:[#allocation12 + $0x150] sm:$0xff]
    %v573 = vld [vmem:[#allocation12 + $0x158] sm:$0xff]
    %v574 = vld [vmem:[#allocation12 + $0x160] sm:$0xff]
    %v575 = vld [vmem:[#allocation12 + $0x168] sm:$0xff]
    %v576 = vld [vmem:[#allocation12 + $0x170] sm:$0xff]
    %v577 = vld [vmem:[#allocation12 + $0x178] sm:$0xff]
    %v578 = vld [vmem:[#allocation12 + $0x180] sm:$0xff]
    %v579 = vld [vmem:[#allocation12 + $0x188] sm:$0xff]
    %v580 = vld [vmem:[#allocation12 + $0x190] sm:$0xff]
    %v581 = vld [vmem:[#allocation12 + $0x198] sm:$0xff]
    %v582 = vld [vmem:[#allocation12 + $0x1a0] sm:$0xff]
    %v583 = vld [vmem:[#allocation12 + $0x1a8] sm:$0xff]
    %v584 = vld [vmem:[#allocation12 + $0x1b0] sm:$0xff]
    %v585 = vld [vmem:[#allocation12 + $0x1b8] sm:$0xff]
    %v586 = vld [vmem:[#allocation12 + $0x1c0] sm:$0xff]
    %v587 = vld [vmem:[#allocation12 + $0x1c8] sm:$0xff]
    %v588 = vld [vmem:[#allocation12 + $0x1d0] sm:$0xff]
    %v589 = vld [vmem:[#allocation12 + $0x1d8] sm:$0xff]
    %v590 = vld [vmem:[#allocation12 + $0x1e0] sm:$0xff]
    %v591 = vld [vmem:[#allocation12 + $0x1e8] sm:$0xff]
    %v592 = vld [vmem:[#allocation12 + $0x1f0] sm:$0xff]
    %v593 = vld [vmem:[#allocation12 + $0x1f8] sm:$0xff]
    %594 = vmatpush.msra.mxu0 %v590
    %595 = vmatpush.msra.mxu0 %v586
    %596 = vmatpush.msra.mxu0 %v582
    %597 = vmatpush.msra.mxu0 %v578
    %598 = vmatpush.msra.mxu0 %v574
    %599 = vmatpush.msra.mxu0 %v570
    %600 = vmatpush.msra.mxu0 %v566
    %601 = vmatpush.msra.mxu0 %v562
    %602 = vmatpush.msra.mxu0 %v558
    %603 = vmatpush.msra.mxu0 %v554
    %604 = vmatpush.msra.mxu0 %v550
    %605 = vmatpush.msra.mxu0 %v546
    %606 = vmatpush.msra.mxu0 %v542
    %607 = vmatpush.msra.mxu0 %v538
    %608 = vmatpush.msra.mxu0 %v534
    %609 = vmatpush.msra.mxu0 %v530
    %610 = vmatmul.f32.gmra.mxu0 %v524
    %v611 = vpop.f32.mrf.mxu0
    %v612 = vadd.f32 0.0, %v611
    %613 = vdwg.mxu0
    %614 = vmatpush.msra.mxu0 %v591
    %615 = vmatpush.msra.mxu0 %v587
    %616 = vmatpush.msra.mxu0 %v583
    %617 = vmatpush.msra.mxu0 %v579
    %618 = vmatpush.msra.mxu0 %v575
    %619 = vmatpush.msra.mxu0 %v571
    %620 = vmatpush.msra.mxu0 %v567
    %621 = vmatpush.msra.mxu0 %v563
    %622 = vmatpush.msra.mxu0 %v559
    %623 = vmatpush.msra.mxu0 %v555
    %624 = vmatpush.msra.mxu0 %v551
    %625 = vmatpush.msra.mxu0 %v547
    %626 = vmatpush.msra.mxu0 %v543
    %627 = vmatpush.msra.mxu0 %v539
    %628 = vmatpush.msra.mxu0 %v535
    %629 = vmatpush.msra.mxu0 %v531
    %630 = vmatmul.f32.gmra.mxu0 %v524
    %v631 = vpop.f32.mrf.mxu0
    %v632 = vadd.f32 0.0, %v631
    %633 = vdwg.mxu0
    %634 = vmatpush.msra.mxu0 %v592
    %635 = vmatpush.msra.mxu0 %v588
    %636 = vmatpush.msra.mxu0 %v584
    %637 = vmatpush.msra.mxu0 %v580
    %638 = vmatpush.msra.mxu0 %v576
    %639 = vmatpush.msra.mxu0 %v572
    %640 = vmatpush.msra.mxu0 %v568
    %641 = vmatpush.msra.mxu0 %v564
    %642 = vmatpush.msra.mxu0 %v560
    %643 = vmatpush.msra.mxu0 %v556
    %644 = vmatpush.msra.mxu0 %v552
    %645 = vmatpush.msra.mxu0 %v548
    %646 = vmatpush.msra.mxu0 %v544
    %647 = vmatpush.msra.mxu0 %v540
    %648 = vmatpush.msra.mxu0 %v536
    %649 = vmatpush.msra.mxu0 %v532
    %650 = vmatmul.f32.gmra.mxu0 %v524
    %v651 = vpop.f32.mrf.mxu0
    %v652 = vadd.f32 0.0, %v651
    %653 = vdwg.mxu0
    %654 = vmatpush.msra.mxu0 %v593
    %655 = vmatpush.msra.mxu0 %v589
    %656 = vmatpush.msra.mxu0 %v585
    %657 = vmatpush.msra.mxu0 %v581
    %658 = vmatpush.msra.mxu0 %v577
    %659 = vmatpush.msra.mxu0 %v573
    %660 = vmatpush.msra.mxu0 %v569
    %661 = vmatpush.msra.mxu0 %v565
    %662 = vmatpush.msra.mxu0 %v561
    %663 = vmatpush.msra.mxu0 %v557
    %664 = vmatpush.msra.mxu0 %v553
    %665 = vmatpush.msra.mxu0 %v549
    %666 = vmatpush.msra.mxu0 %v545
    %667 = vmatpush.msra.mxu0 %v541
    %668 = vmatpush.msra.mxu0 %v537
    %669 = vmatpush.msra.mxu0 %v533
    %670 = vmatmul.f32.gmra.mxu0 %v524
    %v671 = vpop.f32.mrf.mxu0
    %v672 = vadd.f32 0.0, %v671
    %673 = vdwg.mxu0
    %v678 = vrot.slane %v612, 6
    %v679 = vrot.slane %v632, 6
    %v680 = vrot.slane %v652, 6
    %v681 = vrot.slane %v672, 6
    %v686 = vadd.f32 %v526, %v678
    %v687 = vadd.f32 %v527, %v679
    %v688 = vadd.f32 %v528, %v680
    %v689 = vadd.f32 %v529, %v681
    %v690 = vxor.u32 %v686, 2147483648
    %v691 = vmul.f32 %v690, 1.442695
    %v692 = vpow.pop %v691
    %v693 = vadd.f32 %v692, 1.0
    %v694 = vrcp.pop %v693
    %v695 = vmul.f32 %v693, %v694
    %v696 = vsub.f32 1.0, %v695
    %v697 = vmul.f32 %v694, %v696
    %v698 = vadd.f32 %v694, %v697
    %vm699 = vweird.f32 %v693
    %vm700 = vweird.f32 %v694
    %vm701 = vmor %vm699, %vm700
    %v702 = vsel %vm701, %v694, %v698
    %v703 = vand.u32 2147483647, %v693
    %vm704 = vcmp.eq.f32.partialorder %v703, 8.507059e+37
    %v705 = vand.u32 %v693, 2147483648
    %v706 = vor.u32 1.1754944e-38, %v705
    %v707 = vsel %vm704, %v706, %v702
    %v708 = vmul.f32 1.0, %v707
    %v709 = vxor.u32 %v687, 2147483648
    %v710 = vmul.f32 %v709, 1.442695
    %v711 = vpow.pop %v710
    %v712 = vadd.f32 %v711, 1.0
    %v713 = vrcp.pop %v712
    %v714 = vmul.f32 %v712, %v713
    %v715 = vsub.f32 1.0, %v714
    %v716 = vmul.f32 %v713, %v715
    %v717 = vadd.f32 %v713, %v716
    %vm718 = vweird.f32 %v712
    %vm719 = vweird.f32 %v713
    %vm720 = vmor %vm718, %vm719
    %v721 = vsel %vm720, %v713, %v717
    %v722 = vand.u32 2147483647, %v712
    %vm723 = vcmp.eq.f32.partialorder %v722, 8.507059e+37
    %v724 = vand.u32 %v712, 2147483648
    %v725 = vor.u32 1.1754944e-38, %v724
    %v726 = vsel %vm723, %v725, %v721
    %v727 = vmul.f32 1.0, %v726
    %v728 = vtanh.pop %v688
    %v729 = vxor.u32 %v689, 2147483648
    %v730 = vmul.f32 %v729, 1.442695
    %v731 = vpow.pop %v730
    %v732 = vadd.f32 %v731, 1.0
    %v733 = vrcp.pop %v732
    %v734 = vmul.f32 %v732, %v733
    %v735 = vsub.f32 1.0, %v734
    %v736 = vmul.f32 %v733, %v735
    %v737 = vadd.f32 %v733, %v736
    %vm738 = vweird.f32 %v732
    %vm739 = vweird.f32 %v733
    %vm740 = vmor %vm738, %vm739
    %v741 = vsel %vm740, %v733, %v737
    %v742 = vand.u32 2147483647, %v732
    %vm743 = vcmp.eq.f32.partialorder %v742, 8.507059e+37
    %v744 = vand.u32 %v732, 2147483648
    %v745 = vor.u32 1.1754944e-38, %v744
    %v746 = vsel %vm743, %v745, %v741
    %v747 = vmul.f32 1.0, %v746
    %v749 = vrot.slane %v522, 6
    %v751 = vmul.f32 %v727, %v749
    %v752 = vmul.f32 %v708, %v728
    %v753 = vadd.f32 %v751, %v752
    %v754 = vtanh.pop %v753
    %v755 = vmul.f32 %v747, %v754
    %756 = vst [vmem:[#allocation3] sm:$0xc] %v755
    %v757 = vld [vmem:[#allocation2] sm:$0x30]
    %v758 = vld [vmem:[#allocation2 + $0x8] sm:$0x30]
    %v759 = vld [vmem:[#allocation2 + $0x10] sm:$0x30]
    %v760 = vld [vmem:[#allocation2 + $0x18] sm:$0x30]
    %v761 = vld [vmem:[#allocation12] sm:$0xff]
    %v762 = vld [vmem:[#allocation12 + $0x8] sm:$0xff]
    %v763 = vld [vmem:[#allocation12 + $0x10] sm:$0xff]
    %v764 = vld [vmem:[#allocation12 + $0x18] sm:$0xff]
    %v765 = vld [vmem:[#allocation12 + $0x20] sm:$0xff]
    %v766 = vld [vmem:[#allocation12 + $0x28] sm:$0xff]
    %v767 = vld [vmem:[#allocation12 + $0x30] sm:$0xff]
    %v768 = vld [vmem:[#allocation12 + $0x38] sm:$0xff]
    %v769 = vld [vmem:[#allocation12 + $0x40] sm:$0xff]
    %v770 = vld [vmem:[#allocation12 + $0x48] sm:$0xff]
    %v771 = vld [vmem:[#allocation12 + $0x50] sm:$0xff]
    %v772 = vld [vmem:[#allocation12 + $0x58] sm:$0xff]
    %v773 = vld [vmem:[#allocation12 + $0x60] sm:$0xff]
    %v774 = vld [vmem:[#allocation12 + $0x68] sm:$0xff]
    %v775 = vld [vmem:[#allocation12 + $0x70] sm:$0xff]
    %v776 = vld [vmem:[#allocation12 + $0x78] sm:$0xff]
    %v777 = vld [vmem:[#allocation12 + $0x80] sm:$0xff]
    %v778 = vld [vmem:[#allocation12 + $0x88] sm:$0xff]
    %v779 = vld [vmem:[#allocation12 + $0x90] sm:$0xff]
    %v780 = vld [vmem:[#allocation12 + $0x98] sm:$0xff]
    %v781 = vld [vmem:[#allocation12 + $0xa0] sm:$0xff]
    %v782 = vld [vmem:[#allocation12 + $0xa8] sm:$0xff]
    %v783 = vld [vmem:[#allocation12 + $0xb0] sm:$0xff]
    %v784 = vld [vmem:[#allocation12 + $0xb8] sm:$0xff]
    %v785 = vld [vmem:[#allocation12 + $0xc0] sm:$0xff]
    %v786 = vld [vmem:[#allocation12 + $0xc8] sm:$0xff]
    %v787 = vld [vmem:[#allocation12 + $0xd0] sm:$0xff]
    %v788 = vld [vmem:[#allocation12 + $0xd8] sm:$0xff]
    %v789 = vld [vmem:[#allocation12 + $0xe0] sm:$0xff]
    %v790 = vld [vmem:[#allocation12 + $0xe8] sm:$0xff]
    %v791 = vld [vmem:[#allocation12 + $0xf0] sm:$0xff]
    %v792 = vld [vmem:[#allocation12 + $0xf8] sm:$0xff]
    %v793 = vld [vmem:[#allocation12 + $0x100] sm:$0xff]
    %v794 = vld [vmem:[#allocation12 + $0x108] sm:$0xff]
    %v795 = vld [vmem:[#allocation12 + $0x110] sm:$0xff]
    %v796 = vld [vmem:[#allocation12 + $0x118] sm:$0xff]
    %v797 = vld [vmem:[#allocation12 + $0x120] sm:$0xff]
    %v798 = vld [vmem:[#allocation12 + $0x128] sm:$0xff]
    %v799 = vld [vmem:[#allocation12 + $0x130] sm:$0xff]
    %v800 = vld [vmem:[#allocation12 + $0x138] sm:$0xff]
    %v801 = vld [vmem:[#allocation12 + $0x140] sm:$0xff]
    %v802 = vld [vmem:[#allocation12 + $0x148] sm:$0xff]
    %v803 = vld [vmem:[#allocation12 + $0x150] sm:$0xff]
    %v804 = vld [vmem:[#allocation12 + $0x158] sm:$0xff]
    %v805 = vld [vmem:[#allocation12 + $0x160] sm:$0xff]
    %v806 = vld [vmem:[#allocation12 + $0x168] sm:$0xff]
    %v807 = vld [vmem:[#allocation12 + $0x170] sm:$0xff]
    %v808 = vld [vmem:[#allocation12 + $0x178] sm:$0xff]
    %v809 = vld [vmem:[#allocation12 + $0x180] sm:$0xff]
    %v810 = vld [vmem:[#allocation12 + $0x188] sm:$0xff]
    %v811 = vld [vmem:[#allocation12 + $0x190] sm:$0xff]
    %v812 = vld [vmem:[#allocation12 + $0x198] sm:$0xff]
    %v813 = vld [vmem:[#allocation12 + $0x1a0] sm:$0xff]
    %v814 = vld [vmem:[#allocation12 + $0x1a8] sm:$0xff]
    %v815 = vld [vmem:[#allocation12 + $0x1b0] sm:$0xff]
    %v816 = vld [vmem:[#allocation12 + $0x1b8] sm:$0xff]
    %v817 = vld [vmem:[#allocation12 + $0x1c0] sm:$0xff]
    %v818 = vld [vmem:[#allocation12 + $0x1c8] sm:$0xff]
    %v819 = vld [vmem:[#allocation12 + $0x1d0] sm:$0xff]
    %v820 = vld [vmem:[#allocation12 + $0x1d8] sm:$0xff]
    %v821 = vld [vmem:[#allocation12 + $0x1e0] sm:$0xff]
    %v822 = vld [vmem:[#allocation12 + $0x1e8] sm:$0xff]
    %v823 = vld [vmem:[#allocation12 + $0x1f0] sm:$0xff]
    %v824 = vld [vmem:[#allocation12 + $0x1f8] sm:$0xff]
    %v826 = vrot.slane %v755, 2
    %828 = vmatpush.msra.mxu0 %v821
    %829 = vmatpush.msra.mxu0 %v817
    %830 = vmatpush.msra.mxu0 %v813
    %831 = vmatpush.msra.mxu0 %v809
    %832 = vmatpush.msra.mxu0 %v805
    %833 = vmatpush.msra.mxu0 %v801
    %834 = vmatpush.msra.mxu0 %v797
    %835 = vmatpush.msra.mxu0 %v793
    %836 = vmatpush.msra.mxu0 %v789
    %837 = vmatpush.msra.mxu0 %v785
    %838 = vmatpush.msra.mxu0 %v781
    %839 = vmatpush.msra.mxu0 %v777
    %840 = vmatpush.msra.mxu0 %v773
    %841 = vmatpush.msra.mxu0 %v769
    %842 = vmatpush.msra.mxu0 %v765
    %843 = vmatpush.msra.mxu0 %v761
    %844 = vmatmul.f32.gmra.mxu0 %v826
    %v845 = vpop.f32.mrf.mxu0
    %v846 = vadd.f32 0.0, %v845
    %847 = vdwg.mxu0
    %848 = vmatpush.msra.mxu0 %v822
    %849 = vmatpush.msra.mxu0 %v818
    %850 = vmatpush.msra.mxu0 %v814
    %851 = vmatpush.msra.mxu0 %v810
    %852 = vmatpush.msra.mxu0 %v806
    %853 = vmatpush.msra.mxu0 %v802
    %854 = vmatpush.msra.mxu0 %v798
    %855 = vmatpush.msra.mxu0 %v794
    %856 = vmatpush.msra.mxu0 %v790
    %857 = vmatpush.msra.mxu0 %v786
    %858 = vmatpush.msra.mxu0 %v782
    %859 = vmatpush.msra.mxu0 %v778
    %860 = vmatpush.msra.mxu0 %v774
    %861 = vmatpush.msra.mxu0 %v770
    %862 = vmatpush.msra.mxu0 %v766
    %863 = vmatpush.msra.mxu0 %v762
    %864 = vmatmul.f32.gmra.mxu0 %v826
    %v865 = vpop.f32.mrf.mxu0
    %v866 = vadd.f32 0.0, %v865
    %867 = vdwg.mxu0
    %868 = vmatpush.msra.mxu0 %v823
    %869 = vmatpush.msra.mxu0 %v819
    %870 = vmatpush.msra.mxu0 %v815
    %871 = vmatpush.msra.mxu0 %v811
    %872 = vmatpush.msra.mxu0 %v807
    %873 = vmatpush.msra.mxu0 %v803
    %874 = vmatpush.msra.mxu0 %v799
    %875 = vmatpush.msra.mxu0 %v795
    %876 = vmatpush.msra.mxu0 %v791
    %877 = vmatpush.msra.mxu0 %v787
    %878 = vmatpush.msra.mxu0 %v783
    %879 = vmatpush.msra.mxu0 %v779
    %880 = vmatpush.msra.mxu0 %v775
    %881 = vmatpush.msra.mxu0 %v771
    %882 = vmatpush.msra.mxu0 %v767
    %883 = vmatpush.msra.mxu0 %v763
    %884 = vmatmul.f32.gmra.mxu0 %v826
    %v885 = vpop.f32.mrf.mxu0
    %v886 = vadd.f32 0.0, %v885
    %887 = vdwg.mxu0
    %888 = vmatpush.msra.mxu0 %v824
    %889 = vmatpush.msra.mxu0 %v820
    %890 = vmatpush.msra.mxu0 %v816
    %891 = vmatpush.msra.mxu0 %v812
    %892 = vmatpush.msra.mxu0 %v808
    %893 = vmatpush.msra.mxu0 %v804
    %894 = vmatpush.msra.mxu0 %v800
    %895 = vmatpush.msra.mxu0 %v796
    %896 = vmatpush.msra.mxu0 %v792
    %897 = vmatpush.msra.mxu0 %v788
    %898 = vmatpush.msra.mxu0 %v784
    %899 = vmatpush.msra.mxu0 %v780
    %900 = vmatpush.msra.mxu0 %v776
    %901 = vmatpush.msra.mxu0 %v772
    %902 = vmatpush.msra.mxu0 %v768
    %903 = vmatpush.msra.mxu0 %v764
    %904 = vmatmul.f32.gmra.mxu0 %v826
    %v905 = vpop.f32.mrf.mxu0
    %v906 = vadd.f32 0.0, %v905
    %907 = vdwg.mxu0
    %v912 = vrot.slane %v846, 4
    %v913 = vrot.slane %v866, 4
    %v914 = vrot.slane %v886, 4
    %v915 = vrot.slane %v906, 4
    %v920 = vadd.f32 %v757, %v912
    %v921 = vadd.f32 %v758, %v913
    %v922 = vadd.f32 %v759, %v914
    %v923 = vadd.f32 %v760, %v915
    %v924 = vxor.u32 %v920, 2147483648
    %v925 = vmul.f32 %v924, 1.442695
    %v926 = vpow.pop %v925
    %v927 = vadd.f32 %v926, 1.0
    %v928 = vrcp.pop %v927
    %v929 = vmul.f32 %v927, %v928
    %v930 = vsub.f32 1.0, %v929
    %v931 = vmul.f32 %v928, %v930
    %v932 = vadd.f32 %v928, %v931
    %vm933 = vweird.f32 %v927
    %vm934 = vweird.f32 %v928
    %vm935 = vmor %vm933, %vm934
    %v936 = vsel %vm935, %v928, %v932
    %v937 = vand.u32 2147483647, %v927
    %vm938 = vcmp.eq.f32.partialorder %v937, 8.507059e+37
    %v939 = vand.u32 %v927, 2147483648
    %v940 = vor.u32 1.1754944e-38, %v939
    %v941 = vsel %vm938, %v940, %v936
    %v942 = vmul.f32 1.0, %v941
    %v943 = vxor.u32 %v921, 2147483648
    %v944 = vmul.f32 %v943, 1.442695
    %v945 = vpow.pop %v944
    %v946 = vadd.f32 %v945, 1.0
    %v947 = vrcp.pop %v946
    %v948 = vmul.f32 %v946, %v947
    %v949 = vsub.f32 1.0, %v948
    %v950 = vmul.f32 %v947, %v949
    %v951 = vadd.f32 %v947, %v950
    %vm952 = vweird.f32 %v946
    %vm953 = vweird.f32 %v947
    %vm954 = vmor %vm952, %vm953
    %v955 = vsel %vm954, %v947, %v951
    %v956 = vand.u32 2147483647, %v946
    %vm957 = vcmp.eq.f32.partialorder %v956, 8.507059e+37
    %v958 = vand.u32 %v946, 2147483648
    %v959 = vor.u32 1.1754944e-38, %v958
    %v960 = vsel %vm957, %v959, %v955
    %v961 = vmul.f32 1.0, %v960
    %v962 = vtanh.pop %v922
    %v963 = vxor.u32 %v923, 2147483648
    %v964 = vmul.f32 %v963, 1.442695
    %v965 = vpow.pop %v964
    %v966 = vadd.f32 %v965, 1.0
    %v967 = vrcp.pop %v966
    %v968 = vmul.f32 %v966, %v967
    %v969 = vsub.f32 1.0, %v968
    %v970 = vmul.f32 %v967, %v969
    %v971 = vadd.f32 %v967, %v970
    %vm972 = vweird.f32 %v966
    %vm973 = vweird.f32 %v967
    %vm974 = vmor %vm972, %vm973
    %v975 = vsel %vm974, %v967, %v971
    %v976 = vand.u32 2147483647, %v966
    %vm977 = vcmp.eq.f32.partialorder %v976, 8.507059e+37
    %v978 = vand.u32 %v966, 2147483648
    %v979 = vor.u32 1.1754944e-38, %v978
    %v980 = vsel %vm977, %v979, %v975
    %v981 = vmul.f32 1.0, %v980
    %v983 = vrot.slane %v753, 6
    %v985 = vmul.f32 %v961, %v983
    %v986 = vmul.f32 %v942, %v962
    %v987 = vadd.f32 %v985, %v986
    %v988 = vtanh.pop %v987
    %v989 = vmul.f32 %v981, %v988
    %990 = vst [vmem:[#allocation3] sm:$0x30] %v989
    %v991 = vld [vmem:[#allocation2] sm:$0xc0]
    %v992 = vld [vmem:[#allocation2 + $0x8] sm:$0xc0]
    %v993 = vld [vmem:[#allocation2 + $0x10] sm:$0xc0]
    %v994 = vld [vmem:[#allocation2 + $0x18] sm:$0xc0]
    %v995 = vld [vmem:[#allocation12] sm:$0xff]
    %v996 = vld [vmem:[#allocation12 + $0x8] sm:$0xff]
    %v997 = vld [vmem:[#allocation12 + $0x10] sm:$0xff]
    %v998 = vld [vmem:[#allocation12 + $0x18] sm:$0xff]
    %v999 = vld [vmem:[#allocation12 + $0x20] sm:$0xff]
    %v1000 = vld [vmem:[#allocation12 + $0x28] sm:$0xff]
    %v1001 = vld [vmem:[#allocation12 + $0x30] sm:$0xff]
    %v1002 = vld [vmem:[#allocation12 + $0x38] sm:$0xff]
    %v1003 = vld [vmem:[#allocation12 + $0x40] sm:$0xff]
    %v1004 = vld [vmem:[#allocation12 + $0x48] sm:$0xff]
    %v1005 = vld [vmem:[#allocation12 + $0x50] sm:$0xff]
    %v1006 = vld [vmem:[#allocation12 + $0x58] sm:$0xff]
    %v1007 = vld [vmem:[#allocation12 + $0x60] sm:$0xff]
    %v1008 = vld [vmem:[#allocation12 + $0x68] sm:$0xff]
    %v1009 = vld [vmem:[#allocation12 + $0x70] sm:$0xff]
    %v1010 = vld [vmem:[#allocation12 + $0x78] sm:$0xff]
    %v1011 = vld [vmem:[#allocation12 + $0x80] sm:$0xff]
    %v1012 = vld [vmem:[#allocation12 + $0x88] sm:$0xff]
    %v1013 = vld [vmem:[#allocation12 + $0x90] sm:$0xff]
    %v1014 = vld [vmem:[#allocation12 + $0x98] sm:$0xff]
    %v1015 = vld [vmem:[#allocation12 + $0xa0] sm:$0xff]
    %v1016 = vld [vmem:[#allocation12 + $0xa8] sm:$0xff]
    %v1017 = vld [vmem:[#allocation12 + $0xb0] sm:$0xff]
    %v1018 = vld [vmem:[#allocation12 + $0xb8] sm:$0xff]
    %v1019 = vld [vmem:[#allocation12 + $0xc0] sm:$0xff]
    %v1020 = vld [vmem:[#allocation12 + $0xc8] sm:$0xff]
    %v1021 = vld [vmem:[#allocation12 + $0xd0] sm:$0xff]
    %v1022 = vld [vmem:[#allocation12 + $0xd8] sm:$0xff]
    %v1023 = vld [vmem:[#allocation12 + $0xe0] sm:$0xff]
    %v1024 = vld [vmem:[#allocation12 + $0xe8] sm:$0xff]
    %v1025 = vld [vmem:[#allocation12 + $0xf0] sm:$0xff]
    %v1026 = vld [vmem:[#allocation12 + $0xf8] sm:$0xff]
    %v1027 = vld [vmem:[#allocation12 + $0x100] sm:$0xff]
    %v1028 = vld [vmem:[#allocation12 + $0x108] sm:$0xff]
    %v1029 = vld [vmem:[#allocation12 + $0x110] sm:$0xff]
    %v1030 = vld [vmem:[#allocation12 + $0x118] sm:$0xff]
    %v1031 = vld [vmem:[#allocation12 + $0x120] sm:$0xff]
    %v1032 = vld [vmem:[#allocation12 + $0x128] sm:$0xff]
    %v1033 = vld [vmem:[#allocation12 + $0x130] sm:$0xff]
    %v1034 = vld [vmem:[#allocation12 + $0x138] sm:$0xff]
    %v1035 = vld [vmem:[#allocation12 + $0x140] sm:$0xff]
    %v1036 = vld [vmem:[#allocation12 + $0x148] sm:$0xff]
    %v1037 = vld [vmem:[#allocation12 + $0x150] sm:$0xff]
    %v1038 = vld [vmem:[#allocation12 + $0x158] sm:$0xff]
    %v1039 = vld [vmem:[#allocation12 + $0x160] sm:$0xff]
    %v1040 = vld [vmem:[#allocation12 + $0x168] sm:$0xff]
    %v1041 = vld [vmem:[#allocation12 + $0x170] sm:$0xff]
    %v1042 = vld [vmem:[#allocation12 + $0x178] sm:$0xff]
    %v1043 = vld [vmem:[#allocation12 + $0x180] sm:$0xff]
    %v1044 = vld [vmem:[#allocation12 + $0x188] sm:$0xff]
    %v1045 = vld [vmem:[#allocation12 + $0x190] sm:$0xff]
    %v1046 = vld [vmem:[#allocation12 + $0x198] sm:$0xff]
    %v1047 = vld [vmem:[#allocation12 + $0x1a0] sm:$0xff]
    %v1048 = vld [vmem:[#allocation12 + $0x1a8] sm:$0xff]
    %v1049 = vld [vmem:[#allocation12 + $0x1b0] sm:$0xff]
    %v1050 = vld [vmem:[#allocation12 + $0x1b8] sm:$0xff]
    %v1051 = vld [vmem:[#allocation12 + $0x1c0] sm:$0xff]
    %v1052 = vld [vmem:[#allocation12 + $0x1c8] sm:$0xff]
    %v1053 = vld [vmem:[#allocation12 + $0x1d0] sm:$0xff]
    %v1054 = vld [vmem:[#allocation12 + $0x1d8] sm:$0xff]
    %v1055 = vld [vmem:[#allocation12 + $0x1e0] sm:$0xff]
    %v1056 = vld [vmem:[#allocation12 + $0x1e8] sm:$0xff]
    %v1057 = vld [vmem:[#allocation12 + $0x1f0] sm:$0xff]
    %v1058 = vld [vmem:[#allocation12 + $0x1f8] sm:$0xff]
    %v1060 = vrot.slane %v989, 4
    %1062 = vmatpush.msra.mxu0 %v1055
    %1063 = vmatpush.msra.mxu0 %v1051
    %1064 = vmatpush.msra.mxu0 %v1047
    %1065 = vmatpush.msra.mxu0 %v1043
    %1066 = vmatpush.msra.mxu0 %v1039
    %1067 = vmatpush.msra.mxu0 %v1035
    %1068 = vmatpush.msra.mxu0 %v1031
    %1069 = vmatpush.msra.mxu0 %v1027
    %1070 = vmatpush.msra.mxu0 %v1023
    %1071 = vmatpush.msra.mxu0 %v1019
    %1072 = vmatpush.msra.mxu0 %v1015
    %1073 = vmatpush.msra.mxu0 %v1011
    %1074 = vmatpush.msra.mxu0 %v1007
    %1075 = vmatpush.msra.mxu0 %v1003
    %1076 = vmatpush.msra.mxu0 %v999
    %1077 = vmatpush.msra.mxu0 %v995
    %1078 = vmatmul.f32.gmra.mxu0 %v1060
    %v1079 = vpop.f32.mrf.mxu0
    %v1080 = vadd.f32 0.0, %v1079
    %1081 = vdwg.mxu0
    %1082 = vmatpush.msra.mxu0 %v1056
    %1083 = vmatpush.msra.mxu0 %v1052
    %1084 = vmatpush.msra.mxu0 %v1048
    %1085 = vmatpush.msra.mxu0 %v1044
    %1086 = vmatpush.msra.mxu0 %v1040
    %1087 = vmatpush.msra.mxu0 %v1036
    %1088 = vmatpush.msra.mxu0 %v1032
    %1089 = vmatpush.msra.mxu0 %v1028
    %1090 = vmatpush.msra.mxu0 %v1024
    %1091 = vmatpush.msra.mxu0 %v1020
    %1092 = vmatpush.msra.mxu0 %v1016
    %1093 = vmatpush.msra.mxu0 %v1012
    %1094 = vmatpush.msra.mxu0 %v1008
    %1095 = vmatpush.msra.mxu0 %v1004
    %1096 = vmatpush.msra.mxu0 %v1000
    %1097 = vmatpush.msra.mxu0 %v996
    %1098 = vmatmul.f32.gmra.mxu0 %v1060
    %v1099 = vpop.f32.mrf.mxu0
    %v1100 = vadd.f32 0.0, %v1099
    %1101 = vdwg.mxu0
    %1102 = vmatpush.msra.mxu0 %v1057
    %1103 = vmatpush.msra.mxu0 %v1053
    %1104 = vmatpush.msra.mxu0 %v1049
    %1105 = vmatpush.msra.mxu0 %v1045
    %1106 = vmatpush.msra.mxu0 %v1041
    %1107 = vmatpush.msra.mxu0 %v1037
    %1108 = vmatpush.msra.mxu0 %v1033
    %1109 = vmatpush.msra.mxu0 %v1029
    %1110 = vmatpush.msra.mxu0 %v1025
    %1111 = vmatpush.msra.mxu0 %v1021
    %1112 = vmatpush.msra.mxu0 %v1017
    %1113 = vmatpush.msra.mxu0 %v1013
    %1114 = vmatpush.msra.mxu0 %v1009
    %1115 = vmatpush.msra.mxu0 %v1005
    %1116 = vmatpush.msra.mxu0 %v1001
    %1117 = vmatpush.msra.mxu0 %v997
    %1118 = vmatmul.f32.gmra.mxu0 %v1060
    %v1119 = vpop.f32.mrf.mxu0
    %v1120 = vadd.f32 0.0, %v1119
    %1121 = vdwg.mxu0
    %1122 = vmatpush.msra.mxu0 %v1058
    %1123 = vmatpush.msra.mxu0 %v1054
    %1124 = vmatpush.msra.mxu0 %v1050
    %1125 = vmatpush.msra.mxu0 %v1046
    %1126 = vmatpush.msra.mxu0 %v1042
    %1127 = vmatpush.msra.mxu0 %v1038
    %1128 = vmatpush.msra.mxu0 %v1034
    %1129 = vmatpush.msra.mxu0 %v1030
    %1130 = vmatpush.msra.mxu0 %v1026
    %1131 = vmatpush.msra.mxu0 %v1022
    %1132 = vmatpush.msra.mxu0 %v1018
    %1133 = vmatpush.msra.mxu0 %v1014
    %1134 = vmatpush.msra.mxu0 %v1010
    %1135 = vmatpush.msra.mxu0 %v1006
    %1136 = vmatpush.msra.mxu0 %v1002
    %1137 = vmatpush.msra.mxu0 %v998
    %1138 = vmatmul.f32.gmra.mxu0 %v1060
    %v1139 = vpop.f32.mrf.mxu0
    %v1140 = vadd.f32 0.0, %v1139
    %1141 = vdwg.mxu0
    %v1146 = vrot.slane %v1080, 2
    %v1147 = vrot.slane %v1100, 2
    %v1148 = vrot.slane %v1120, 2
    %v1149 = vrot.slane %v1140, 2
    %v1154 = vadd.f32 %v991, %v1146
    %v1155 = vadd.f32 %v992, %v1147
    %v1156 = vadd.f32 %v993, %v1148
    %v1157 = vadd.f32 %v994, %v1149
    %v1158 = vxor.u32 %v1154, 2147483648
    %v1159 = vmul.f32 %v1158, 1.442695
    %v1160 = vpow.pop %v1159
    %v1161 = vadd.f32 %v1160, 1.0
    %v1162 = vrcp.pop %v1161
    %v1163 = vmul.f32 %v1161, %v1162
    %v1164 = vsub.f32 1.0, %v1163
    %v1165 = vmul.f32 %v1162, %v1164
    %v1166 = vadd.f32 %v1162, %v1165
    %vm1167 = vweird.f32 %v1161
    %vm1168 = vweird.f32 %v1162
    %vm1169 = vmor %vm1167, %vm1168
    %v1170 = vsel %vm1169, %v1162, %v1166
    %v1171 = vand.u32 2147483647, %v1161
    %vm1172 = vcmp.eq.f32.partialorder %v1171, 8.507059e+37
    %v1173 = vand.u32 %v1161, 2147483648
    %v1174 = vor.u32 1.1754944e-38, %v1173
    %v1175 = vsel %vm1172, %v1174, %v1170
    %v1176 = vmul.f32 1.0, %v1175
    %v1177 = vxor.u32 %v1155, 2147483648
    %v1178 = vmul.f32 %v1177, 1.442695
    %v1179 = vpow.pop %v1178
    %v1180 = vadd.f32 %v1179, 1.0
    %v1181 = vrcp.pop %v1180
    %v1182 = vmul.f32 %v1180, %v1181
    %v1183 = vsub.f32 1.0, %v1182
    %v1184 = vmul.f32 %v1181, %v1183
    %v1185 = vadd.f32 %v1181, %v1184
    %vm1186 = vweird.f32 %v1180
    %vm1187 = vweird.f32 %v1181
    %vm1188 = vmor %vm1186, %vm1187
    %v1189 = vsel %vm1188, %v1181, %v1185
    %v1190 = vand.u32 2147483647, %v1180
    %vm1191 = vcmp.eq.f32.partialorder %v1190, 8.507059e+37
    %v1192 = vand.u32 %v1180, 2147483648
    %v1193 = vor.u32 1.1754944e-38, %v1192
    %v1194 = vsel %vm1191, %v1193, %v1189
    %v1195 = vmul.f32 1.0, %v1194
    %v1196 = vtanh.pop %v1156
    %v1197 = vxor.u32 %v1157, 2147483648
    %v1198 = vmul.f32 %v1197, 1.442695
    %v1199 = vpow.pop %v1198
    %v1200 = vadd.f32 %v1199, 1.0
    %v1201 = vrcp.pop %v1200
    %v1202 = vmul.f32 %v1200, %v1201
    %v1203 = vsub.f32 1.0, %v1202
    %v1204 = vmul.f32 %v1201, %v1203
    %v1205 = vadd.f32 %v1201, %v1204
    %vm1206 = vweird.f32 %v1200
    %vm1207 = vweird.f32 %v1201
    %vm1208 = vmor %vm1206, %vm1207
    %v1209 = vsel %vm1208, %v1201, %v1205
    %v1210 = vand.u32 2147483647, %v1200
    %vm1211 = vcmp.eq.f32.partialorder %v1210, 8.507059e+37
    %v1212 = vand.u32 %v1200, 2147483648
    %v1213 = vor.u32 1.1754944e-38, %v1212
    %v1214 = vsel %vm1211, %v1213, %v1209
    %v1215 = vmul.f32 1.0, %v1214
    %v1217 = vrot.slane %v987, 6
    %v1219 = vmul.f32 %v1195, %v1217
    %v1220 = vmul.f32 %v1176, %v1196
    %v1221 = vadd.f32 %v1219, %v1220
    %v1222 = vtanh.pop %v1221
    %v1223 = vmul.f32 %v1215, %v1222
    %1224 = vst [vmem:[#allocation3] sm:$0xc0] %v1223
    %v1225 = vld [vmem:[#allocation2 + $0x20] sm:$0x3]
    %v1226 = vld [vmem:[#allocation2 + $0x28] sm:$0x3]
    %v1227 = vld [vmem:[#allocation2 + $0x30] sm:$0x3]
    %v1228 = vld [vmem:[#allocation2 + $0x38] sm:$0x3]
    %v1229 = vld [vmem:[#allocation12] sm:$0xff]
    %v1230 = vld [vmem:[#allocation12 + $0x8] sm:$0xff]
    %v1231 = vld [vmem:[#allocation12 + $0x10] sm:$0xff]
    %v1232 = vld [vmem:[#allocation12 + $0x18] sm:$0xff]
    %v1233 = vld [vmem:[#allocation12 + $0x20] sm:$0xff]
    %v1234 = vld [vmem:[#allocation12 + $0x28] sm:$0xff]
    %v1235 = vld [vmem:[#allocation12 + $0x30] sm:$0xff]
    %v1236 = vld [vmem:[#allocation12 + $0x38] sm:$0xff]
    %v1237 = vld [vmem:[#allocation12 + $0x40] sm:$0xff]
    %v1238 = vld [vmem:[#allocation12 + $0x48] sm:$0xff]
    %v1239 = vld [vmem:[#allocation12 + $0x50] sm:$0xff]
    %v1240 = vld [vmem:[#allocation12 + $0x58] sm:$0xff]
    %v1241 = vld [vmem:[#allocation12 + $0x60] sm:$0xff]
    %v1242 = vld [vmem:[#allocation12 + $0x68] sm:$0xff]
    %v1243 = vld [vmem:[#allocation12 + $0x70] sm:$0xff]
    %v1244 = vld [vmem:[#allocation12 + $0x78] sm:$0xff]
    %v1245 = vld [vmem:[#allocation12 + $0x80] sm:$0xff]
    %v1246 = vld [vmem:[#allocation12 + $0x88] sm:$0xff]
    %v1247 = vld [vmem:[#allocation12 + $0x90] sm:$0xff]
    %v1248 = vld [vmem:[#allocation12 + $0x98] sm:$0xff]
    %v1249 = vld [vmem:[#allocation12 + $0xa0] sm:$0xff]
    %v1250 = vld [vmem:[#allocation12 + $0xa8] sm:$0xff]
    %v1251 = vld [vmem:[#allocation12 + $0xb0] sm:$0xff]
    %v1252 = vld [vmem:[#allocation12 + $0xb8] sm:$0xff]
    %v1253 = vld [vmem:[#allocation12 + $0xc0] sm:$0xff]
    %v1254 = vld [vmem:[#allocation12 + $0xc8] sm:$0xff]
    %v1255 = vld [vmem:[#allocation12 + $0xd0] sm:$0xff]
    %v1256 = vld [vmem:[#allocation12 + $0xd8] sm:$0xff]
    %v1257 = vld [vmem:[#allocation12 + $0xe0] sm:$0xff]
    %v1258 = vld [vmem:[#allocation12 + $0xe8] sm:$0xff]
    %v1259 = vld [vmem:[#allocation12 + $0xf0] sm:$0xff]
    %v1260 = vld [vmem:[#allocation12 + $0xf8] sm:$0xff]
    %v1261 = vld [vmem:[#allocation12 + $0x100] sm:$0xff]
    %v1262 = vld [vmem:[#allocation12 + $0x108] sm:$0xff]
    %v1263 = vld [vmem:[#allocation12 + $0x110] sm:$0xff]
    %v1264 = vld [vmem:[#allocation12 + $0x118] sm:$0xff]
    %v1265 = vld [vmem:[#allocation12 + $0x120] sm:$0xff]
    %v1266 = vld [vmem:[#allocation12 + $0x128] sm:$0xff]
    %v1267 = vld [vmem:[#allocation12 + $0x130] sm:$0xff]
    %v1268 = vld [vmem:[#allocation12 + $0x138] sm:$0xff]
    %v1269 = vld [vmem:[#allocation12 + $0x140] sm:$0xff]
    %v1270 = vld [vmem:[#allocation12 + $0x148] sm:$0xff]
    %v1271 = vld [vmem:[#allocation12 + $0x150] sm:$0xff]
    %v1272 = vld [vmem:[#allocation12 + $0x158] sm:$0xff]
    %v1273 = vld [vmem:[#allocation12 + $0x160] sm:$0xff]
    %v1274 = vld [vmem:[#allocation12 + $0x168] sm:$0xff]
    %v1275 = vld [vmem:[#allocation12 + $0x170] sm:$0xff]
    %v1276 = vld [vmem:[#allocation12 + $0x178] sm:$0xff]
    %v1277 = vld [vmem:[#allocation12 + $0x180] sm:$0xff]
    %v1278 = vld [vmem:[#allocation12 + $0x188] sm:$0xff]
    %v1279 = vld [vmem:[#allocation12 + $0x190] sm:$0xff]
    %v1280 = vld [vmem:[#allocation12 + $0x198] sm:$0xff]
    %v1281 = vld [vmem:[#allocation12 + $0x1a0] sm:$0xff]
    %v1282 = vld [vmem:[#allocation12 + $0x1a8] sm:$0xff]
    %v1283 = vld [vmem:[#allocation12 + $0x1b0] sm:$0xff]
    %v1284 = vld [vmem:[#allocation12 + $0x1b8] sm:$0xff]
    %v1285 = vld [vmem:[#allocation12 + $0x1c0] sm:$0xff]
    %v1286 = vld [vmem:[#allocation12 + $0x1c8] sm:$0xff]
    %v1287 = vld [vmem:[#allocation12 + $0x1d0] sm:$0xff]
    %v1288 = vld [vmem:[#allocation12 + $0x1d8] sm:$0xff]
    %v1289 = vld [vmem:[#allocation12 + $0x1e0] sm:$0xff]
    %v1290 = vld [vmem:[#allocation12 + $0x1e8] sm:$0xff]
    %v1291 = vld [vmem:[#allocation12 + $0x1f0] sm:$0xff]
    %v1292 = vld [vmem:[#allocation12 + $0x1f8] sm:$0xff]
    %v1294 = vrot.slane %v1223, 6
    %1296 = vmatpush.msra.mxu0 %v1289
    %1297 = vmatpush.msra.mxu0 %v1285
    %1298 = vmatpush.msra.mxu0 %v1281
    %1299 = vmatpush.msra.mxu0 %v1277
    %1300 = vmatpush.msra.mxu0 %v1273
    %1301 = vmatpush.msra.mxu0 %v1269
    %1302 = vmatpush.msra.mxu0 %v1265
    %1303 = vmatpush.msra.mxu0 %v1261
    %1304 = vmatpush.msra.mxu0 %v1257
    %1305 = vmatpush.msra.mxu0 %v1253
    %1306 = vmatpush.msra.mxu0 %v1249
    %1307 = vmatpush.msra.mxu0 %v1245
    %1308 = vmatpush.msra.mxu0 %v1241
    %1309 = vmatpush.msra.mxu0 %v1237
    %1310 = vmatpush.msra.mxu0 %v1233
    %1311 = vmatpush.msra.mxu0 %v1229
    %1312 = vmatmul.f32.gmra.mxu0 %v1294
    %v1313 = vpop.f32.mrf.mxu0
    %v1314 = vadd.f32 0.0, %v1313
    %1315 = vdwg.mxu0
    %1316 = vmatpush.msra.mxu0 %v1290
    %1317 = vmatpush.msra.mxu0 %v1286
    %1318 = vmatpush.msra.mxu0 %v1282
    %1319 = vmatpush.msra.mxu0 %v1278
    %1320 = vmatpush.msra.mxu0 %v1274
    %1321 = vmatpush.msra.mxu0 %v1270
    %1322 = vmatpush.msra.mxu0 %v1266
    %1323 = vmatpush.msra.mxu0 %v1262
    %1324 = vmatpush.msra.mxu0 %v1258
    %1325 = vmatpush.msra.mxu0 %v1254
    %1326 = vmatpush.msra.mxu0 %v1250
    %1327 = vmatpush.msra.mxu0 %v1246
    %1328 = vmatpush.msra.mxu0 %v1242
    %1329 = vmatpush.msra.mxu0 %v1238
    %1330 = vmatpush.msra.mxu0 %v1234
    %1331 = vmatpush.msra.mxu0 %v1230
    %1332 = vmatmul.f32.gmra.mxu0 %v1294
    %v1333 = vpop.f32.mrf.mxu0
    %v1334 = vadd.f32 0.0, %v1333
    %1335 = vdwg.mxu0
    %1336 = vmatpush.msra.mxu0 %v1291
    %1337 = vmatpush.msra.mxu0 %v1287
    %1338 = vmatpush.msra.mxu0 %v1283
    %1339 = vmatpush.msra.mxu0 %v1279
    %1340 = vmatpush.msra.mxu0 %v1275
    %1341 = vmatpush.msra.mxu0 %v1271
    %1342 = vmatpush.msra.mxu0 %v1267
    %1343 = vmatpush.msra.mxu0 %v1263
    %1344 = vmatpush.msra.mxu0 %v1259
    %1345 = vmatpush.msra.mxu0 %v1255
    %1346 = vmatpush.msra.mxu0 %v1251
    %1347 = vmatpush.msra.mxu0 %v1247
    %1348 = vmatpush.msra.mxu0 %v1243
    %1349 = vmatpush.msra.mxu0 %v1239
    %1350 = vmatpush.msra.mxu0 %v1235
    %1351 = vmatpush.msra.mxu0 %v1231
    %1352 = vmatmul.f32.gmra.mxu0 %v1294
    %v1353 = vpop.f32.mrf.mxu0
    %v1354 = vadd.f32 0.0, %v1353
    %1355 = vdwg.mxu0
    %1356 = vmatpush.msra.mxu0 %v1292
    %1357 = vmatpush.msra.mxu0 %v1288
    %1358 = vmatpush.msra.mxu0 %v1284
    %1359 = vmatpush.msra.mxu0 %v1280
    %1360 = vmatpush.msra.mxu0 %v1276
    %1361 = vmatpush.msra.mxu0 %v1272
    %1362 = vmatpush.msra.mxu0 %v1268
    %1363 = vmatpush.msra.mxu0 %v1264
    %1364 = vmatpush.msra.mxu0 %v1260
    %1365 = vmatpush.msra.mxu0 %v1256
    %1366 = vmatpush.msra.mxu0 %v1252
    %1367 = vmatpush.msra.mxu0 %v1248
    %1368 = vmatpush.msra.mxu0 %v1244
    %1369 = vmatpush.msra.mxu0 %v1240
    %1370 = vmatpush.msra.mxu0 %v1236
    %1371 = vmatpush.msra.mxu0 %v1232
    %1372 = vmatmul.f32.gmra.mxu0 %v1294
    %v1373 = vpop.f32.mrf.mxu0
    %v1374 = vadd.f32 0.0, %v1373
    %1375 = vdwg.mxu0
    %v1376 = vadd.f32 %v1225, %v1314
    %v1377 = vadd.f32 %v1226, %v1334
    %v1378 = vadd.f32 %v1227, %v1354
    %v1379 = vadd.f32 %v1228, %v1374
    %v1380 = vxor.u32 %v1376, 2147483648
    %v1381 = vmul.f32 %v1380, 1.442695
    %v1382 = vpow.pop %v1381
    %v1383 = vadd.f32 %v1382, 1.0
    %v1384 = vrcp.pop %v1383
    %v1385 = vmul.f32 %v1383, %v1384
    %v1386 = vsub.f32 1.0, %v1385
    %v1387 = vmul.f32 %v1384, %v1386
    %v1388 = vadd.f32 %v1384, %v1387
    %vm1389 = vweird.f32 %v1383
    %vm1390 = vweird.f32 %v1384
    %vm1391 = vmor %vm1389, %vm1390
    %v1392 = vsel %vm1391, %v1384, %v1388
    %v1393 = vand.u32 2147483647, %v1383
    %vm1394 = vcmp.eq.f32.partialorder %v1393, 8.507059e+37
    %v1395 = vand.u32 %v1383, 2147483648
    %v1396 = vor.u32 1.1754944e-38, %v1395
    %v1397 = vsel %vm1394, %v1396, %v1392
    %v1398 = vmul.f32 1.0, %v1397
    %v1399 = vxor.u32 %v1377, 2147483648
    %v1400 = vmul.f32 %v1399, 1.442695
    %v1401 = vpow.pop %v1400
    %v1402 = vadd.f32 %v1401, 1.0
    %v1403 = vrcp.pop %v1402
    %v1404 = vmul.f32 %v1402, %v1403
    %v1405 = vsub.f32 1.0, %v1404
    %v1406 = vmul.f32 %v1403, %v1405
    %v1407 = vadd.f32 %v1403, %v1406
    %vm1408 = vweird.f32 %v1402
    %vm1409 = vweird.f32 %v1403
    %vm1410 = vmor %vm1408, %vm1409
    %v1411 = vsel %vm1410, %v1403, %v1407
    %v1412 = vand.u32 2147483647, %v1402
    %vm1413 = vcmp.eq.f32.partialorder %v1412, 8.507059e+37
    %v1414 = vand.u32 %v1402, 2147483648
    %v1415 = vor.u32 1.1754944e-38, %v1414
    %v1416 = vsel %vm1413, %v1415, %v1411
    %v1417 = vmul.f32 1.0, %v1416
    %v1418 = vtanh.pop %v1378
    %v1419 = vxor.u32 %v1379, 2147483648
    %v1420 = vmul.f32 %v1419, 1.442695
    %v1421 = vpow.pop %v1420
    %v1422 = vadd.f32 %v1421, 1.0
    %v1423 = vrcp.pop %v1422
    %v1424 = vmul.f32 %v1422, %v1423
    %v1425 = vsub.f32 1.0, %v1424
    %v1426 = vmul.f32 %v1423, %v1425
    %v1427 = vadd.f32 %v1423, %v1426
    %vm1428 = vweird.f32 %v1422
    %vm1429 = vweird.f32 %v1423
    %vm1430 = vmor %vm1428, %vm1429
    %v1431 = vsel %vm1430, %v1423, %v1427
    %v1432 = vand.u32 2147483647, %v1422
    %vm1433 = vcmp.eq.f32.partialorder %v1432, 8.507059e+37
    %v1434 = vand.u32 %v1422, 2147483648
    %v1435 = vor.u32 1.1754944e-38, %v1434
    %v1436 = vsel %vm1433, %v1435, %v1431
    %v1437 = vmul.f32 1.0, %v1436
    %v1439 = vrot.slane %v1221, 6
    %v1441 = vmul.f32 %v1417, %v1439
    %v1442 = vmul.f32 %v1398, %v1418
    %v1443 = vadd.f32 %v1441, %v1442
    %v1444 = vtanh.pop %v1443
    %v1445 = vmul.f32 %v1437, %v1444
    %1446 = vst [vmem:[#allocation3 + $0x8] sm:$0x3] %v1445
    %v1447 = vld [vmem:[#allocation2 + $0x20] sm:$0xc]
    %v1448 = vld [vmem:[#allocation2 + $0x28] sm:$0xc]
    %v1449 = vld [vmem:[#allocation2 + $0x30] sm:$0xc]
    %v1450 = vld [vmem:[#allocation2 + $0x38] sm:$0xc]
    %v1451 = vld [vmem:[#allocation12] sm:$0xff]
    %v1452 = vld [vmem:[#allocation12 + $0x8] sm:$0xff]
    %v1453 = vld [vmem:[#allocation12 + $0x10] sm:$0xff]
    %v1454 = vld [vmem:[#allocation12 + $0x18] sm:$0xff]
    %v1455 = vld [vmem:[#allocation12 + $0x20] sm:$0xff]
    %v1456 = vld [vmem:[#allocation12 + $0x28] sm:$0xff]
    %v1457 = vld [vmem:[#allocation12 + $0x30] sm:$0xff]
    %v1458 = vld [vmem:[#allocation12 + $0x38] sm:$0xff]
    %v1459 = vld [vmem:[#allocation12 + $0x40] sm:$0xff]
    %v1460 = vld [vmem:[#allocation12 + $0x48] sm:$0xff]
    %v1461 = vld [vmem:[#allocation12 + $0x50] sm:$0xff]
    %v1462 = vld [vmem:[#allocation12 + $0x58] sm:$0xff]
    %v1463 = vld [vmem:[#allocation12 + $0x60] sm:$0xff]
    %v1464 = vld [vmem:[#allocation12 + $0x68] sm:$0xff]
    %v1465 = vld [vmem:[#allocation12 + $0x70] sm:$0xff]
    %v1466 = vld [vmem:[#allocation12 + $0x78] sm:$0xff]
    %v1467 = vld [vmem:[#allocation12 + $0x80] sm:$0xff]
    %v1468 = vld [vmem:[#allocation12 + $0x88] sm:$0xff]
    %v1469 = vld [vmem:[#allocation12 + $0x90] sm:$0xff]
    %v1470 = vld [vmem:[#allocation12 + $0x98] sm:$0xff]
    %v1471 = vld [vmem:[#allocation12 + $0xa0] sm:$0xff]
    %v1472 = vld [vmem:[#allocation12 + $0xa8] sm:$0xff]
    %v1473 = vld [vmem:[#allocation12 + $0xb0] sm:$0xff]
    %v1474 = vld [vmem:[#allocation12 + $0xb8] sm:$0xff]
    %v1475 = vld [vmem:[#allocation12 + $0xc0] sm:$0xff]
    %v1476 = vld [vmem:[#allocation12 + $0xc8] sm:$0xff]
    %v1477 = vld [vmem:[#allocation12 + $0xd0] sm:$0xff]
    %v1478 = vld [vmem:[#allocation12 + $0xd8] sm:$0xff]
    %v1479 = vld [vmem:[#allocation12 + $0xe0] sm:$0xff]
    %v1480 = vld [vmem:[#allocation12 + $0xe8] sm:$0xff]
    %v1481 = vld [vmem:[#allocation12 + $0xf0] sm:$0xff]
    %v1482 = vld [vmem:[#allocation12 + $0xf8] sm:$0xff]
    %v1483 = vld [vmem:[#allocation12 + $0x100] sm:$0xff]
    %v1484 = vld [vmem:[#allocation12 + $0x108] sm:$0xff]
    %v1485 = vld [vmem:[#allocation12 + $0x110] sm:$0xff]
    %v1486 = vld [vmem:[#allocation12 + $0x118] sm:$0xff]
    %v1487 = vld [vmem:[#allocation12 + $0x120] sm:$0xff]
    %v1488 = vld [vmem:[#allocation12 + $0x128] sm:$0xff]
    %v1489 = vld [vmem:[#allocation12 + $0x130] sm:$0xff]
    %v1490 = vld [vmem:[#allocation12 + $0x138] sm:$0xff]
    %v1491 = vld [vmem:[#allocation12 + $0x140] sm:$0xff]
    %v1492 = vld [vmem:[#allocation12 + $0x148] sm:$0xff]
    %v1493 = vld [vmem:[#allocation12 + $0x150] sm:$0xff]
    %v1494 = vld [vmem:[#allocation12 + $0x158] sm:$0xff]
    %v1495 = vld [vmem:[#allocation12 + $0x160] sm:$0xff]
    %v1496 = vld [vmem:[#allocation12 + $0x168] sm:$0xff]
    %v1497 = vld [vmem:[#allocation12 + $0x170] sm:$0xff]
    %v1498 = vld [vmem:[#allocation12 + $0x178] sm:$0xff]
    %v1499 = vld [vmem:[#allocation12 + $0x180] sm:$0xff]
    %v1500 = vld [vmem:[#allocation12 + $0x188] sm:$0xff]
    %v1501 = vld [vmem:[#allocation12 + $0x190] sm:$0xff]
    %v1502 = vld [vmem:[#allocation12 + $0x198] sm:$0xff]
    %v1503 = vld [vmem:[#allocation12 + $0x1a0] sm:$0xff]
    %v1504 = vld [vmem:[#allocation12 + $0x1a8] sm:$0xff]
    %v1505 = vld [vmem:[#allocation12 + $0x1b0] sm:$0xff]
    %v1506 = vld [vmem:[#allocation12 + $0x1b8] sm:$0xff]
    %v1507 = vld [vmem:[#allocation12 + $0x1c0] sm:$0xff]
    %v1508 = vld [vmem:[#allocation12 + $0x1c8] sm:$0xff]
    %v1509 = vld [vmem:[#allocation12 + $0x1d0] sm:$0xff]
    %v1510 = vld [vmem:[#allocation12 + $0x1d8] sm:$0xff]
    %v1511 = vld [vmem:[#allocation12 + $0x1e0] sm:$0xff]
    %v1512 = vld [vmem:[#allocation12 + $0x1e8] sm:$0xff]
    %v1513 = vld [vmem:[#allocation12 + $0x1f0] sm:$0xff]
    %v1514 = vld [vmem:[#allocation12 + $0x1f8] sm:$0xff]
    %1515 = vmatpush.msra.mxu0 %v1511
    %1516 = vmatpush.msra.mxu0 %v1507
    %1517 = vmatpush.msra.mxu0 %v1503
    %1518 = vmatpush.msra.mxu0 %v1499
    %1519 = vmatpush.msra.mxu0 %v1495
    %1520 = vmatpush.msra.mxu0 %v1491
    %1521 = vmatpush.msra.mxu0 %v1487
    %1522 = vmatpush.msra.mxu0 %v1483
    %1523 = vmatpush.msra.mxu0 %v1479
    %1524 = vmatpush.msra.mxu0 %v1475
    %1525 = vmatpush.msra.mxu0 %v1471
    %1526 = vmatpush.msra.mxu0 %v1467
    %1527 = vmatpush.msra.mxu0 %v1463
    %1528 = vmatpush.msra.mxu0 %v1459
    %1529 = vmatpush.msra.mxu0 %v1455
    %1530 = vmatpush.msra.mxu0 %v1451
    %1531 = vmatmul.f32.gmra.mxu0 %v1445
    %v1532 = vpop.f32.mrf.mxu0
    %v1533 = vadd.f32 0.0, %v1532
    %1534 = vdwg.mxu0
    %1535 = vmatpush.msra.mxu0 %v1512
    %1536 = vmatpush.msra.mxu0 %v1508
    %1537 = vmatpush.msra.mxu0 %v1504
    %1538 = vmatpush.msra.mxu0 %v1500
    %1539 = vmatpush.msra.mxu0 %v1496
    %1540 = vmatpush.msra.mxu0 %v1492
    %1541 = vmatpush.msra.mxu0 %v1488
    %1542 = vmatpush.msra.mxu0 %v1484
    %1543 = vmatpush.msra.mxu0 %v1480
    %1544 = vmatpush.msra.mxu0 %v1476
    %1545 = vmatpush.msra.mxu0 %v1472
    %1546 = vmatpush.msra.mxu0 %v1468
    %1547 = vmatpush.msra.mxu0 %v1464
    %1548 = vmatpush.msra.mxu0 %v1460
    %1549 = vmatpush.msra.mxu0 %v1456
    %1550 = vmatpush.msra.mxu0 %v1452
    %1551 = vmatmul.f32.gmra.mxu0 %v1445
    %v1552 = vpop.f32.mrf.mxu0
    %v1553 = vadd.f32 0.0, %v1552
    %1554 = vdwg.mxu0
    %1555 = vmatpush.msra.mxu0 %v1513
    %1556 = vmatpush.msra.mxu0 %v1509
    %1557 = vmatpush.msra.mxu0 %v1505
    %1558 = vmatpush.msra.mxu0 %v1501
    %1559 = vmatpush.msra.mxu0 %v1497
    %1560 = vmatpush.msra.mxu0 %v1493
    %1561 = vmatpush.msra.mxu0 %v1489
    %1562 = vmatpush.msra.mxu0 %v1485
    %1563 = vmatpush.msra.mxu0 %v1481
    %1564 = vmatpush.msra.mxu0 %v1477
    %1565 = vmatpush.msra.mxu0 %v1473
    %1566 = vmatpush.msra.mxu0 %v1469
    %1567 = vmatpush.msra.mxu0 %v1465
    %1568 = vmatpush.msra.mxu0 %v1461
    %1569 = vmatpush.msra.mxu0 %v1457
    %1570 = vmatpush.msra.mxu0 %v1453
    %1571 = vmatmul.f32.gmra.mxu0 %v1445
    %v1572 = vpop.f32.mrf.mxu0
    %v1573 = vadd.f32 0.0, %v1572
    %1574 = vdwg.mxu0
    %1575 = vmatpush.msra.mxu0 %v1514
    %1576 = vmatpush.msra.mxu0 %v1510
    %1577 = vmatpush.msra.mxu0 %v1506
    %1578 = vmatpush.msra.mxu0 %v1502
    %1579 = vmatpush.msra.mxu0 %v1498
    %1580 = vmatpush.msra.mxu0 %v1494
    %1581 = vmatpush.msra.mxu0 %v1490
    %1582 = vmatpush.msra.mxu0 %v1486
    %1583 = vmatpush.msra.mxu0 %v1482
    %1584 = vmatpush.msra.mxu0 %v1478
    %1585 = vmatpush.msra.mxu0 %v1474
    %1586 = vmatpush.msra.mxu0 %v1470
    %1587 = vmatpush.msra.mxu0 %v1466
    %1588 = vmatpush.msra.mxu0 %v1462
    %1589 = vmatpush.msra.mxu0 %v1458
    %1590 = vmatpush.msra.mxu0 %v1454
    %1591 = vmatmul.f32.gmra.mxu0 %v1445
    %v1592 = vpop.f32.mrf.mxu0
    %v1593 = vadd.f32 0.0, %v1592
    %1594 = vdwg.mxu0
    %v1599 = vrot.slane %v1533, 6
    %v1600 = vrot.slane %v1553, 6
    %v1601 = vrot.slane %v1573, 6
    %v1602 = vrot.slane %v1593, 6
    %v1607 = vadd.f32 %v1447, %v1599
    %v1608 = vadd.f32 %v1448, %v1600
    %v1609 = vadd.f32 %v1449, %v1601
    %v1610 = vadd.f32 %v1450, %v1602
    %v1611 = vxor.u32 %v1607, 2147483648
    %v1612 = vmul.f32 %v1611, 1.442695
    %v1613 = vpow.pop %v1612
    %v1614 = vadd.f32 %v1613, 1.0
    %v1615 = vrcp.pop %v1614
    %v1616 = vmul.f32 %v1614, %v1615
    %v1617 = vsub.f32 1.0, %v1616
    %v1618 = vmul.f32 %v1615, %v1617
    %v1619 = vadd.f32 %v1615, %v1618
    %vm1620 = vweird.f32 %v1614
    %vm1621 = vweird.f32 %v1615
    %vm1622 = vmor %vm1620, %vm1621
    %v1623 = vsel %vm1622, %v1615, %v1619
    %v1624 = vand.u32 2147483647, %v1614
    %vm1625 = vcmp.eq.f32.partialorder %v1624, 8.507059e+37
    %v1626 = vand.u32 %v1614, 2147483648
    %v1627 = vor.u32 1.1754944e-38, %v1626
    %v1628 = vsel %vm1625, %v1627, %v1623
    %v1629 = vmul.f32 1.0, %v1628
    %v1630 = vxor.u32 %v1608, 2147483648
    %v1631 = vmul.f32 %v1630, 1.442695
    %v1632 = vpow.pop %v1631
    %v1633 = vadd.f32 %v1632, 1.0
    %v1634 = vrcp.pop %v1633
    %v1635 = vmul.f32 %v1633, %v1634
    %v1636 = vsub.f32 1.0, %v1635
    %v1637 = vmul.f32 %v1634, %v1636
    %v1638 = vadd.f32 %v1634, %v1637
    %vm1639 = vweird.f32 %v1633
    %vm1640 = vweird.f32 %v1634
    %vm1641 = vmor %vm1639, %vm1640
    %v1642 = vsel %vm1641, %v1634, %v1638
    %v1643 = vand.u32 2147483647, %v1633
    %vm1644 = vcmp.eq.f32.partialorder %v1643, 8.507059e+37
    %v1645 = vand.u32 %v1633, 2147483648
    %v1646 = vor.u32 1.1754944e-38, %v1645
    %v1647 = vsel %vm1644, %v1646, %v1642
    %v1648 = vmul.f32 1.0, %v1647
    %v1649 = vtanh.pop %v1609
    %v1650 = vxor.u32 %v1610, 2147483648
    %v1651 = vmul.f32 %v1650, 1.442695
    %v1652 = vpow.pop %v1651
    %v1653 = vadd.f32 %v1652, 1.0
    %v1654 = vrcp.pop %v1653
    %v1655 = vmul.f32 %v1653, %v1654
    %v1656 = vsub.f32 1.0, %v1655
    %v1657 = vmul.f32 %v1654, %v1656
    %v1658 = vadd.f32 %v1654, %v1657
    %vm1659 = vweird.f32 %v1653
    %vm1660 = vweird.f32 %v1654
    %vm1661 = vmor %vm1659, %vm1660
    %v1662 = vsel %vm1661, %v1654, %v1658
    %v1663 = vand.u32 2147483647, %v1653
    %vm1664 = vcmp.eq.f32.partialorder %v1663, 8.507059e+37
    %v1665 = vand.u32 %v1653, 2147483648
    %v1666 = vor.u32 1.1754944e-38, %v1665
    %v1667 = vsel %vm1664, %v1666, %v1662
    %v1668 = vmul.f32 1.0, %v1667
    %v1670 = vrot.slane %v1443, 6
    %v1672 = vmul.f32 %v1648, %v1670
    %v1673 = vmul.f32 %v1629, %v1649
    %v1674 = vadd.f32 %v1672, %v1673
    %v1675 = vtanh.pop %v1674
    %v1676 = vmul.f32 %v1668, %v1675
    %1677 = vst [vmem:[#allocation3 + $0x8] sm:$0xc] %v1676
    %v1678 = vld [vmem:[#allocation2 + $0x20] sm:$0x30]
    %v1679 = vld [vmem:[#allocation2 + $0x28] sm:$0x30]
    %v1680 = vld [vmem:[#allocation2 + $0x30] sm:$0x30]
    %v1681 = vld [vmem:[#allocation2 + $0x38] sm:$0x30]
    %v1682 = vld [vmem:[#allocation12] sm:$0xff]
    %v1683 = vld [vmem:[#allocation12 + $0x8] sm:$0xff]
    %v1684 = vld [vmem:[#allocation12 + $0x10] sm:$0xff]
    %v1685 = vld [vmem:[#allocation12 + $0x18] sm:$0xff]
    %v1686 = vld [vmem:[#allocation12 + $0x20] sm:$0xff]
    %v1687 = vld [vmem:[#allocation12 + $0x28] sm:$0xff]
    %v1688 = vld [vmem:[#allocation12 + $0x30] sm:$0xff]
    %v1689 = vld [vmem:[#allocation12 + $0x38] sm:$0xff]
    %v1690 = vld [vmem:[#allocation12 + $0x40] sm:$0xff]
    %v1691 = vld [vmem:[#allocation12 + $0x48] sm:$0xff]
    %v1692 = vld [vmem:[#allocation12 + $0x50] sm:$0xff]
    %v1693 = vld [vmem:[#allocation12 + $0x58] sm:$0xff]
    %v1694 = vld [vmem:[#allocation12 + $0x60] sm:$0xff]
    %v1695 = vld [vmem:[#allocation12 + $0x68] sm:$0xff]
    %v1696 = vld [vmem:[#allocation12 + $0x70] sm:$0xff]
    %v1697 = vld [vmem:[#allocation12 + $0x78] sm:$0xff]
    %v1698 = vld [vmem:[#allocation12 + $0x80] sm:$0xff]
    %v1699 = vld [vmem:[#allocation12 + $0x88] sm:$0xff]
    %v1700 = vld [vmem:[#allocation12 + $0x90] sm:$0xff]
    %v1701 = vld [vmem:[#allocation12 + $0x98] sm:$0xff]
    %v1702 = vld [vmem:[#allocation12 + $0xa0] sm:$0xff]
    %v1703 = vld [vmem:[#allocation12 + $0xa8] sm:$0xff]
    %v1704 = vld [vmem:[#allocation12 + $0xb0] sm:$0xff]
    %v1705 = vld [vmem:[#allocation12 + $0xb8] sm:$0xff]
    %v1706 = vld [vmem:[#allocation12 + $0xc0] sm:$0xff]
    %v1707 = vld [vmem:[#allocation12 + $0xc8] sm:$0xff]
    %v1708 = vld [vmem:[#allocation12 + $0xd0] sm:$0xff]
    %v1709 = vld [vmem:[#allocation12 + $0xd8] sm:$0xff]
    %v1710 = vld [vmem:[#allocation12 + $0xe0] sm:$0xff]
    %v1711 = vld [vmem:[#allocation12 + $0xe8] sm:$0xff]
    %v1712 = vld [vmem:[#allocation12 + $0xf0] sm:$0xff]
    %v1713 = vld [vmem:[#allocation12 + $0xf8] sm:$0xff]
    %v1714 = vld [vmem:[#allocation12 + $0x100] sm:$0xff]
    %v1715 = vld [vmem:[#allocation12 + $0x108] sm:$0xff]
    %v1716 = vld [vmem:[#allocation12 + $0x110] sm:$0xff]
    %v1717 = vld [vmem:[#allocation12 + $0x118] sm:$0xff]
    %v1718 = vld [vmem:[#allocation12 + $0x120] sm:$0xff]
    %v1719 = vld [vmem:[#allocation12 + $0x128] sm:$0xff]
    %v1720 = vld [vmem:[#allocation12 + $0x130] sm:$0xff]
    %v1721 = vld [vmem:[#allocation12 + $0x138] sm:$0xff]
    %v1722 = vld [vmem:[#allocation12 + $0x140] sm:$0xff]
    %v1723 = vld [vmem:[#allocation12 + $0x148] sm:$0xff]
    %v1724 = vld [vmem:[#allocation12 + $0x150] sm:$0xff]
    %v1725 = vld [vmem:[#allocation12 + $0x158] sm:$0xff]
    %v1726 = vld [vmem:[#allocation12 + $0x160] sm:$0xff]
    %v1727 = vld [vmem:[#allocation12 + $0x168] sm:$0xff]
    %v1728 = vld [vmem:[#allocation12 + $0x170] sm:$0xff]
    %v1729 = vld [vmem:[#allocation12 + $0x178] sm:$0xff]
    %v1730 = vld [vmem:[#allocation12 + $0x180] sm:$0xff]
    %v1731 = vld [vmem:[#allocation12 + $0x188] sm:$0xff]
    %v1732 = vld [vmem:[#allocation12 + $0x190] sm:$0xff]
    %v1733 = vld [vmem:[#allocation12 + $0x198] sm:$0xff]
    %v1734 = vld [vmem:[#allocation12 + $0x1a0] sm:$0xff]
    %v1735 = vld [vmem:[#allocation12 + $0x1a8] sm:$0xff]
    %v1736 = vld [vmem:[#allocation12 + $0x1b0] sm:$0xff]
    %v1737 = vld [vmem:[#allocation12 + $0x1b8] sm:$0xff]
    %v1738 = vld [vmem:[#allocation12 + $0x1c0] sm:$0xff]
    %v1739 = vld [vmem:[#allocation12 + $0x1c8] sm:$0xff]
    %v1740 = vld [vmem:[#allocation12 + $0x1d0] sm:$0xff]
    %v1741 = vld [vmem:[#allocation12 + $0x1d8] sm:$0xff]
    %v1742 = vld [vmem:[#allocation12 + $0x1e0] sm:$0xff]
    %v1743 = vld [vmem:[#allocation12 + $0x1e8] sm:$0xff]
    %v1744 = vld [vmem:[#allocation12 + $0x1f0] sm:$0xff]
    %v1745 = vld [vmem:[#allocation12 + $0x1f8] sm:$0xff]
    %v1747 = vrot.slane %v1676, 2
    %1749 = vmatpush.msra.mxu0 %v1742
    %1750 = vmatpush.msra.mxu0 %v1738
    %1751 = vmatpush.msra.mxu0 %v1734
    %1752 = vmatpush.msra.mxu0 %v1730
    %1753 = vmatpush.msra.mxu0 %v1726
    %1754 = vmatpush.msra.mxu0 %v1722
    %1755 = vmatpush.msra.mxu0 %v1718
    %1756 = vmatpush.msra.mxu0 %v1714
    %1757 = vmatpush.msra.mxu0 %v1710
    %1758 = vmatpush.msra.mxu0 %v1706
    %1759 = vmatpush.msra.mxu0 %v1702
    %1760 = vmatpush.msra.mxu0 %v1698
    %1761 = vmatpush.msra.mxu0 %v1694
    %1762 = vmatpush.msra.mxu0 %v1690
    %1763 = vmatpush.msra.mxu0 %v1686
    %1764 = vmatpush.msra.mxu0 %v1682
    %1765 = vmatmul.f32.gmra.mxu0 %v1747
    %v1766 = vpop.f32.mrf.mxu0
    %v1767 = vadd.f32 0.0, %v1766
    %1768 = vdwg.mxu0
    %1769 = vmatpush.msra.mxu0 %v1743
    %1770 = vmatpush.msra.mxu0 %v1739
    %1771 = vmatpush.msra.mxu0 %v1735
    %1772 = vmatpush.msra.mxu0 %v1731
    %1773 = vmatpush.msra.mxu0 %v1727
    %1774 = vmatpush.msra.mxu0 %v1723
    %1775 = vmatpush.msra.mxu0 %v1719
    %1776 = vmatpush.msra.mxu0 %v1715
    %1777 = vmatpush.msra.mxu0 %v1711
    %1778 = vmatpush.msra.mxu0 %v1707
    %1779 = vmatpush.msra.mxu0 %v1703
    %1780 = vmatpush.msra.mxu0 %v1699
    %1781 = vmatpush.msra.mxu0 %v1695
    %1782 = vmatpush.msra.mxu0 %v1691
    %1783 = vmatpush.msra.mxu0 %v1687
    %1784 = vmatpush.msra.mxu0 %v1683
    %1785 = vmatmul.f32.gmra.mxu0 %v1747
    %v1786 = vpop.f32.mrf.mxu0
    %v1787 = vadd.f32 0.0, %v1786
    %1788 = vdwg.mxu0
    %1789 = vmatpush.msra.mxu0 %v1744
    %1790 = vmatpush.msra.mxu0 %v1740
    %1791 = vmatpush.msra.mxu0 %v1736
    %1792 = vmatpush.msra.mxu0 %v1732
    %1793 = vmatpush.msra.mxu0 %v1728
    %1794 = vmatpush.msra.mxu0 %v1724
    %1795 = vmatpush.msra.mxu0 %v1720
    %1796 = vmatpush.msra.mxu0 %v1716
    %1797 = vmatpush.msra.mxu0 %v1712
    %1798 = vmatpush.msra.mxu0 %v1708
    %1799 = vmatpush.msra.mxu0 %v1704
    %1800 = vmatpush.msra.mxu0 %v1700
    %1801 = vmatpush.msra.mxu0 %v1696
    %1802 = vmatpush.msra.mxu0 %v1692
    %1803 = vmatpush.msra.mxu0 %v1688
    %1804 = vmatpush.msra.mxu0 %v1684
    %1805 = vmatmul.f32.gmra.mxu0 %v1747
    %v1806 = vpop.f32.mrf.mxu0
    %v1807 = vadd.f32 0.0, %v1806
    %1808 = vdwg.mxu0
    %1809 = vmatpush.msra.mxu0 %v1745
    %1810 = vmatpush.msra.mxu0 %v1741
    %1811 = vmatpush.msra.mxu0 %v1737
    %1812 = vmatpush.msra.mxu0 %v1733
    %1813 = vmatpush.msra.mxu0 %v1729
    %1814 = vmatpush.msra.mxu0 %v1725
    %1815 = vmatpush.msra.mxu0 %v1721
    %1816 = vmatpush.msra.mxu0 %v1717
    %1817 = vmatpush.msra.mxu0 %v1713
    %1818 = vmatpush.msra.mxu0 %v1709
    %1819 = vmatpush.msra.mxu0 %v1705
    %1820 = vmatpush.msra.mxu0 %v1701
    %1821 = vmatpush.msra.mxu0 %v1697
    %1822 = vmatpush.msra.mxu0 %v1693
    %1823 = vmatpush.msra.mxu0 %v1689
    %1824 = vmatpush.msra.mxu0 %v1685
    %1825 = vmatmul.f32.gmra.mxu0 %v1747
    %v1826 = vpop.f32.mrf.mxu0
    %v1827 = vadd.f32 0.0, %v1826
    %1828 = vdwg.mxu0
    %v1833 = vrot.slane %v1767, 4
    %v1834 = vrot.slane %v1787, 4
    %v1835 = vrot.slane %v1807, 4
    %v1836 = vrot.slane %v1827, 4
    %v1841 = vadd.f32 %v1678, %v1833
    %v1842 = vadd.f32 %v1679, %v1834
    %v1843 = vadd.f32 %v1680, %v1835
    %v1844 = vadd.f32 %v1681, %v1836
    %v1845 = vxor.u32 %v1841, 2147483648
    %v1846 = vmul.f32 %v1845, 1.442695
    %v1847 = vpow.pop %v1846
    %v1848 = vadd.f32 %v1847, 1.0
    %v1849 = vrcp.pop %v1848
    %v1850 = vmul.f32 %v1848, %v1849
    %v1851 = vsub.f32 1.0, %v1850
    %v1852 = vmul.f32 %v1849, %v1851
    %v1853 = vadd.f32 %v1849, %v1852
    %vm1854 = vweird.f32 %v1848
    %vm1855 = vweird.f32 %v1849
    %vm1856 = vmor %vm1854, %vm1855
    %v1857 = vsel %vm1856, %v1849, %v1853
    %v1858 = vand.u32 2147483647, %v1848
    %vm1859 = vcmp.eq.f32.partialorder %v1858, 8.507059e+37
    %v1860 = vand.u32 %v1848, 2147483648
    %v1861 = vor.u32 1.1754944e-38, %v1860
    %v1862 = vsel %vm1859, %v1861, %v1857
    %v1863 = vmul.f32 1.0, %v1862
    %v1864 = vxor.u32 %v1842, 2147483648
    %v1865 = vmul.f32 %v1864, 1.442695
    %v1866 = vpow.pop %v1865
    %v1867 = vadd.f32 %v1866, 1.0
    %v1868 = vrcp.pop %v1867
    %v1869 = vmul.f32 %v1867, %v1868
    %v1870 = vsub.f32 1.0, %v1869
    %v1871 = vmul.f32 %v1868, %v1870
    %v1872 = vadd.f32 %v1868, %v1871
    %vm1873 = vweird.f32 %v1867
    %vm1874 = vweird.f32 %v1868
    %vm1875 = vmor %vm1873, %vm1874
    %v1876 = vsel %vm1875, %v1868, %v1872
    %v1877 = vand.u32 2147483647, %v1867
    %vm1878 = vcmp.eq.f32.partialorder %v1877, 8.507059e+37
    %v1879 = vand.u32 %v1867, 2147483648
    %v1880 = vor.u32 1.1754944e-38, %v1879
    %v1881 = vsel %vm1878, %v1880, %v1876
    %v1882 = vmul.f32 1.0, %v1881
    %v1883 = vtanh.pop %v1843
    %v1884 = vxor.u32 %v1844, 2147483648
    %v1885 = vmul.f32 %v1884, 1.442695
    %v1886 = vpow.pop %v1885
    %v1887 = vadd.f32 %v1886, 1.0
    %v1888 = vrcp.pop %v1887
    %v1889 = vmul.f32 %v1887, %v1888
    %v1890 = vsub.f32 1.0, %v1889
    %v1891 = vmul.f32 %v1888, %v1890
    %v1892 = vadd.f32 %v1888, %v1891
    %vm1893 = vweird.f32 %v1887
    %vm1894 = vweird.f32 %v1888
    %vm1895 = vmor %vm1893, %vm1894
    %v1896 = vsel %vm1895, %v1888, %v1892
    %v1897 = vand.u32 2147483647, %v1887
    %vm1898 = vcmp.eq.f32.partialorder %v1897, 8.507059e+37
    %v1899 = vand.u32 %v1887, 2147483648
    %v1900 = vor.u32 1.1754944e-38, %v1899
    %v1901 = vsel %vm1898, %v1900, %v1896
    %v1902 = vmul.f32 1.0, %v1901
    %v1904 = vrot.slane %v1674, 6
    %v1906 = vmul.f32 %v1882, %v1904
    %v1907 = vmul.f32 %v1863, %v1883
    %v1908 = vadd.f32 %v1906, %v1907
    %v1909 = vtanh.pop %v1908
    %v1910 = vmul.f32 %v1902, %v1909
    %1911 = vst [vmem:[#allocation3 + $0x8] sm:$0x30] %v1910
    %v1912 = vld [vmem:[#allocation2 + $0x20] sm:$0xc0]
    %v1913 = vld [vmem:[#allocation2 + $0x28] sm:$0xc0]
    %v1914 = vld [vmem:[#allocation2 + $0x30] sm:$0xc0]
    %v1915 = vld [vmem:[#allocation2 + $0x38] sm:$0xc0]
    %v1916 = vld [vmem:[#allocation12] sm:$0xff]
    %v1917 = vld [vmem:[#allocation12 + $0x8] sm:$0xff]
    %v1918 = vld [vmem:[#allocation12 + $0x10] sm:$0xff]
    %v1919 = vld [vmem:[#allocation12 + $0x18] sm:$0xff]
    %v1920 = vld [vmem:[#allocation12 + $0x20] sm:$0xff]
    %v1921 = vld [vmem:[#allocation12 + $0x28] sm:$0xff]
    %v1922 = vld [vmem:[#allocation12 + $0x30] sm:$0xff]
    %v1923 = vld [vmem:[#allocation12 + $0x38] sm:$0xff]
    %v1924 = vld [vmem:[#allocation12 + $0x40] sm:$0xff]
    %v1925 = vld [vmem:[#allocation12 + $0x48] sm:$0xff]
    %v1926 = vld [vmem:[#allocation12 + $0x50] sm:$0xff]
    %v1927 = vld [vmem:[#allocation12 + $0x58] sm:$0xff]
    %v1928 = vld [vmem:[#allocation12 + $0x60] sm:$0xff]
    %v1929 = vld [vmem:[#allocation12 + $0x68] sm:$0xff]
    %v1930 = vld [vmem:[#allocation12 + $0x70] sm:$0xff]
    %v1931 = vld [vmem:[#allocation12 + $0x78] sm:$0xff]
    %v1932 = vld [vmem:[#allocation12 + $0x80] sm:$0xff]
    %v1933 = vld [vmem:[#allocation12 + $0x88] sm:$0xff]
    %v1934 = vld [vmem:[#allocation12 + $0x90] sm:$0xff]
    %v1935 = vld [vmem:[#allocation12 + $0x98] sm:$0xff]
    %v1936 = vld [vmem:[#allocation12 + $0xa0] sm:$0xff]
    %v1937 = vld [vmem:[#allocation12 + $0xa8] sm:$0xff]
    %v1938 = vld [vmem:[#allocation12 + $0xb0] sm:$0xff]
    %v1939 = vld [vmem:[#allocation12 + $0xb8] sm:$0xff]
    %v1940 = vld [vmem:[#allocation12 + $0xc0] sm:$0xff]
    %v1941 = vld [vmem:[#allocation12 + $0xc8] sm:$0xff]
    %v1942 = vld [vmem:[#allocation12 + $0xd0] sm:$0xff]
    %v1943 = vld [vmem:[#allocation12 + $0xd8] sm:$0xff]
    %v1944 = vld [vmem:[#allocation12 + $0xe0] sm:$0xff]
    %v1945 = vld [vmem:[#allocation12 + $0xe8] sm:$0xff]
    %v1946 = vld [vmem:[#allocation12 + $0xf0] sm:$0xff]
    %v1947 = vld [vmem:[#allocation12 + $0xf8] sm:$0xff]
    %v1948 = vld [vmem:[#allocation12 + $0x100] sm:$0xff]
    %v1949 = vld [vmem:[#allocation12 + $0x108] sm:$0xff]
    %v1950 = vld [vmem:[#allocation12 + $0x110] sm:$0xff]
    %v1951 = vld [vmem:[#allocation12 + $0x118] sm:$0xff]
    %v1952 = vld [vmem:[#allocation12 + $0x120] sm:$0xff]
    %v1953 = vld [vmem:[#allocation12 + $0x128] sm:$0xff]
    %v1954 = vld [vmem:[#allocation12 + $0x130] sm:$0xff]
    %v1955 = vld [vmem:[#allocation12 + $0x138] sm:$0xff]
    %v1956 = vld [vmem:[#allocation12 + $0x140] sm:$0xff]
    %v1957 = vld [vmem:[#allocation12 + $0x148] sm:$0xff]
    %v1958 = vld [vmem:[#allocation12 + $0x150] sm:$0xff]
    %v1959 = vld [vmem:[#allocation12 + $0x158] sm:$0xff]
    %v1960 = vld [vmem:[#allocation12 + $0x160] sm:$0xff]
    %v1961 = vld [vmem:[#allocation12 + $0x168] sm:$0xff]
    %v1962 = vld [vmem:[#allocation12 + $0x170] sm:$0xff]
    %v1963 = vld [vmem:[#allocation12 + $0x178] sm:$0xff]
    %v1964 = vld [vmem:[#allocation12 + $0x180] sm:$0xff]
    %v1965 = vld [vmem:[#allocation12 + $0x188] sm:$0xff]
    %v1966 = vld [vmem:[#allocation12 + $0x190] sm:$0xff]
    %v1967 = vld [vmem:[#allocation12 + $0x198] sm:$0xff]
    %v1968 = vld [vmem:[#allocation12 + $0x1a0] sm:$0xff]
    %v1969 = vld [vmem:[#allocation12 + $0x1a8] sm:$0xff]
    %v1970 = vld [vmem:[#allocation12 + $0x1b0] sm:$0xff]
    %v1971 = vld [vmem:[#allocation12 + $0x1b8] sm:$0xff]
    %v1972 = vld [vmem:[#allocation12 + $0x1c0] sm:$0xff]
    %v1973 = vld [vmem:[#allocation12 + $0x1c8] sm:$0xff]
    %v1974 = vld [vmem:[#allocation12 + $0x1d0] sm:$0xff]
    %v1975 = vld [vmem:[#allocation12 + $0x1d8] sm:$0xff]
    %v1976 = vld [vmem:[#allocation12 + $0x1e0] sm:$0xff]
    %v1977 = vld [vmem:[#allocation12 + $0x1e8] sm:$0xff]
    %v1978 = vld [vmem:[#allocation12 + $0x1f0] sm:$0xff]
    %v1979 = vld [vmem:[#allocation12 + $0x1f8] sm:$0xff]
    %v1981 = vrot.slane %v1910, 4
    %1983 = vmatpush.msra.mxu0 %v1976
    %1984 = vmatpush.msra.mxu0 %v1972
    %1985 = vmatpush.msra.mxu0 %v1968
    %1986 = vmatpush.msra.mxu0 %v1964
    %1987 = vmatpush.msra.mxu0 %v1960
    %1988 = vmatpush.msra.mxu0 %v1956
    %1989 = vmatpush.msra.mxu0 %v1952
    %1990 = vmatpush.msra.mxu0 %v1948
    %1991 = vmatpush.msra.mxu0 %v1944
    %1992 = vmatpush.msra.mxu0 %v1940
    %1993 = vmatpush.msra.mxu0 %v1936
    %1994 = vmatpush.msra.mxu0 %v1932
    %1995 = vmatpush.msra.mxu0 %v1928
    %1996 = vmatpush.msra.mxu0 %v1924
    %1997 = vmatpush.msra.mxu0 %v1920
    %1998 = vmatpush.msra.mxu0 %v1916
    %1999 = vmatmul.f32.gmra.mxu0 %v1981
    %v2000 = vpop.f32.mrf.mxu0
    %v2001 = vadd.f32 0.0, %v2000
    %2002 = vdwg.mxu0
    %2003 = vmatpush.msra.mxu0 %v1977
    %2004 = vmatpush.msra.mxu0 %v1973
    %2005 = vmatpush.msra.mxu0 %v1969
    %2006 = vmatpush.msra.mxu0 %v1965
    %2007 = vmatpush.msra.mxu0 %v1961
    %2008 = vmatpush.msra.mxu0 %v1957
    %2009 = vmatpush.msra.mxu0 %v1953
    %2010 = vmatpush.msra.mxu0 %v1949
    %2011 = vmatpush.msra.mxu0 %v1945
    %2012 = vmatpush.msra.mxu0 %v1941
    %2013 = vmatpush.msra.mxu0 %v1937
    %2014 = vmatpush.msra.mxu0 %v1933
    %2015 = vmatpush.msra.mxu0 %v1929
    %2016 = vmatpush.msra.mxu0 %v1925
    %2017 = vmatpush.msra.mxu0 %v1921
    %2018 = vmatpush.msra.mxu0 %v1917
    %2019 = vmatmul.f32.gmra.mxu0 %v1981
    %v2020 = vpop.f32.mrf.mxu0
    %v2021 = vadd.f32 0.0, %v2020
    %2022 = vdwg.mxu0
    %2023 = vmatpush.msra.mxu0 %v1978
    %2024 = vmatpush.msra.mxu0 %v1974
    %2025 = vmatpush.msra.mxu0 %v1970
    %2026 = vmatpush.msra.mxu0 %v1966
    %2027 = vmatpush.msra.mxu0 %v1962
    %2028 = vmatpush.msra.mxu0 %v1958
    %2029 = vmatpush.msra.mxu0 %v1954
    %2030 = vmatpush.msra.mxu0 %v1950
    %2031 = vmatpush.msra.mxu0 %v1946
    %2032 = vmatpush.msra.mxu0 %v1942
    %2033 = vmatpush.msra.mxu0 %v1938
    %2034 = vmatpush.msra.mxu0 %v1934
    %2035 = vmatpush.msra.mxu0 %v1930
    %2036 = vmatpush.msra.mxu0 %v1926
    %2037 = vmatpush.msra.mxu0 %v1922
    %2038 = vmatpush.msra.mxu0 %v1918
    %2039 = vmatmul.f32.gmra.mxu0 %v1981
    %v2040 = vpop.f32.mrf.mxu0
    %v2041 = vadd.f32 0.0, %v2040
    %2042 = vdwg.mxu0
    %2043 = vmatpush.msra.mxu0 %v1979
    %2044 = vmatpush.msra.mxu0 %v1975
    %2045 = vmatpush.msra.mxu0 %v1971
    %2046 = vmatpush.msra.mxu0 %v1967
    %2047 = vmatpush.msra.mxu0 %v1963
    %2048 = vmatpush.msra.mxu0 %v1959
    %2049 = vmatpush.msra.mxu0 %v1955
    %2050 = vmatpush.msra.mxu0 %v1951
    %2051 = vmatpush.msra.mxu0 %v1947
    %2052 = vmatpush.msra.mxu0 %v1943
    %2053 = vmatpush.msra.mxu0 %v1939
    %2054 = vmatpush.msra.mxu0 %v1935
    %2055 = vmatpush.msra.mxu0 %v1931
    %2056 = vmatpush.msra.mxu0 %v1927
    %2057 = vmatpush.msra.mxu0 %v1923
    %2058 = vmatpush.msra.mxu0 %v1919
    %2059 = vmatmul.f32.gmra.mxu0 %v1981
    %v2060 = vpop.f32.mrf.mxu0
    %v2061 = vadd.f32 0.0, %v2060
    %2062 = vdwg.mxu0
    %v2067 = vrot.slane %v2001, 2
    %v2068 = vrot.slane %v2021, 2
    %v2069 = vrot.slane %v2041, 2
    %v2070 = vrot.slane %v2061, 2
    %v2075 = vadd.f32 %v1912, %v2067
    %v2076 = vadd.f32 %v1913, %v2068
    %v2077 = vadd.f32 %v1914, %v2069
    %v2078 = vadd.f32 %v1915, %v2070
    %v2079 = vxor.u32 %v2075, 2147483648
    %v2080 = vmul.f32 %v2079, 1.442695
    %v2081 = vpow.pop %v2080
    %v2082 = vadd.f32 %v2081, 1.0
    %v2083 = vrcp.pop %v2082
    %v2084 = vmul.f32 %v2082, %v2083
    %v2085 = vsub.f32 1.0, %v2084
    %v2086 = vmul.f32 %v2083, %v2085
    %v2087 = vadd.f32 %v2083, %v2086
    %vm2088 = vweird.f32 %v2082
    %vm2089 = vweird.f32 %v2083
    %vm2090 = vmor %vm2088, %vm2089
    %v2091 = vsel %vm2090, %v2083, %v2087
    %v2092 = vand.u32 2147483647, %v2082
    %vm2093 = vcmp.eq.f32.partialorder %v2092, 8.507059e+37
    %v2094 = vand.u32 %v2082, 2147483648
    %v2095 = vor.u32 1.1754944e-38, %v2094
    %v2096 = vsel %vm2093, %v2095, %v2091
    %v2097 = vmul.f32 1.0, %v2096
    %v2098 = vxor.u32 %v2076, 2147483648
    %v2099 = vmul.f32 %v2098, 1.442695
    %v2100 = vpow.pop %v2099
    %v2101 = vadd.f32 %v2100, 1.0
    %v2102 = vrcp.pop %v2101
    %v2103 = vmul.f32 %v2101, %v2102
    %v2104 = vsub.f32 1.0, %v2103
    %v2105 = vmul.f32 %v2102, %v2104
    %v2106 = vadd.f32 %v2102, %v2105
    %vm2107 = vweird.f32 %v2101
    %vm2108 = vweird.f32 %v2102
    %vm2109 = vmor %vm2107, %vm2108
    %v2110 = vsel %vm2109, %v2102, %v2106
    %v2111 = vand.u32 2147483647, %v2101
    %vm2112 = vcmp.eq.f32.partialorder %v2111, 8.507059e+37
    %v2113 = vand.u32 %v2101, 2147483648
    %v2114 = vor.u32 1.1754944e-38, %v2113
    %v2115 = vsel %vm2112, %v2114, %v2110
    %v2116 = vmul.f32 1.0, %v2115
    %v2117 = vtanh.pop %v2077
    %v2118 = vxor.u32 %v2078, 2147483648
    %v2119 = vmul.f32 %v2118, 1.442695
    %v2120 = vpow.pop %v2119
    %v2121 = vadd.f32 %v2120, 1.0
    %v2122 = vrcp.pop %v2121
    %v2123 = vmul.f32 %v2121, %v2122
    %v2124 = vsub.f32 1.0, %v2123
    %v2125 = vmul.f32 %v2122, %v2124
    %v2126 = vadd.f32 %v2122, %v2125
    %vm2127 = vweird.f32 %v2121
    %vm2128 = vweird.f32 %v2122
    %vm2129 = vmor %vm2127, %vm2128
    %v2130 = vsel %vm2129, %v2122, %v2126
    %v2131 = vand.u32 2147483647, %v2121
    %vm2132 = vcmp.eq.f32.partialorder %v2131, 8.507059e+37
    %v2133 = vand.u32 %v2121, 2147483648
    %v2134 = vor.u32 1.1754944e-38, %v2133
    %v2135 = vsel %vm2132, %v2134, %v2130
    %v2136 = vmul.f32 1.0, %v2135
    %v2138 = vrot.slane %v1908, 6
    %v2140 = vmul.f32 %v2116, %v2138
    %v2141 = vmul.f32 %v2097, %v2117
    %v2142 = vadd.f32 %v2140, %v2141
    %v2143 = vtanh.pop %v2142
    %v2144 = vmul.f32 %v2136, %v2143
    %2145 = vst [vmem:[#allocation3 + $0x8] sm:$0xc0] %v2144
    %2146 = vst [vmem:[#allocation20 - $0x6] sm:$0xc0] %v2144
    %2147 = vst [vmem:[#allocation22 - $0x6] sm:$0xc0] %v2142
    %v2148 = vld [vmem:[#allocation3] sm:$0xff]
    %v2149 = vld [vmem:[#allocation3 + $0x8] sm:$0xff]
    %v2150 = vld [vmem:[#allocation13] sm:$0xff]
    %v2151 = vld [vmem:[#allocation13 + $0x8] sm:$0xff]
    %v2152 = vld [vmem:[#allocation13 + $0x10] sm:$0xff]
    %v2153 = vld [vmem:[#allocation13 + $0x18] sm:$0xff]
    %v2154 = vld [vmem:[#allocation13 + $0x20] sm:$0xff]
    %v2155 = vld [vmem:[#allocation13 + $0x28] sm:$0xff]
    %v2156 = vld [vmem:[#allocation13 + $0x30] sm:$0xff]
    %v2157 = vld [vmem:[#allocation13 + $0x38] sm:$0xff]
    %v2158 = vld [vmem:[#allocation13 + $0x40] sm:$0xff]
    %v2159 = vld [vmem:[#allocation13 + $0x48] sm:$0xff]
    %v2160 = vld [vmem:[#allocation13 + $0x50] sm:$0xff]
    %v2161 = vld [vmem:[#allocation13 + $0x58] sm:$0xff]
    %v2162 = vld [vmem:[#allocation13 + $0x60] sm:$0xff]
    %v2163 = vld [vmem:[#allocation13 + $0x68] sm:$0xff]
    %v2164 = vld [vmem:[#allocation13 + $0x70] sm:$0xff]
    %v2165 = vld [vmem:[#allocation13 + $0x78] sm:$0xff]
    %v2166 = vld [vmem:[#allocation13 + $0x80] sm:$0xff]
    %v2167 = vld [vmem:[#allocation13 + $0x88] sm:$0xff]
    %v2168 = vld [vmem:[#allocation13 + $0x90] sm:$0xff]
    %v2169 = vld [vmem:[#allocation13 + $0x98] sm:$0xff]
    %v2170 = vld [vmem:[#allocation13 + $0xa0] sm:$0xff]
    %v2171 = vld [vmem:[#allocation13 + $0xa8] sm:$0xff]
    %v2172 = vld [vmem:[#allocation13 + $0xb0] sm:$0xff]
    %v2173 = vld [vmem:[#allocation13 + $0xb8] sm:$0xff]
    %v2174 = vld [vmem:[#allocation13 + $0xc0] sm:$0xff]
    %v2175 = vld [vmem:[#allocation13 + $0xc8] sm:$0xff]
    %v2176 = vld [vmem:[#allocation13 + $0xd0] sm:$0xff]
    %v2177 = vld [vmem:[#allocation13 + $0xd8] sm:$0xff]
    %v2178 = vld [vmem:[#allocation13 + $0xe0] sm:$0xff]
    %v2179 = vld [vmem:[#allocation13 + $0xe8] sm:$0xff]
    %v2180 = vld [vmem:[#allocation13 + $0xf0] sm:$0xff]
    %v2181 = vld [vmem:[#allocation13 + $0xf8] sm:$0xff]
    %v2182 = vld [vmem:[#allocation13 + $0x100] sm:$0xff]
    %v2183 = vld [vmem:[#allocation13 + $0x108] sm:$0xff]
    %v2184 = vld [vmem:[#allocation13 + $0x110] sm:$0xff]
    %v2185 = vld [vmem:[#allocation13 + $0x118] sm:$0xff]
    %v2186 = vld [vmem:[#allocation13 + $0x120] sm:$0xff]
    %v2187 = vld [vmem:[#allocation13 + $0x128] sm:$0xff]
    %v2188 = vld [vmem:[#allocation13 + $0x130] sm:$0xff]
    %v2189 = vld [vmem:[#allocation13 + $0x138] sm:$0xff]
    %v2190 = vld [vmem:[#allocation13 + $0x140] sm:$0xff]
    %v2191 = vld [vmem:[#allocation13 + $0x148] sm:$0xff]
    %v2192 = vld [vmem:[#allocation13 + $0x150] sm:$0xff]
    %v2193 = vld [vmem:[#allocation13 + $0x158] sm:$0xff]
    %v2194 = vld [vmem:[#allocation13 + $0x160] sm:$0xff]
    %v2195 = vld [vmem:[#allocation13 + $0x168] sm:$0xff]
    %v2196 = vld [vmem:[#allocation13 + $0x170] sm:$0xff]
    %v2197 = vld [vmem:[#allocation13 + $0x178] sm:$0xff]
    %v2198 = vld [vmem:[#allocation13 + $0x180] sm:$0xff]
    %v2199 = vld [vmem:[#allocation13 + $0x188] sm:$0xff]
    %v2200 = vld [vmem:[#allocation13 + $0x190] sm:$0xff]
    %v2201 = vld [vmem:[#allocation13 + $0x198] sm:$0xff]
    %v2202 = vld [vmem:[#allocation13 + $0x1a0] sm:$0xff]
    %v2203 = vld [vmem:[#allocation13 + $0x1a8] sm:$0xff]
    %v2204 = vld [vmem:[#allocation13 + $0x1b0] sm:$0xff]
    %v2205 = vld [vmem:[#allocation13 + $0x1b8] sm:$0xff]
    %v2206 = vld [vmem:[#allocation13 + $0x1c0] sm:$0xff]
    %v2207 = vld [vmem:[#allocation13 + $0x1c8] sm:$0xff]
    %v2208 = vld [vmem:[#allocation13 + $0x1d0] sm:$0xff]
    %v2209 = vld [vmem:[#allocation13 + $0x1d8] sm:$0xff]
    %v2210 = vld [vmem:[#allocation13 + $0x1e0] sm:$0xff]
    %v2211 = vld [vmem:[#allocation13 + $0x1e8] sm:$0xff]
    %v2212 = vld [vmem:[#allocation13 + $0x1f0] sm:$0xff]
    %v2213 = vld [vmem:[#allocation13 + $0x1f8] sm:$0xff]
    %v2214 = vld [vmem:[#allocation16] sm:$0xf]
    %v2216 = vperm.slane %v2214, 0
    %v2217 = vperm.slane %v2214, 1
    %v2218 = vperm.slane %v2214, 2
    %v2219 = vperm.slane %v2214, 3
    %2224 = vmatpush.msra.mxu0 %v2210
    %2225 = vmatpush.msra.mxu0 %v2206
    %2226 = vmatpush.msra.mxu0 %v2202
    %2227 = vmatpush.msra.mxu0 %v2198
    %2228 = vmatpush.msra.mxu0 %v2194
    %2229 = vmatpush.msra.mxu0 %v2190
    %2230 = vmatpush.msra.mxu0 %v2186
    %2231 = vmatpush.msra.mxu0 %v2182
    %2232 = vmatpush.msra.mxu0 %v2178
    %2233 = vmatpush.msra.mxu0 %v2174
    %2234 = vmatpush.msra.mxu0 %v2170
    %2235 = vmatpush.msra.mxu0 %v2166
    %2236 = vmatpush.msra.mxu0 %v2162
    %2237 = vmatpush.msra.mxu0 %v2158
    %2238 = vmatpush.msra.mxu0 %v2154
    %2239 = vmatpush.msra.mxu0 %v2150
    %2240 = vmatmul.f32.gmra.mxu0 %v2148
    %v2241 = vpop.f32.mrf.mxu0
    %v2242 = vadd.f32 %v2216, %v2241
    %2243 = vmatmul.f32.gmra.mxu0 %v2149
    %v2244 = vpop.f32.mrf.mxu0
    %v2245 = vadd.f32 %v2216, %v2244
    %2246 = vdwg.mxu0
    %2247 = vmatpush.msra.mxu0 %v2211
    %2248 = vmatpush.msra.mxu0 %v2207
    %2249 = vmatpush.msra.mxu0 %v2203
    %2250 = vmatpush.msra.mxu0 %v2199
    %2251 = vmatpush.msra.mxu0 %v2195
    %2252 = vmatpush.msra.mxu0 %v2191
    %2253 = vmatpush.msra.mxu0 %v2187
    %2254 = vmatpush.msra.mxu0 %v2183
    %2255 = vmatpush.msra.mxu0 %v2179
    %2256 = vmatpush.msra.mxu0 %v2175
    %2257 = vmatpush.msra.mxu0 %v2171
    %2258 = vmatpush.msra.mxu0 %v2167
    %2259 = vmatpush.msra.mxu0 %v2163
    %2260 = vmatpush.msra.mxu0 %v2159
    %2261 = vmatpush.msra.mxu0 %v2155
    %2262 = vmatpush.msra.mxu0 %v2151
    %2263 = vmatmul.f32.gmra.mxu0 %v2148
    %v2264 = vpop.f32.mrf.mxu0
    %v2265 = vadd.f32 %v2217, %v2264
    %2266 = vmatmul.f32.gmra.mxu0 %v2149
    %v2267 = vpop.f32.mrf.mxu0
    %v2268 = vadd.f32 %v2217, %v2267
    %2269 = vdwg.mxu0
    %2270 = vmatpush.msra.mxu0 %v2212
    %2271 = vmatpush.msra.mxu0 %v2208
    %2272 = vmatpush.msra.mxu0 %v2204
    %2273 = vmatpush.msra.mxu0 %v2200
    %2274 = vmatpush.msra.mxu0 %v2196
    %2275 = vmatpush.msra.mxu0 %v2192
    %2276 = vmatpush.msra.mxu0 %v2188
    %2277 = vmatpush.msra.mxu0 %v2184
    %2278 = vmatpush.msra.mxu0 %v2180
    %2279 = vmatpush.msra.mxu0 %v2176
    %2280 = vmatpush.msra.mxu0 %v2172
    %2281 = vmatpush.msra.mxu0 %v2168
    %2282 = vmatpush.msra.mxu0 %v2164
    %2283 = vmatpush.msra.mxu0 %v2160
    %2284 = vmatpush.msra.mxu0 %v2156
    %2285 = vmatpush.msra.mxu0 %v2152
    %2286 = vmatmul.f32.gmra.mxu0 %v2148
    %v2287 = vpop.f32.mrf.mxu0
    %v2288 = vadd.f32 %v2218, %v2287
    %2289 = vmatmul.f32.gmra.mxu0 %v2149
    %v2290 = vpop.f32.mrf.mxu0
    %v2291 = vadd.f32 %v2218, %v2290
    %2292 = vdwg.mxu0
    %2293 = vmatpush.msra.mxu0 %v2213
    %2294 = vmatpush.msra.mxu0 %v2209
    %2295 = vmatpush.msra.mxu0 %v2205
    %2296 = vmatpush.msra.mxu0 %v2201
    %2297 = vmatpush.msra.mxu0 %v2197
    %2298 = vmatpush.msra.mxu0 %v2193
    %2299 = vmatpush.msra.mxu0 %v2189
    %2300 = vmatpush.msra.mxu0 %v2185
    %2301 = vmatpush.msra.mxu0 %v2181
    %2302 = vmatpush.msra.mxu0 %v2177
    %2303 = vmatpush.msra.mxu0 %v2173
    %2304 = vmatpush.msra.mxu0 %v2169
    %2305 = vmatpush.msra.mxu0 %v2165
    %2306 = vmatpush.msra.mxu0 %v2161
    %2307 = vmatpush.msra.mxu0 %v2157
    %2308 = vmatpush.msra.mxu0 %v2153
    %2309 = vmatmul.f32.gmra.mxu0 %v2148
    %v2310 = vpop.f32.mrf.mxu0
    %v2311 = vadd.f32 %v2219, %v2310
    %2312 = vmatmul.f32.gmra.mxu0 %v2149
    %v2313 = vpop.f32.mrf.mxu0
    %v2314 = vadd.f32 %v2219, %v2313
    %2315 = vdwg.mxu0
    %2316 = vst [vmem:[#allocation2] sm:$0xff] %v2242
    %2317 = vst [vmem:[#allocation2 + $0x8] sm:$0xff] %v2265
    %2318 = vst [vmem:[#allocation2 + $0x10] sm:$0xff] %v2288
    %2319 = vst [vmem:[#allocation2 + $0x18] sm:$0xff] %v2311
    %2320 = vst [vmem:[#allocation2 + $0x20] sm:$0xff] %v2245
    %2321 = vst [vmem:[#allocation2 + $0x28] sm:$0xff] %v2268
    %2322 = vst [vmem:[#allocation2 + $0x30] sm:$0xff] %v2291
    %2323 = vst [vmem:[#allocation2 + $0x38] sm:$0xff] %v2314
    %s2324 = scalar_lea.vmem [#allocation7], 2
    %v2325 = vld [vmem:[%s2324] sm:$0x3]
    %s2326 = scalar_lea.vmem [#allocation9], 2
    %v2327 = vld [vmem:[%s2326] sm:$0x3]
    %v2328 = vld [vmem:[#allocation2] sm:$0x3]
    %v2329 = vld [vmem:[#allocation2 + $0x8] sm:$0x3]
    %v2330 = vld [vmem:[#allocation2 + $0x10] sm:$0x3]
    %v2331 = vld [vmem:[#allocation2 + $0x18] sm:$0x3]
    %v2332 = vld [vmem:[#allocation15] sm:$0xff]
    %v2333 = vld [vmem:[#allocation15 + $0x8] sm:$0xff]
    %v2334 = vld [vmem:[#allocation15 + $0x10] sm:$0xff]
    %v2335 = vld [vmem:[#allocation15 + $0x18] sm:$0xff]
    %v2336 = vld [vmem:[#allocation15 + $0x20] sm:$0xff]
    %v2337 = vld [vmem:[#allocation15 + $0x28] sm:$0xff]
    %v2338 = vld [vmem:[#allocation15 + $0x30] sm:$0xff]
    %v2339 = vld [vmem:[#allocation15 + $0x38] sm:$0xff]
    %v2340 = vld [vmem:[#allocation15 + $0x40] sm:$0xff]
    %v2341 = vld [vmem:[#allocation15 + $0x48] sm:$0xff]
    %v2342 = vld [vmem:[#allocation15 + $0x50] sm:$0xff]
    %v2343 = vld [vmem:[#allocation15 + $0x58] sm:$0xff]
    %v2344 = vld [vmem:[#allocation15 + $0x60] sm:$0xff]
    %v2345 = vld [vmem:[#allocation15 + $0x68] sm:$0xff]
    %v2346 = vld [vmem:[#allocation15 + $0x70] sm:$0xff]
    %v2347 = vld [vmem:[#allocation15 + $0x78] sm:$0xff]
    %v2348 = vld [vmem:[#allocation15 + $0x80] sm:$0xff]
    %v2349 = vld [vmem:[#allocation15 + $0x88] sm:$0xff]
    %v2350 = vld [vmem:[#allocation15 + $0x90] sm:$0xff]
    %v2351 = vld [vmem:[#allocation15 + $0x98] sm:$0xff]
    %v2352 = vld [vmem:[#allocation15 + $0xa0] sm:$0xff]
    %v2353 = vld [vmem:[#allocation15 + $0xa8] sm:$0xff]
    %v2354 = vld [vmem:[#allocation15 + $0xb0] sm:$0xff]
    %v2355 = vld [vmem:[#allocation15 + $0xb8] sm:$0xff]
    %v2356 = vld [vmem:[#allocation15 + $0xc0] sm:$0xff]
    %v2357 = vld [vmem:[#allocation15 + $0xc8] sm:$0xff]
    %v2358 = vld [vmem:[#allocation15 + $0xd0] sm:$0xff]
    %v2359 = vld [vmem:[#allocation15 + $0xd8] sm:$0xff]
    %v2360 = vld [vmem:[#allocation15 + $0xe0] sm:$0xff]
    %v2361 = vld [vmem:[#allocation15 + $0xe8] sm:$0xff]
    %v2362 = vld [vmem:[#allocation15 + $0xf0] sm:$0xff]
    %v2363 = vld [vmem:[#allocation15 + $0xf8] sm:$0xff]
    %v2364 = vld [vmem:[#allocation15 + $0x100] sm:$0xff]
    %v2365 = vld [vmem:[#allocation15 + $0x108] sm:$0xff]
    %v2366 = vld [vmem:[#allocation15 + $0x110] sm:$0xff]
    %v2367 = vld [vmem:[#allocation15 + $0x118] sm:$0xff]
    %v2368 = vld [vmem:[#allocation15 + $0x120] sm:$0xff]
    %v2369 = vld [vmem:[#allocation15 + $0x128] sm:$0xff]
    %v2370 = vld [vmem:[#allocation15 + $0x130] sm:$0xff]
    %v2371 = vld [vmem:[#allocation15 + $0x138] sm:$0xff]
    %v2372 = vld [vmem:[#allocation15 + $0x140] sm:$0xff]
    %v2373 = vld [vmem:[#allocation15 + $0x148] sm:$0xff]
    %v2374 = vld [vmem:[#allocation15 + $0x150] sm:$0xff]
    %v2375 = vld [vmem:[#allocation15 + $0x158] sm:$0xff]
    %v2376 = vld [vmem:[#allocation15 + $0x160] sm:$0xff]
    %v2377 = vld [vmem:[#allocation15 + $0x168] sm:$0xff]
    %v2378 = vld [vmem:[#allocation15 + $0x170] sm:$0xff]
    %v2379 = vld [vmem:[#allocation15 + $0x178] sm:$0xff]
    %v2380 = vld [vmem:[#allocation15 + $0x180] sm:$0xff]
    %v2381 = vld [vmem:[#allocation15 + $0x188] sm:$0xff]
    %v2382 = vld [vmem:[#allocation15 + $0x190] sm:$0xff]
    %v2383 = vld [vmem:[#allocation15 + $0x198] sm:$0xff]
    %v2384 = vld [vmem:[#allocation15 + $0x1a0] sm:$0xff]
    %v2385 = vld [vmem:[#allocation15 + $0x1a8] sm:$0xff]
    %v2386 = vld [vmem:[#allocation15 + $0x1b0] sm:$0xff]
    %v2387 = vld [vmem:[#allocation15 + $0x1b8] sm:$0xff]
    %v2388 = vld [vmem:[#allocation15 + $0x1c0] sm:$0xff]
    %v2389 = vld [vmem:[#allocation15 + $0x1c8] sm:$0xff]
    %v2390 = vld [vmem:[#allocation15 + $0x1d0] sm:$0xff]
    %v2391 = vld [vmem:[#allocation15 + $0x1d8] sm:$0xff]
    %v2392 = vld [vmem:[#allocation15 + $0x1e0] sm:$0xff]
    %v2393 = vld [vmem:[#allocation15 + $0x1e8] sm:$0xff]
    %v2394 = vld [vmem:[#allocation15 + $0x1f0] sm:$0xff]
    %v2395 = vld [vmem:[#allocation15 + $0x1f8] sm:$0xff]
    %2396 = vmatpush.msra.mxu0 %v2392
    %2397 = vmatpush.msra.mxu0 %v2388
    %2398 = vmatpush.msra.mxu0 %v2384
    %2399 = vmatpush.msra.mxu0 %v2380
    %2400 = vmatpush.msra.mxu0 %v2376
    %2401 = vmatpush.msra.mxu0 %v2372
    %2402 = vmatpush.msra.mxu0 %v2368
    %2403 = vmatpush.msra.mxu0 %v2364
    %2404 = vmatpush.msra.mxu0 %v2360
    %2405 = vmatpush.msra.mxu0 %v2356
    %2406 = vmatpush.msra.mxu0 %v2352
    %2407 = vmatpush.msra.mxu0 %v2348
    %2408 = vmatpush.msra.mxu0 %v2344
    %2409 = vmatpush.msra.mxu0 %v2340
    %2410 = vmatpush.msra.mxu0 %v2336
    %2411 = vmatpush.msra.mxu0 %v2332
    %2412 = vmatmul.f32.gmra.mxu0 %v2325
    %v2413 = vpop.f32.mrf.mxu0
    %v2414 = vadd.f32 0.0, %v2413
    %2415 = vdwg.mxu0
    %2416 = vmatpush.msra.mxu0 %v2393
    %2417 = vmatpush.msra.mxu0 %v2389
    %2418 = vmatpush.msra.mxu0 %v2385
    %2419 = vmatpush.msra.mxu0 %v2381
    %2420 = vmatpush.msra.mxu0 %v2377
    %2421 = vmatpush.msra.mxu0 %v2373
    %2422 = vmatpush.msra.mxu0 %v2369
    %2423 = vmatpush.msra.mxu0 %v2365
    %2424 = vmatpush.msra.mxu0 %v2361
    %2425 = vmatpush.msra.mxu0 %v2357
    %2426 = vmatpush.msra.mxu0 %v2353
    %2427 = vmatpush.msra.mxu0 %v2349
    %2428 = vmatpush.msra.mxu0 %v2345
    %2429 = vmatpush.msra.mxu0 %v2341
    %2430 = vmatpush.msra.mxu0 %v2337
    %2431 = vmatpush.msra.mxu0 %v2333
    %2432 = vmatmul.f32.gmra.mxu0 %v2325
    %v2433 = vpop.f32.mrf.mxu0
    %v2434 = vadd.f32 0.0, %v2433
    %2435 = vdwg.mxu0
    %2436 = vmatpush.msra.mxu0 %v2394
    %2437 = vmatpush.msra.mxu0 %v2390
    %2438 = vmatpush.msra.mxu0 %v2386
    %2439 = vmatpush.msra.mxu0 %v2382
    %2440 = vmatpush.msra.mxu0 %v2378
    %2441 = vmatpush.msra.mxu0 %v2374
    %2442 = vmatpush.msra.mxu0 %v2370
    %2443 = vmatpush.msra.mxu0 %v2366
    %2444 = vmatpush.msra.mxu0 %v2362
    %2445 = vmatpush.msra.mxu0 %v2358
    %2446 = vmatpush.msra.mxu0 %v2354
    %2447 = vmatpush.msra.mxu0 %v2350
    %2448 = vmatpush.msra.mxu0 %v2346
    %2449 = vmatpush.msra.mxu0 %v2342
    %2450 = vmatpush.msra.mxu0 %v2338
    %2451 = vmatpush.msra.mxu0 %v2334
    %2452 = vmatmul.f32.gmra.mxu0 %v2325
    %v2453 = vpop.f32.mrf.mxu0
    %v2454 = vadd.f32 0.0, %v2453
    %2455 = vdwg.mxu0
    %2456 = vmatpush.msra.mxu0 %v2395
    %2457 = vmatpush.msra.mxu0 %v2391
    %2458 = vmatpush.msra.mxu0 %v2387
    %2459 = vmatpush.msra.mxu0 %v2383
    %2460 = vmatpush.msra.mxu0 %v2379
    %2461 = vmatpush.msra.mxu0 %v2375
    %2462 = vmatpush.msra.mxu0 %v2371
    %2463 = vmatpush.msra.mxu0 %v2367
    %2464 = vmatpush.msra.mxu0 %v2363
    %2465 = vmatpush.msra.mxu0 %v2359
    %2466 = vmatpush.msra.mxu0 %v2355
    %2467 = vmatpush.msra.mxu0 %v2351
    %2468 = vmatpush.msra.mxu0 %v2347
    %2469 = vmatpush.msra.mxu0 %v2343
    %2470 = vmatpush.msra.mxu0 %v2339
    %2471 = vmatpush.msra.mxu0 %v2335
    %2472 = vmatmul.f32.gmra.mxu0 %v2325
    %v2473 = vpop.f32.mrf.mxu0
    %v2474 = vadd.f32 0.0, %v2473
    %2475 = vdwg.mxu0
    %v2476 = vadd.f32 %v2328, %v2414
    %v2477 = vadd.f32 %v2329, %v2434
    %v2478 = vadd.f32 %v2330, %v2454
    %v2479 = vadd.f32 %v2331, %v2474
    %v2480 = vxor.u32 %v2476, 2147483648
    %v2481 = vmul.f32 %v2480, 1.442695
    %v2482 = vpow.pop %v2481
    %v2483 = vadd.f32 %v2482, 1.0
    %v2484 = vrcp.pop %v2483
    %v2485 = vmul.f32 %v2483, %v2484
    %v2486 = vsub.f32 1.0, %v2485
    %v2487 = vmul.f32 %v2484, %v2486
    %v2488 = vadd.f32 %v2484, %v2487
    %vm2489 = vweird.f32 %v2483
    %vm2490 = vweird.f32 %v2484
    %vm2491 = vmor %vm2489, %vm2490
    %v2492 = vsel %vm2491, %v2484, %v2488
    %v2493 = vand.u32 2147483647, %v2483
    %vm2494 = vcmp.eq.f32.partialorder %v2493, 8.507059e+37
    %v2495 = vand.u32 %v2483, 2147483648
    %v2496 = vor.u32 1.1754944e-38, %v2495
    %v2497 = vsel %vm2494, %v2496, %v2492
    %v2498 = vmul.f32 1.0, %v2497
    %v2499 = vxor.u32 %v2477, 2147483648
    %v2500 = vmul.f32 %v2499, 1.442695
    %v2501 = vpow.pop %v2500
    %v2502 = vadd.f32 %v2501, 1.0
    %v2503 = vrcp.pop %v2502
    %v2504 = vmul.f32 %v2502, %v2503
    %v2505 = vsub.f32 1.0, %v2504
    %v2506 = vmul.f32 %v2503, %v2505
    %v2507 = vadd.f32 %v2503, %v2506
    %vm2508 = vweird.f32 %v2502
    %vm2509 = vweird.f32 %v2503
    %vm2510 = vmor %vm2508, %vm2509
    %v2511 = vsel %vm2510, %v2503, %v2507
    %v2512 = vand.u32 2147483647, %v2502
    %vm2513 = vcmp.eq.f32.partialorder %v2512, 8.507059e+37
    %v2514 = vand.u32 %v2502, 2147483648
    %v2515 = vor.u32 1.1754944e-38, %v2514
    %v2516 = vsel %vm2513, %v2515, %v2511
    %v2517 = vmul.f32 1.0, %v2516
    %v2518 = vtanh.pop %v2478
    %v2519 = vxor.u32 %v2479, 2147483648
    %v2520 = vmul.f32 %v2519, 1.442695
    %v2521 = vpow.pop %v2520
    %v2522 = vadd.f32 %v2521, 1.0
    %v2523 = vrcp.pop %v2522
    %v2524 = vmul.f32 %v2522, %v2523
    %v2525 = vsub.f32 1.0, %v2524
    %v2526 = vmul.f32 %v2523, %v2525
    %v2527 = vadd.f32 %v2523, %v2526
    %vm2528 = vweird.f32 %v2522
    %vm2529 = vweird.f32 %v2523
    %vm2530 = vmor %vm2528, %vm2529
    %v2531 = vsel %vm2530, %v2523, %v2527
    %v2532 = vand.u32 2147483647, %v2522
    %vm2533 = vcmp.eq.f32.partialorder %v2532, 8.507059e+37
    %v2534 = vand.u32 %v2522, 2147483648
    %v2535 = vor.u32 1.1754944e-38, %v2534
    %v2536 = vsel %vm2533, %v2535, %v2531
    %v2537 = vmul.f32 1.0, %v2536
    %v2538 = vmul.f32 %v2517, %v2327
    %v2539 = vmul.f32 %v2498, %v2518
    %v2540 = vadd.f32 %v2538, %v2539
    %v2541 = vtanh.pop %v2540
    %v2542 = vmul.f32 %v2537, %v2541
    %2543 = vst [vmem:[#allocation3] sm:$0x3] %v2542
    %v2544 = vld [vmem:[#allocation2] sm:$0xc]
    %v2545 = vld [vmem:[#allocation2 + $0x8] sm:$0xc]
    %v2546 = vld [vmem:[#allocation2 + $0x10] sm:$0xc]
    %v2547 = vld [vmem:[#allocation2 + $0x18] sm:$0xc]
    %v2548 = vld [vmem:[#allocation15] sm:$0xff]
    %v2549 = vld [vmem:[#allocation15 + $0x8] sm:$0xff]
    %v2550 = vld [vmem:[#allocation15 + $0x10] sm:$0xff]
    %v2551 = vld [vmem:[#allocation15 + $0x18] sm:$0xff]
    %v2552 = vld [vmem:[#allocation15 + $0x20] sm:$0xff]
    %v2553 = vld [vmem:[#allocation15 + $0x28] sm:$0xff]
    %v2554 = vld [vmem:[#allocation15 + $0x30] sm:$0xff]
    %v2555 = vld [vmem:[#allocation15 + $0x38] sm:$0xff]
    %v2556 = vld [vmem:[#allocation15 + $0x40] sm:$0xff]
    %v2557 = vld [vmem:[#allocation15 + $0x48] sm:$0xff]
    %v2558 = vld [vmem:[#allocation15 + $0x50] sm:$0xff]
    %v2559 = vld [vmem:[#allocation15 + $0x58] sm:$0xff]
    %v2560 = vld [vmem:[#allocation15 + $0x60] sm:$0xff]
    %v2561 = vld [vmem:[#allocation15 + $0x68] sm:$0xff]
    %v2562 = vld [vmem:[#allocation15 + $0x70] sm:$0xff]
    %v2563 = vld [vmem:[#allocation15 + $0x78] sm:$0xff]
    %v2564 = vld [vmem:[#allocation15 + $0x80] sm:$0xff]
    %v2565 = vld [vmem:[#allocation15 + $0x88] sm:$0xff]
    %v2566 = vld [vmem:[#allocation15 + $0x90] sm:$0xff]
    %v2567 = vld [vmem:[#allocation15 + $0x98] sm:$0xff]
    %v2568 = vld [vmem:[#allocation15 + $0xa0] sm:$0xff]
    %v2569 = vld [vmem:[#allocation15 + $0xa8] sm:$0xff]
    %v2570 = vld [vmem:[#allocation15 + $0xb0] sm:$0xff]
    %v2571 = vld [vmem:[#allocation15 + $0xb8] sm:$0xff]
    %v2572 = vld [vmem:[#allocation15 + $0xc0] sm:$0xff]
    %v2573 = vld [vmem:[#allocation15 + $0xc8] sm:$0xff]
    %v2574 = vld [vmem:[#allocation15 + $0xd0] sm:$0xff]
    %v2575 = vld [vmem:[#allocation15 + $0xd8] sm:$0xff]
    %v2576 = vld [vmem:[#allocation15 + $0xe0] sm:$0xff]
    %v2577 = vld [vmem:[#allocation15 + $0xe8] sm:$0xff]
    %v2578 = vld [vmem:[#allocation15 + $0xf0] sm:$0xff]
    %v2579 = vld [vmem:[#allocation15 + $0xf8] sm:$0xff]
    %v2580 = vld [vmem:[#allocation15 + $0x100] sm:$0xff]
    %v2581 = vld [vmem:[#allocation15 + $0x108] sm:$0xff]
    %v2582 = vld [vmem:[#allocation15 + $0x110] sm:$0xff]
    %v2583 = vld [vmem:[#allocation15 + $0x118] sm:$0xff]
    %v2584 = vld [vmem:[#allocation15 + $0x120] sm:$0xff]
    %v2585 = vld [vmem:[#allocation15 + $0x128] sm:$0xff]
    %v2586 = vld [vmem:[#allocation15 + $0x130] sm:$0xff]
    %v2587 = vld [vmem:[#allocation15 + $0x138] sm:$0xff]
    %v2588 = vld [vmem:[#allocation15 + $0x140] sm:$0xff]
    %v2589 = vld [vmem:[#allocation15 + $0x148] sm:$0xff]
    %v2590 = vld [vmem:[#allocation15 + $0x150] sm:$0xff]
    %v2591 = vld [vmem:[#allocation15 + $0x158] sm:$0xff]
    %v2592 = vld [vmem:[#allocation15 + $0x160] sm:$0xff]
    %v2593 = vld [vmem:[#allocation15 + $0x168] sm:$0xff]
    %v2594 = vld [vmem:[#allocation15 + $0x170] sm:$0xff]
    %v2595 = vld [vmem:[#allocation15 + $0x178] sm:$0xff]
    %v2596 = vld [vmem:[#allocation15 + $0x180] sm:$0xff]
    %v2597 = vld [vmem:[#allocation15 + $0x188] sm:$0xff]
    %v2598 = vld [vmem:[#allocation15 + $0x190] sm:$0xff]
    %v2599 = vld [vmem:[#allocation15 + $0x198] sm:$0xff]
    %v2600 = vld [vmem:[#allocation15 + $0x1a0] sm:$0xff]
    %v2601 = vld [vmem:[#allocation15 + $0x1a8] sm:$0xff]
    %v2602 = vld [vmem:[#allocation15 + $0x1b0] sm:$0xff]
    %v2603 = vld [vmem:[#allocation15 + $0x1b8] sm:$0xff]
    %v2604 = vld [vmem:[#allocation15 + $0x1c0] sm:$0xff]
    %v2605 = vld [vmem:[#allocation15 + $0x1c8] sm:$0xff]
    %v2606 = vld [vmem:[#allocation15 + $0x1d0] sm:$0xff]
    %v2607 = vld [vmem:[#allocation15 + $0x1d8] sm:$0xff]
    %v2608 = vld [vmem:[#allocation15 + $0x1e0] sm:$0xff]
    %v2609 = vld [vmem:[#allocation15 + $0x1e8] sm:$0xff]
    %v2610 = vld [vmem:[#allocation15 + $0x1f0] sm:$0xff]
    %v2611 = vld [vmem:[#allocation15 + $0x1f8] sm:$0xff]
    %2612 = vmatpush.msra.mxu0 %v2608
    %2613 = vmatpush.msra.mxu0 %v2604
    %2614 = vmatpush.msra.mxu0 %v2600
    %2615 = vmatpush.msra.mxu0 %v2596
    %2616 = vmatpush.msra.mxu0 %v2592
    %2617 = vmatpush.msra.mxu0 %v2588
    %2618 = vmatpush.msra.mxu0 %v2584
    %2619 = vmatpush.msra.mxu0 %v2580
    %2620 = vmatpush.msra.mxu0 %v2576
    %2621 = vmatpush.msra.mxu0 %v2572
    %2622 = vmatpush.msra.mxu0 %v2568
    %2623 = vmatpush.msra.mxu0 %v2564
    %2624 = vmatpush.msra.mxu0 %v2560
    %2625 = vmatpush.msra.mxu0 %v2556
    %2626 = vmatpush.msra.mxu0 %v2552
    %2627 = vmatpush.msra.mxu0 %v2548
    %2628 = vmatmul.f32.gmra.mxu0 %v2542
    %v2629 = vpop.f32.mrf.mxu0
    %v2630 = vadd.f32 0.0, %v2629
    %2631 = vdwg.mxu0
    %2632 = vmatpush.msra.mxu0 %v2609
    %2633 = vmatpush.msra.mxu0 %v2605
    %2634 = vmatpush.msra.mxu0 %v2601
    %2635 = vmatpush.msra.mxu0 %v2597
    %2636 = vmatpush.msra.mxu0 %v2593
    %2637 = vmatpush.msra.mxu0 %v2589
    %2638 = vmatpush.msra.mxu0 %v2585
    %2639 = vmatpush.msra.mxu0 %v2581
    %2640 = vmatpush.msra.mxu0 %v2577
    %2641 = vmatpush.msra.mxu0 %v2573
    %2642 = vmatpush.msra.mxu0 %v2569
    %2643 = vmatpush.msra.mxu0 %v2565
    %2644 = vmatpush.msra.mxu0 %v2561
    %2645 = vmatpush.msra.mxu0 %v2557
    %2646 = vmatpush.msra.mxu0 %v2553
    %2647 = vmatpush.msra.mxu0 %v2549
    %2648 = vmatmul.f32.gmra.mxu0 %v2542
    %v2649 = vpop.f32.mrf.mxu0
    %v2650 = vadd.f32 0.0, %v2649
    %2651 = vdwg.mxu0
    %2652 = vmatpush.msra.mxu0 %v2610
    %2653 = vmatpush.msra.mxu0 %v2606
    %2654 = vmatpush.msra.mxu0 %v2602
    %2655 = vmatpush.msra.mxu0 %v2598
    %2656 = vmatpush.msra.mxu0 %v2594
    %2657 = vmatpush.msra.mxu0 %v2590
    %2658 = vmatpush.msra.mxu0 %v2586
    %2659 = vmatpush.msra.mxu0 %v2582
    %2660 = vmatpush.msra.mxu0 %v2578
    %2661 = vmatpush.msra.mxu0 %v2574
    %2662 = vmatpush.msra.mxu0 %v2570
    %2663 = vmatpush.msra.mxu0 %v2566
    %2664 = vmatpush.msra.mxu0 %v2562
    %2665 = vmatpush.msra.mxu0 %v2558
    %2666 = vmatpush.msra.mxu0 %v2554
    %2667 = vmatpush.msra.mxu0 %v2550
    %2668 = vmatmul.f32.gmra.mxu0 %v2542
    %v2669 = vpop.f32.mrf.mxu0
    %v2670 = vadd.f32 0.0, %v2669
    %2671 = vdwg.mxu0
    %2672 = vmatpush.msra.mxu0 %v2611
    %2673 = vmatpush.msra.mxu0 %v2607
    %2674 = vmatpush.msra.mxu0 %v2603
    %2675 = vmatpush.msra.mxu0 %v2599
    %2676 = vmatpush.msra.mxu0 %v2595
    %2677 = vmatpush.msra.mxu0 %v2591
    %2678 = vmatpush.msra.mxu0 %v2587
    %2679 = vmatpush.msra.mxu0 %v2583
    %2680 = vmatpush.msra.mxu0 %v2579
    %2681 = vmatpush.msra.mxu0 %v2575
    %2682 = vmatpush.msra.mxu0 %v2571
    %2683 = vmatpush.msra.mxu0 %v2567
    %2684 = vmatpush.msra.mxu0 %v2563
    %2685 = vmatpush.msra.mxu0 %v2559
    %2686 = vmatpush.msra.mxu0 %v2555
    %2687 = vmatpush.msra.mxu0 %v2551
    %2688 = vmatmul.f32.gmra.mxu0 %v2542
    %v2689 = vpop.f32.mrf.mxu0
    %v2690 = vadd.f32 0.0, %v2689
    %2691 = vdwg.mxu0
    %v2696 = vrot.slane %v2630, 6
    %v2697 = vrot.slane %v2650, 6
    %v2698 = vrot.slane %v2670, 6
    %v2699 = vrot.slane %v2690, 6
    %v2704 = vadd.f32 %v2544, %v2696
    %v2705 = vadd.f32 %v2545, %v2697
    %v2706 = vadd.f32 %v2546, %v2698
    %v2707 = vadd.f32 %v2547, %v2699
    %v2708 = vxor.u32 %v2704, 2147483648
    %v2709 = vmul.f32 %v2708, 1.442695
    %v2710 = vpow.pop %v2709
    %v2711 = vadd.f32 %v2710, 1.0
    %v2712 = vrcp.pop %v2711
    %v2713 = vmul.f32 %v2711, %v2712
    %v2714 = vsub.f32 1.0, %v2713
    %v2715 = vmul.f32 %v2712, %v2714
    %v2716 = vadd.f32 %v2712, %v2715
    %vm2717 = vweird.f32 %v2711
    %vm2718 = vweird.f32 %v2712
    %vm2719 = vmor %vm2717, %vm2718
    %v2720 = vsel %vm2719, %v2712, %v2716
    %v2721 = vand.u32 2147483647, %v2711
    %vm2722 = vcmp.eq.f32.partialorder %v2721, 8.507059e+37
    %v2723 = vand.u32 %v2711, 2147483648
    %v2724 = vor.u32 1.1754944e-38, %v2723
    %v2725 = vsel %vm2722, %v2724, %v2720
    %v2726 = vmul.f32 1.0, %v2725
    %v2727 = vxor.u32 %v2705, 2147483648
    %v2728 = vmul.f32 %v2727, 1.442695
    %v2729 = vpow.pop %v2728
    %v2730 = vadd.f32 %v2729, 1.0
    %v2731 = vrcp.pop %v2730
    %v2732 = vmul.f32 %v2730, %v2731
    %v2733 = vsub.f32 1.0, %v2732
    %v2734 = vmul.f32 %v2731, %v2733
    %v2735 = vadd.f32 %v2731, %v2734
    %vm2736 = vweird.f32 %v2730
    %vm2737 = vweird.f32 %v2731
    %vm2738 = vmor %vm2736, %vm2737
    %v2739 = vsel %vm2738, %v2731, %v2735
    %v2740 = vand.u32 2147483647, %v2730
    %vm2741 = vcmp.eq.f32.partialorder %v2740, 8.507059e+37
    %v2742 = vand.u32 %v2730, 2147483648
    %v2743 = vor.u32 1.1754944e-38, %v2742
    %v2744 = vsel %vm2741, %v2743, %v2739
    %v2745 = vmul.f32 1.0, %v2744
    %v2746 = vtanh.pop %v2706
    %v2747 = vxor.u32 %v2707, 2147483648
    %v2748 = vmul.f32 %v2747, 1.442695
    %v2749 = vpow.pop %v2748
    %v2750 = vadd.f32 %v2749, 1.0
    %v2751 = vrcp.pop %v2750
    %v2752 = vmul.f32 %v2750, %v2751
    %v2753 = vsub.f32 1.0, %v2752
    %v2754 = vmul.f32 %v2751, %v2753
    %v2755 = vadd.f32 %v2751, %v2754
    %vm2756 = vweird.f32 %v2750
    %vm2757 = vweird.f32 %v2751
    %vm2758 = vmor %vm2756, %vm2757
    %v2759 = vsel %vm2758, %v2751, %v2755
    %v2760 = vand.u32 2147483647, %v2750
    %vm2761 = vcmp.eq.f32.partialorder %v2760, 8.507059e+37
    %v2762 = vand.u32 %v2750, 2147483648
    %v2763 = vor.u32 1.1754944e-38, %v2762
    %v2764 = vsel %vm2761, %v2763, %v2759
    %v2765 = vmul.f32 1.0, %v2764
    %v2767 = vrot.slane %v2540, 6
    %v2769 = vmul.f32 %v2745, %v2767
    %v2770 = vmul.f32 %v2726, %v2746
    %v2771 = vadd.f32 %v2769, %v2770
    %v2772 = vtanh.pop %v2771
    %v2773 = vmul.f32 %v2765, %v2772
    %2774 = vst [vmem:[#allocation3] sm:$0xc] %v2773
    %v2775 = vld [vmem:[#allocation2] sm:$0x30]
    %v2776 = vld [vmem:[#allocation2 + $0x8] sm:$0x30]
    %v2777 = vld [vmem:[#allocation2 + $0x10] sm:$0x30]
    %v2778 = vld [vmem:[#allocation2 + $0x18] sm:$0x30]
    %v2779 = vld [vmem:[#allocation15] sm:$0xff]
    %v2780 = vld [vmem:[#allocation15 + $0x8] sm:$0xff]
    %v2781 = vld [vmem:[#allocation15 + $0x10] sm:$0xff]
    %v2782 = vld [vmem:[#allocation15 + $0x18] sm:$0xff]
    %v2783 = vld [vmem:[#allocation15 + $0x20] sm:$0xff]
    %v2784 = vld [vmem:[#allocation15 + $0x28] sm:$0xff]
    %v2785 = vld [vmem:[#allocation15 + $0x30] sm:$0xff]
    %v2786 = vld [vmem:[#allocation15 + $0x38] sm:$0xff]
    %v2787 = vld [vmem:[#allocation15 + $0x40] sm:$0xff]
    %v2788 = vld [vmem:[#allocation15 + $0x48] sm:$0xff]
    %v2789 = vld [vmem:[#allocation15 + $0x50] sm:$0xff]
    %v2790 = vld [vmem:[#allocation15 + $0x58] sm:$0xff]
    %v2791 = vld [vmem:[#allocation15 + $0x60] sm:$0xff]
    %v2792 = vld [vmem:[#allocation15 + $0x68] sm:$0xff]
    %v2793 = vld [vmem:[#allocation15 + $0x70] sm:$0xff]
    %v2794 = vld [vmem:[#allocation15 + $0x78] sm:$0xff]
    %v2795 = vld [vmem:[#allocation15 + $0x80] sm:$0xff]
    %v2796 = vld [vmem:[#allocation15 + $0x88] sm:$0xff]
    %v2797 = vld [vmem:[#allocation15 + $0x90] sm:$0xff]
    %v2798 = vld [vmem:[#allocation15 + $0x98] sm:$0xff]
    %v2799 = vld [vmem:[#allocation15 + $0xa0] sm:$0xff]
    %v2800 = vld [vmem:[#allocation15 + $0xa8] sm:$0xff]
    %v2801 = vld [vmem:[#allocation15 + $0xb0] sm:$0xff]
    %v2802 = vld [vmem:[#allocation15 + $0xb8] sm:$0xff]
    %v2803 = vld [vmem:[#allocation15 + $0xc0] sm:$0xff]
    %v2804 = vld [vmem:[#allocation15 + $0xc8] sm:$0xff]
    %v2805 = vld [vmem:[#allocation15 + $0xd0] sm:$0xff]
    %v2806 = vld [vmem:[#allocation15 + $0xd8] sm:$0xff]
    %v2807 = vld [vmem:[#allocation15 + $0xe0] sm:$0xff]
    %v2808 = vld [vmem:[#allocation15 + $0xe8] sm:$0xff]
    %v2809 = vld [vmem:[#allocation15 + $0xf0] sm:$0xff]
    %v2810 = vld [vmem:[#allocation15 + $0xf8] sm:$0xff]
    %v2811 = vld [vmem:[#allocation15 + $0x100] sm:$0xff]
    %v2812 = vld [vmem:[#allocation15 + $0x108] sm:$0xff]
    %v2813 = vld [vmem:[#allocation15 + $0x110] sm:$0xff]
    %v2814 = vld [vmem:[#allocation15 + $0x118] sm:$0xff]
    %v2815 = vld [vmem:[#allocation15 + $0x120] sm:$0xff]
    %v2816 = vld [vmem:[#allocation15 + $0x128] sm:$0xff]
    %v2817 = vld [vmem:[#allocation15 + $0x130] sm:$0xff]
    %v2818 = vld [vmem:[#allocation15 + $0x138] sm:$0xff]
    %v2819 = vld [vmem:[#allocation15 + $0x140] sm:$0xff]
    %v2820 = vld [vmem:[#allocation15 + $0x148] sm:$0xff]
    %v2821 = vld [vmem:[#allocation15 + $0x150] sm:$0xff]
    %v2822 = vld [vmem:[#allocation15 + $0x158] sm:$0xff]
    %v2823 = vld [vmem:[#allocation15 + $0x160] sm:$0xff]
    %v2824 = vld [vmem:[#allocation15 + $0x168] sm:$0xff]
    %v2825 = vld [vmem:[#allocation15 + $0x170] sm:$0xff]
    %v2826 = vld [vmem:[#allocation15 + $0x178] sm:$0xff]
    %v2827 = vld [vmem:[#allocation15 + $0x180] sm:$0xff]
    %v2828 = vld [vmem:[#allocation15 + $0x188] sm:$0xff]
    %v2829 = vld [vmem:[#allocation15 + $0x190] sm:$0xff]
    %v2830 = vld [vmem:[#allocation15 + $0x198] sm:$0xff]
    %v2831 = vld [vmem:[#allocation15 + $0x1a0] sm:$0xff]
    %v2832 = vld [vmem:[#allocation15 + $0x1a8] sm:$0xff]
    %v2833 = vld [vmem:[#allocation15 + $0x1b0] sm:$0xff]
    %v2834 = vld [vmem:[#allocation15 + $0x1b8] sm:$0xff]
    %v2835 = vld [vmem:[#allocation15 + $0x1c0] sm:$0xff]
    %v2836 = vld [vmem:[#allocation15 + $0x1c8] sm:$0xff]
    %v2837 = vld [vmem:[#allocation15 + $0x1d0] sm:$0xff]
    %v2838 = vld [vmem:[#allocation15 + $0x1d8] sm:$0xff]
    %v2839 = vld [vmem:[#allocation15 + $0x1e0] sm:$0xff]
    %v2840 = vld [vmem:[#allocation15 + $0x1e8] sm:$0xff]
    %v2841 = vld [vmem:[#allocation15 + $0x1f0] sm:$0xff]
    %v2842 = vld [vmem:[#allocation15 + $0x1f8] sm:$0xff]
    %v2844 = vrot.slane %v2773, 2
    %2846 = vmatpush.msra.mxu0 %v2839
    %2847 = vmatpush.msra.mxu0 %v2835
    %2848 = vmatpush.msra.mxu0 %v2831
    %2849 = vmatpush.msra.mxu0 %v2827
    %2850 = vmatpush.msra.mxu0 %v2823
    %2851 = vmatpush.msra.mxu0 %v2819
    %2852 = vmatpush.msra.mxu0 %v2815
    %2853 = vmatpush.msra.mxu0 %v2811
    %2854 = vmatpush.msra.mxu0 %v2807
    %2855 = vmatpush.msra.mxu0 %v2803
    %2856 = vmatpush.msra.mxu0 %v2799
    %2857 = vmatpush.msra.mxu0 %v2795
    %2858 = vmatpush.msra.mxu0 %v2791
    %2859 = vmatpush.msra.mxu0 %v2787
    %2860 = vmatpush.msra.mxu0 %v2783
    %2861 = vmatpush.msra.mxu0 %v2779
    %2862 = vmatmul.f32.gmra.mxu0 %v2844
    %v2863 = vpop.f32.mrf.mxu0
    %v2864 = vadd.f32 0.0, %v2863
    %2865 = vdwg.mxu0
    %2866 = vmatpush.msra.mxu0 %v2840
    %2867 = vmatpush.msra.mxu0 %v2836
    %2868 = vmatpush.msra.mxu0 %v2832
    %2869 = vmatpush.msra.mxu0 %v2828
    %2870 = vmatpush.msra.mxu0 %v2824
    %2871 = vmatpush.msra.mxu0 %v2820
    %2872 = vmatpush.msra.mxu0 %v2816
    %2873 = vmatpush.msra.mxu0 %v2812
    %2874 = vmatpush.msra.mxu0 %v2808
    %2875 = vmatpush.msra.mxu0 %v2804
    %2876 = vmatpush.msra.mxu0 %v2800
    %2877 = vmatpush.msra.mxu0 %v2796
    %2878 = vmatpush.msra.mxu0 %v2792
    %2879 = vmatpush.msra.mxu0 %v2788
    %2880 = vmatpush.msra.mxu0 %v2784
    %2881 = vmatpush.msra.mxu0 %v2780
    %2882 = vmatmul.f32.gmra.mxu0 %v2844
    %v2883 = vpop.f32.mrf.mxu0
    %v2884 = vadd.f32 0.0, %v2883
    %2885 = vdwg.mxu0
    %2886 = vmatpush.msra.mxu0 %v2841
    %2887 = vmatpush.msra.mxu0 %v2837
    %2888 = vmatpush.msra.mxu0 %v2833
    %2889 = vmatpush.msra.mxu0 %v2829
    %2890 = vmatpush.msra.mxu0 %v2825
    %2891 = vmatpush.msra.mxu0 %v2821
    %2892 = vmatpush.msra.mxu0 %v2817
    %2893 = vmatpush.msra.mxu0 %v2813
    %2894 = vmatpush.msra.mxu0 %v2809
    %2895 = vmatpush.msra.mxu0 %v2805
    %2896 = vmatpush.msra.mxu0 %v2801
    %2897 = vmatpush.msra.mxu0 %v2797
    %2898 = vmatpush.msra.mxu0 %v2793
    %2899 = vmatpush.msra.mxu0 %v2789
    %2900 = vmatpush.msra.mxu0 %v2785
    %2901 = vmatpush.msra.mxu0 %v2781
    %2902 = vmatmul.f32.gmra.mxu0 %v2844
    %v2903 = vpop.f32.mrf.mxu0
    %v2904 = vadd.f32 0.0, %v2903
    %2905 = vdwg.mxu0
    %2906 = vmatpush.msra.mxu0 %v2842
    %2907 = vmatpush.msra.mxu0 %v2838
    %2908 = vmatpush.msra.mxu0 %v2834
    %2909 = vmatpush.msra.mxu0 %v2830
    %2910 = vmatpush.msra.mxu0 %v2826
    %2911 = vmatpush.msra.mxu0 %v2822
    %2912 = vmatpush.msra.mxu0 %v2818
    %2913 = vmatpush.msra.mxu0 %v2814
    %2914 = vmatpush.msra.mxu0 %v2810
    %2915 = vmatpush.msra.mxu0 %v2806
    %2916 = vmatpush.msra.mxu0 %v2802
    %2917 = vmatpush.msra.mxu0 %v2798
    %2918 = vmatpush.msra.mxu0 %v2794
    %2919 = vmatpush.msra.mxu0 %v2790
    %2920 = vmatpush.msra.mxu0 %v2786
    %2921 = vmatpush.msra.mxu0 %v2782
    %2922 = vmatmul.f32.gmra.mxu0 %v2844
    %v2923 = vpop.f32.mrf.mxu0
    %v2924 = vadd.f32 0.0, %v2923
    %2925 = vdwg.mxu0
    %v2930 = vrot.slane %v2864, 4
    %v2931 = vrot.slane %v2884, 4
    %v2932 = vrot.slane %v2904, 4
    %v2933 = vrot.slane %v2924, 4
    %v2938 = vadd.f32 %v2775, %v2930
    %v2939 = vadd.f32 %v2776, %v2931
    %v2940 = vadd.f32 %v2777, %v2932
    %v2941 = vadd.f32 %v2778, %v2933
    %v2942 = vxor.u32 %v2938, 2147483648
    %v2943 = vmul.f32 %v2942, 1.442695
    %v2944 = vpow.pop %v2943
    %v2945 = vadd.f32 %v2944, 1.0
    %v2946 = vrcp.pop %v2945
    %v2947 = vmul.f32 %v2945, %v2946
    %v2948 = vsub.f32 1.0, %v2947
    %v2949 = vmul.f32 %v2946, %v2948
    %v2950 = vadd.f32 %v2946, %v2949
    %vm2951 = vweird.f32 %v2945
    %vm2952 = vweird.f32 %v2946
    %vm2953 = vmor %vm2951, %vm2952
    %v2954 = vsel %vm2953, %v2946, %v2950
    %v2955 = vand.u32 2147483647, %v2945
    %vm2956 = vcmp.eq.f32.partialorder %v2955, 8.507059e+37
    %v2957 = vand.u32 %v2945, 2147483648
    %v2958 = vor.u32 1.1754944e-38, %v2957
    %v2959 = vsel %vm2956, %v2958, %v2954
    %v2960 = vmul.f32 1.0, %v2959
    %v2961 = vxor.u32 %v2939, 2147483648
    %v2962 = vmul.f32 %v2961, 1.442695
    %v2963 = vpow.pop %v2962
    %v2964 = vadd.f32 %v2963, 1.0
    %v2965 = vrcp.pop %v2964
    %v2966 = vmul.f32 %v2964, %v2965
    %v2967 = vsub.f32 1.0, %v2966
    %v2968 = vmul.f32 %v2965, %v2967
    %v2969 = vadd.f32 %v2965, %v2968
    %vm2970 = vweird.f32 %v2964
    %vm2971 = vweird.f32 %v2965
    %vm2972 = vmor %vm2970, %vm2971
    %v2973 = vsel %vm2972, %v2965, %v2969
    %v2974 = vand.u32 2147483647, %v2964
    %vm2975 = vcmp.eq.f32.partialorder %v2974, 8.507059e+37
    %v2976 = vand.u32 %v2964, 2147483648
    %v2977 = vor.u32 1.1754944e-38, %v2976
    %v2978 = vsel %vm2975, %v2977, %v2973
    %v2979 = vmul.f32 1.0, %v2978
    %v2980 = vtanh.pop %v2940
    %v2981 = vxor.u32 %v2941, 2147483648
    %v2982 = vmul.f32 %v2981, 1.442695
    %v2983 = vpow.pop %v2982
    %v2984 = vadd.f32 %v2983, 1.0
    %v2985 = vrcp.pop %v2984
    %v2986 = vmul.f32 %v2984, %v2985
    %v2987 = vsub.f32 1.0, %v2986
    %v2988 = vmul.f32 %v2985, %v2987
    %v2989 = vadd.f32 %v2985, %v2988
    %vm2990 = vweird.f32 %v2984
    %vm2991 = vweird.f32 %v2985
    %vm2992 = vmor %vm2990, %vm2991
    %v2993 = vsel %vm2992, %v2985, %v2989
    %v2994 = vand.u32 2147483647, %v2984
    %vm2995 = vcmp.eq.f32.partialorder %v2994, 8.507059e+37
    %v2996 = vand.u32 %v2984, 2147483648
    %v2997 = vor.u32 1.1754944e-38, %v2996
    %v2998 = vsel %vm2995, %v2997, %v2993
    %v2999 = vmul.f32 1.0, %v2998
    %v3001 = vrot.slane %v2771, 6
    %v3003 = vmul.f32 %v2979, %v3001
    %v3004 = vmul.f32 %v2960, %v2980
    %v3005 = vadd.f32 %v3003, %v3004
    %v3006 = vtanh.pop %v3005
    %v3007 = vmul.f32 %v2999, %v3006
    %3008 = vst [vmem:[#allocation3] sm:$0x30] %v3007
    %v3009 = vld [vmem:[#allocation2] sm:$0xc0]
    %v3010 = vld [vmem:[#allocation2 + $0x8] sm:$0xc0]
    %v3011 = vld [vmem:[#allocation2 + $0x10] sm:$0xc0]
    %v3012 = vld [vmem:[#allocation2 + $0x18] sm:$0xc0]
    %v3013 = vld [vmem:[#allocation15] sm:$0xff]
    %v3014 = vld [vmem:[#allocation15 + $0x8] sm:$0xff]
    %v3015 = vld [vmem:[#allocation15 + $0x10] sm:$0xff]
    %v3016 = vld [vmem:[#allocation15 + $0x18] sm:$0xff]
    %v3017 = vld [vmem:[#allocation15 + $0x20] sm:$0xff]
    %v3018 = vld [vmem:[#allocation15 + $0x28] sm:$0xff]
    %v3019 = vld [vmem:[#allocation15 + $0x30] sm:$0xff]
    %v3020 = vld [vmem:[#allocation15 + $0x38] sm:$0xff]
    %v3021 = vld [vmem:[#allocation15 + $0x40] sm:$0xff]
    %v3022 = vld [vmem:[#allocation15 + $0x48] sm:$0xff]
    %v3023 = vld [vmem:[#allocation15 + $0x50] sm:$0xff]
    %v3024 = vld [vmem:[#allocation15 + $0x58] sm:$0xff]
    %v3025 = vld [vmem:[#allocation15 + $0x60] sm:$0xff]
    %v3026 = vld [vmem:[#allocation15 + $0x68] sm:$0xff]
    %v3027 = vld [vmem:[#allocation15 + $0x70] sm:$0xff]
    %v3028 = vld [vmem:[#allocation15 + $0x78] sm:$0xff]
    %v3029 = vld [vmem:[#allocation15 + $0x80] sm:$0xff]
    %v3030 = vld [vmem:[#allocation15 + $0x88] sm:$0xff]
    %v3031 = vld [vmem:[#allocation15 + $0x90] sm:$0xff]
    %v3032 = vld [vmem:[#allocation15 + $0x98] sm:$0xff]
    %v3033 = vld [vmem:[#allocation15 + $0xa0] sm:$0xff]
    %v3034 = vld [vmem:[#allocation15 + $0xa8] sm:$0xff]
    %v3035 = vld [vmem:[#allocation15 + $0xb0] sm:$0xff]
    %v3036 = vld [vmem:[#allocation15 + $0xb8] sm:$0xff]
    %v3037 = vld [vmem:[#allocation15 + $0xc0] sm:$0xff]
    %v3038 = vld [vmem:[#allocation15 + $0xc8] sm:$0xff]
    %v3039 = vld [vmem:[#allocation15 + $0xd0] sm:$0xff]
    %v3040 = vld [vmem:[#allocation15 + $0xd8] sm:$0xff]
    %v3041 = vld [vmem:[#allocation15 + $0xe0] sm:$0xff]
    %v3042 = vld [vmem:[#allocation15 + $0xe8] sm:$0xff]
    %v3043 = vld [vmem:[#allocation15 + $0xf0] sm:$0xff]
    %v3044 = vld [vmem:[#allocation15 + $0xf8] sm:$0xff]
    %v3045 = vld [vmem:[#allocation15 + $0x100] sm:$0xff]
    %v3046 = vld [vmem:[#allocation15 + $0x108] sm:$0xff]
    %v3047 = vld [vmem:[#allocation15 + $0x110] sm:$0xff]
    %v3048 = vld [vmem:[#allocation15 + $0x118] sm:$0xff]
    %v3049 = vld [vmem:[#allocation15 + $0x120] sm:$0xff]
    %v3050 = vld [vmem:[#allocation15 + $0x128] sm:$0xff]
    %v3051 = vld [vmem:[#allocation15 + $0x130] sm:$0xff]
    %v3052 = vld [vmem:[#allocation15 + $0x138] sm:$0xff]
    %v3053 = vld [vmem:[#allocation15 + $0x140] sm:$0xff]
    %v3054 = vld [vmem:[#allocation15 + $0x148] sm:$0xff]
    %v3055 = vld [vmem:[#allocation15 + $0x150] sm:$0xff]
    %v3056 = vld [vmem:[#allocation15 + $0x158] sm:$0xff]
    %v3057 = vld [vmem:[#allocation15 + $0x160] sm:$0xff]
    %v3058 = vld [vmem:[#allocation15 + $0x168] sm:$0xff]
    %v3059 = vld [vmem:[#allocation15 + $0x170] sm:$0xff]
    %v3060 = vld [vmem:[#allocation15 + $0x178] sm:$0xff]
    %v3061 = vld [vmem:[#allocation15 + $0x180] sm:$0xff]
    %v3062 = vld [vmem:[#allocation15 + $0x188] sm:$0xff]
    %v3063 = vld [vmem:[#allocation15 + $0x190] sm:$0xff]
    %v3064 = vld [vmem:[#allocation15 + $0x198] sm:$0xff]
    %v3065 = vld [vmem:[#allocation15 + $0x1a0] sm:$0xff]
    %v3066 = vld [vmem:[#allocation15 + $0x1a8] sm:$0xff]
    %v3067 = vld [vmem:[#allocation15 + $0x1b0] sm:$0xff]
    %v3068 = vld [vmem:[#allocation15 + $0x1b8] sm:$0xff]
    %v3069 = vld [vmem:[#allocation15 + $0x1c0] sm:$0xff]
    %v3070 = vld [vmem:[#allocation15 + $0x1c8] sm:$0xff]
    %v3071 = vld [vmem:[#allocation15 + $0x1d0] sm:$0xff]
    %v3072 = vld [vmem:[#allocation15 + $0x1d8] sm:$0xff]
    %v3073 = vld [vmem:[#allocation15 + $0x1e0] sm:$0xff]
    %v3074 = vld [vmem:[#allocation15 + $0x1e8] sm:$0xff]
    %v3075 = vld [vmem:[#allocation15 + $0x1f0] sm:$0xff]
    %v3076 = vld [vmem:[#allocation15 + $0x1f8] sm:$0xff]
    %v3078 = vrot.slane %v3007, 4
    %3080 = vmatpush.msra.mxu0 %v3073
    %3081 = vmatpush.msra.mxu0 %v3069
    %3082 = vmatpush.msra.mxu0 %v3065
    %3083 = vmatpush.msra.mxu0 %v3061
    %3084 = vmatpush.msra.mxu0 %v3057
    %3085 = vmatpush.msra.mxu0 %v3053
    %3086 = vmatpush.msra.mxu0 %v3049
    %3087 = vmatpush.msra.mxu0 %v3045
    %3088 = vmatpush.msra.mxu0 %v3041
    %3089 = vmatpush.msra.mxu0 %v3037
    %3090 = vmatpush.msra.mxu0 %v3033
    %3091 = vmatpush.msra.mxu0 %v3029
    %3092 = vmatpush.msra.mxu0 %v3025
    %3093 = vmatpush.msra.mxu0 %v3021
    %3094 = vmatpush.msra.mxu0 %v3017
    %3095 = vmatpush.msra.mxu0 %v3013
    %3096 = vmatmul.f32.gmra.mxu0 %v3078
    %v3097 = vpop.f32.mrf.mxu0
    %v3098 = vadd.f32 0.0, %v3097
    %3099 = vdwg.mxu0
    %3100 = vmatpush.msra.mxu0 %v3074
    %3101 = vmatpush.msra.mxu0 %v3070
    %3102 = vmatpush.msra.mxu0 %v3066
    %3103 = vmatpush.msra.mxu0 %v3062
    %3104 = vmatpush.msra.mxu0 %v3058
    %3105 = vmatpush.msra.mxu0 %v3054
    %3106 = vmatpush.msra.mxu0 %v3050
    %3107 = vmatpush.msra.mxu0 %v3046
    %3108 = vmatpush.msra.mxu0 %v3042
    %3109 = vmatpush.msra.mxu0 %v3038
    %3110 = vmatpush.msra.mxu0 %v3034
    %3111 = vmatpush.msra.mxu0 %v3030
    %3112 = vmatpush.msra.mxu0 %v3026
    %3113 = vmatpush.msra.mxu0 %v3022
    %3114 = vmatpush.msra.mxu0 %v3018
    %3115 = vmatpush.msra.mxu0 %v3014
    %3116 = vmatmul.f32.gmra.mxu0 %v3078
    %v3117 = vpop.f32.mrf.mxu0
    %v3118 = vadd.f32 0.0, %v3117
    %3119 = vdwg.mxu0
    %3120 = vmatpush.msra.mxu0 %v3075
    %3121 = vmatpush.msra.mxu0 %v3071
    %3122 = vmatpush.msra.mxu0 %v3067
    %3123 = vmatpush.msra.mxu0 %v3063
    %3124 = vmatpush.msra.mxu0 %v3059
    %3125 = vmatpush.msra.mxu0 %v3055
    %3126 = vmatpush.msra.mxu0 %v3051
    %3127 = vmatpush.msra.mxu0 %v3047
    %3128 = vmatpush.msra.mxu0 %v3043
    %3129 = vmatpush.msra.mxu0 %v3039
    %3130 = vmatpush.msra.mxu0 %v3035
    %3131 = vmatpush.msra.mxu0 %v3031
    %3132 = vmatpush.msra.mxu0 %v3027
    %3133 = vmatpush.msra.mxu0 %v3023
    %3134 = vmatpush.msra.mxu0 %v3019
    %3135 = vmatpush.msra.mxu0 %v3015
    %3136 = vmatmul.f32.gmra.mxu0 %v3078
    %v3137 = vpop.f32.mrf.mxu0
    %v3138 = vadd.f32 0.0, %v3137
    %3139 = vdwg.mxu0
    %3140 = vmatpush.msra.mxu0 %v3076
    %3141 = vmatpush.msra.mxu0 %v3072
    %3142 = vmatpush.msra.mxu0 %v3068
    %3143 = vmatpush.msra.mxu0 %v3064
    %3144 = vmatpush.msra.mxu0 %v3060
    %3145 = vmatpush.msra.mxu0 %v3056
    %3146 = vmatpush.msra.mxu0 %v3052
    %3147 = vmatpush.msra.mxu0 %v3048
    %3148 = vmatpush.msra.mxu0 %v3044
    %3149 = vmatpush.msra.mxu0 %v3040
    %3150 = vmatpush.msra.mxu0 %v3036
    %3151 = vmatpush.msra.mxu0 %v3032
    %3152 = vmatpush.msra.mxu0 %v3028
    %3153 = vmatpush.msra.mxu0 %v3024
    %3154 = vmatpush.msra.mxu0 %v3020
    %3155 = vmatpush.msra.mxu0 %v3016
    %3156 = vmatmul.f32.gmra.mxu0 %v3078
    %v3157 = vpop.f32.mrf.mxu0
    %v3158 = vadd.f32 0.0, %v3157
    %3159 = vdwg.mxu0
    %v3164 = vrot.slane %v3098, 2
    %v3165 = vrot.slane %v3118, 2
    %v3166 = vrot.slane %v3138, 2
    %v3167 = vrot.slane %v3158, 2
    %v3172 = vadd.f32 %v3009, %v3164
    %v3173 = vadd.f32 %v3010, %v3165
    %v3174 = vadd.f32 %v3011, %v3166
    %v3175 = vadd.f32 %v3012, %v3167
    %v3176 = vxor.u32 %v3172, 2147483648
    %v3177 = vmul.f32 %v3176, 1.442695
    %v3178 = vpow.pop %v3177
    %v3179 = vadd.f32 %v3178, 1.0
    %v3180 = vrcp.pop %v3179
    %v3181 = vmul.f32 %v3179, %v3180
    %v3182 = vsub.f32 1.0, %v3181
    %v3183 = vmul.f32 %v3180, %v3182
    %v3184 = vadd.f32 %v3180, %v3183
    %vm3185 = vweird.f32 %v3179
    %vm3186 = vweird.f32 %v3180
    %vm3187 = vmor %vm3185, %vm3186
    %v3188 = vsel %vm3187, %v3180, %v3184
    %v3189 = vand.u32 2147483647, %v3179
    %vm3190 = vcmp.eq.f32.partialorder %v3189, 8.507059e+37
    %v3191 = vand.u32 %v3179, 2147483648
    %v3192 = vor.u32 1.1754944e-38, %v3191
    %v3193 = vsel %vm3190, %v3192, %v3188
    %v3194 = vmul.f32 1.0, %v3193
    %v3195 = vxor.u32 %v3173, 2147483648
    %v3196 = vmul.f32 %v3195, 1.442695
    %v3197 = vpow.pop %v3196
    %v3198 = vadd.f32 %v3197, 1.0
    %v3199 = vrcp.pop %v3198
    %v3200 = vmul.f32 %v3198, %v3199
    %v3201 = vsub.f32 1.0, %v3200
    %v3202 = vmul.f32 %v3199, %v3201
    %v3203 = vadd.f32 %v3199, %v3202
    %vm3204 = vweird.f32 %v3198
    %vm3205 = vweird.f32 %v3199
    %vm3206 = vmor %vm3204, %vm3205
    %v3207 = vsel %vm3206, %v3199, %v3203
    %v3208 = vand.u32 2147483647, %v3198
    %vm3209 = vcmp.eq.f32.partialorder %v3208, 8.507059e+37
    %v3210 = vand.u32 %v3198, 2147483648
    %v3211 = vor.u32 1.1754944e-38, %v3210
    %v3212 = vsel %vm3209, %v3211, %v3207
    %v3213 = vmul.f32 1.0, %v3212
    %v3214 = vtanh.pop %v3174
    %v3215 = vxor.u32 %v3175, 2147483648
    %v3216 = vmul.f32 %v3215, 1.442695
    %v3217 = vpow.pop %v3216
    %v3218 = vadd.f32 %v3217, 1.0
    %v3219 = vrcp.pop %v3218
    %v3220 = vmul.f32 %v3218, %v3219
    %v3221 = vsub.f32 1.0, %v3220
    %v3222 = vmul.f32 %v3219, %v3221
    %v3223 = vadd.f32 %v3219, %v3222
    %vm3224 = vweird.f32 %v3218
    %vm3225 = vweird.f32 %v3219
    %vm3226 = vmor %vm3224, %vm3225
    %v3227 = vsel %vm3226, %v3219, %v3223
    %v3228 = vand.u32 2147483647, %v3218
    %vm3229 = vcmp.eq.f32.partialorder %v3228, 8.507059e+37
    %v3230 = vand.u32 %v3218, 2147483648
    %v3231 = vor.u32 1.1754944e-38, %v3230
    %v3232 = vsel %vm3229, %v3231, %v3227
    %v3233 = vmul.f32 1.0, %v3232
    %v3235 = vrot.slane %v3005, 6
    %v3237 = vmul.f32 %v3213, %v3235
    %v3238 = vmul.f32 %v3194, %v3214
    %v3239 = vadd.f32 %v3237, %v3238
    %v3240 = vtanh.pop %v3239
    %v3241 = vmul.f32 %v3233, %v3240
    %3242 = vst [vmem:[#allocation3] sm:$0xc0] %v3241
    %v3243 = vld [vmem:[#allocation2 + $0x20] sm:$0x3]
    %v3244 = vld [vmem:[#allocation2 + $0x28] sm:$0x3]
    %v3245 = vld [vmem:[#allocation2 + $0x30] sm:$0x3]
    %v3246 = vld [vmem:[#allocation2 + $0x38] sm:$0x3]
    %v3247 = vld [vmem:[#allocation15] sm:$0xff]
    %v3248 = vld [vmem:[#allocation15 + $0x8] sm:$0xff]
    %v3249 = vld [vmem:[#allocation15 + $0x10] sm:$0xff]
    %v3250 = vld [vmem:[#allocation15 + $0x18] sm:$0xff]
    %v3251 = vld [vmem:[#allocation15 + $0x20] sm:$0xff]
    %v3252 = vld [vmem:[#allocation15 + $0x28] sm:$0xff]
    %v3253 = vld [vmem:[#allocation15 + $0x30] sm:$0xff]
    %v3254 = vld [vmem:[#allocation15 + $0x38] sm:$0xff]
    %v3255 = vld [vmem:[#allocation15 + $0x40] sm:$0xff]
    %v3256 = vld [vmem:[#allocation15 + $0x48] sm:$0xff]
    %v3257 = vld [vmem:[#allocation15 + $0x50] sm:$0xff]
    %v3258 = vld [vmem:[#allocation15 + $0x58] sm:$0xff]
    %v3259 = vld [vmem:[#allocation15 + $0x60] sm:$0xff]
    %v3260 = vld [vmem:[#allocation15 + $0x68] sm:$0xff]
    %v3261 = vld [vmem:[#allocation15 + $0x70] sm:$0xff]
    %v3262 = vld [vmem:[#allocation15 + $0x78] sm:$0xff]
    %v3263 = vld [vmem:[#allocation15 + $0x80] sm:$0xff]
    %v3264 = vld [vmem:[#allocation15 + $0x88] sm:$0xff]
    %v3265 = vld [vmem:[#allocation15 + $0x90] sm:$0xff]
    %v3266 = vld [vmem:[#allocation15 + $0x98] sm:$0xff]
    %v3267 = vld [vmem:[#allocation15 + $0xa0] sm:$0xff]
    %v3268 = vld [vmem:[#allocation15 + $0xa8] sm:$0xff]
    %v3269 = vld [vmem:[#allocation15 + $0xb0] sm:$0xff]
    %v3270 = vld [vmem:[#allocation15 + $0xb8] sm:$0xff]
    %v3271 = vld [vmem:[#allocation15 + $0xc0] sm:$0xff]
    %v3272 = vld [vmem:[#allocation15 + $0xc8] sm:$0xff]
    %v3273 = vld [vmem:[#allocation15 + $0xd0] sm:$0xff]
    %v3274 = vld [vmem:[#allocation15 + $0xd8] sm:$0xff]
    %v3275 = vld [vmem:[#allocation15 + $0xe0] sm:$0xff]
    %v3276 = vld [vmem:[#allocation15 + $0xe8] sm:$0xff]
    %v3277 = vld [vmem:[#allocation15 + $0xf0] sm:$0xff]
    %v3278 = vld [vmem:[#allocation15 + $0xf8] sm:$0xff]
    %v3279 = vld [vmem:[#allocation15 + $0x100] sm:$0xff]
    %v3280 = vld [vmem:[#allocation15 + $0x108] sm:$0xff]
    %v3281 = vld [vmem:[#allocation15 + $0x110] sm:$0xff]
    %v3282 = vld [vmem:[#allocation15 + $0x118] sm:$0xff]
    %v3283 = vld [vmem:[#allocation15 + $0x120] sm:$0xff]
    %v3284 = vld [vmem:[#allocation15 + $0x128] sm:$0xff]
    %v3285 = vld [vmem:[#allocation15 + $0x130] sm:$0xff]
    %v3286 = vld [vmem:[#allocation15 + $0x138] sm:$0xff]
    %v3287 = vld [vmem:[#allocation15 + $0x140] sm:$0xff]
    %v3288 = vld [vmem:[#allocation15 + $0x148] sm:$0xff]
    %v3289 = vld [vmem:[#allocation15 + $0x150] sm:$0xff]
    %v3290 = vld [vmem:[#allocation15 + $0x158] sm:$0xff]
    %v3291 = vld [vmem:[#allocation15 + $0x160] sm:$0xff]
    %v3292 = vld [vmem:[#allocation15 + $0x168] sm:$0xff]
    %v3293 = vld [vmem:[#allocation15 + $0x170] sm:$0xff]
    %v3294 = vld [vmem:[#allocation15 + $0x178] sm:$0xff]
    %v3295 = vld [vmem:[#allocation15 + $0x180] sm:$0xff]
    %v3296 = vld [vmem:[#allocation15 + $0x188] sm:$0xff]
    %v3297 = vld [vmem:[#allocation15 + $0x190] sm:$0xff]
    %v3298 = vld [vmem:[#allocation15 + $0x198] sm:$0xff]
    %v3299 = vld [vmem:[#allocation15 + $0x1a0] sm:$0xff]
    %v3300 = vld [vmem:[#allocation15 + $0x1a8] sm:$0xff]
    %v3301 = vld [vmem:[#allocation15 + $0x1b0] sm:$0xff]
    %v3302 = vld [vmem:[#allocation15 + $0x1b8] sm:$0xff]
    %v3303 = vld [vmem:[#allocation15 + $0x1c0] sm:$0xff]
    %v3304 = vld [vmem:[#allocation15 + $0x1c8] sm:$0xff]
    %v3305 = vld [vmem:[#allocation15 + $0x1d0] sm:$0xff]
    %v3306 = vld [vmem:[#allocation15 + $0x1d8] sm:$0xff]
    %v3307 = vld [vmem:[#allocation15 + $0x1e0] sm:$0xff]
    %v3308 = vld [vmem:[#allocation15 + $0x1e8] sm:$0xff]
    %v3309 = vld [vmem:[#allocation15 + $0x1f0] sm:$0xff]
    %v3310 = vld [vmem:[#allocation15 + $0x1f8] sm:$0xff]
    %v3312 = vrot.slane %v3241, 6
    %3314 = vmatpush.msra.mxu0 %v3307
    %3315 = vmatpush.msra.mxu0 %v3303
    %3316 = vmatpush.msra.mxu0 %v3299
    %3317 = vmatpush.msra.mxu0 %v3295
    %3318 = vmatpush.msra.mxu0 %v3291
    %3319 = vmatpush.msra.mxu0 %v3287
    %3320 = vmatpush.msra.mxu0 %v3283
    %3321 = vmatpush.msra.mxu0 %v3279
    %3322 = vmatpush.msra.mxu0 %v3275
    %3323 = vmatpush.msra.mxu0 %v3271
    %3324 = vmatpush.msra.mxu0 %v3267
    %3325 = vmatpush.msra.mxu0 %v3263
    %3326 = vmatpush.msra.mxu0 %v3259
    %3327 = vmatpush.msra.mxu0 %v3255
    %3328 = vmatpush.msra.mxu0 %v3251
    %3329 = vmatpush.msra.mxu0 %v3247
    %3330 = vmatmul.f32.gmra.mxu0 %v3312
    %v3331 = vpop.f32.mrf.mxu0
    %v3332 = vadd.f32 0.0, %v3331
    %3333 = vdwg.mxu0
    %3334 = vmatpush.msra.mxu0 %v3308
    %3335 = vmatpush.msra.mxu0 %v3304
    %3336 = vmatpush.msra.mxu0 %v3300
    %3337 = vmatpush.msra.mxu0 %v3296
    %3338 = vmatpush.msra.mxu0 %v3292
    %3339 = vmatpush.msra.mxu0 %v3288
    %3340 = vmatpush.msra.mxu0 %v3284
    %3341 = vmatpush.msra.mxu0 %v3280
    %3342 = vmatpush.msra.mxu0 %v3276
    %3343 = vmatpush.msra.mxu0 %v3272
    %3344 = vmatpush.msra.mxu0 %v3268
    %3345 = vmatpush.msra.mxu0 %v3264
    %3346 = vmatpush.msra.mxu0 %v3260
    %3347 = vmatpush.msra.mxu0 %v3256
    %3348 = vmatpush.msra.mxu0 %v3252
    %3349 = vmatpush.msra.mxu0 %v3248
    %3350 = vmatmul.f32.gmra.mxu0 %v3312
    %v3351 = vpop.f32.mrf.mxu0
    %v3352 = vadd.f32 0.0, %v3351
    %3353 = vdwg.mxu0
    %3354 = vmatpush.msra.mxu0 %v3309
    %3355 = vmatpush.msra.mxu0 %v3305
    %3356 = vmatpush.msra.mxu0 %v3301
    %3357 = vmatpush.msra.mxu0 %v3297
    %3358 = vmatpush.msra.mxu0 %v3293
    %3359 = vmatpush.msra.mxu0 %v3289
    %3360 = vmatpush.msra.mxu0 %v3285
    %3361 = vmatpush.msra.mxu0 %v3281
    %3362 = vmatpush.msra.mxu0 %v3277
    %3363 = vmatpush.msra.mxu0 %v3273
    %3364 = vmatpush.msra.mxu0 %v3269
    %3365 = vmatpush.msra.mxu0 %v3265
    %3366 = vmatpush.msra.mxu0 %v3261
    %3367 = vmatpush.msra.mxu0 %v3257
    %3368 = vmatpush.msra.mxu0 %v3253
    %3369 = vmatpush.msra.mxu0 %v3249
    %3370 = vmatmul.f32.gmra.mxu0 %v3312
    %v3371 = vpop.f32.mrf.mxu0
    %v3372 = vadd.f32 0.0, %v3371
    %3373 = vdwg.mxu0
    %3374 = vmatpush.msra.mxu0 %v3310
    %3375 = vmatpush.msra.mxu0 %v3306
    %3376 = vmatpush.msra.mxu0 %v3302
    %3377 = vmatpush.msra.mxu0 %v3298
    %3378 = vmatpush.msra.mxu0 %v3294
    %3379 = vmatpush.msra.mxu0 %v3290
    %3380 = vmatpush.msra.mxu0 %v3286
    %3381 = vmatpush.msra.mxu0 %v3282
    %3382 = vmatpush.msra.mxu0 %v3278
    %3383 = vmatpush.msra.mxu0 %v3274
    %3384 = vmatpush.msra.mxu0 %v3270
    %3385 = vmatpush.msra.mxu0 %v3266
    %3386 = vmatpush.msra.mxu0 %v3262
    %3387 = vmatpush.msra.mxu0 %v3258
    %3388 = vmatpush.msra.mxu0 %v3254
    %3389 = vmatpush.msra.mxu0 %v3250
    %3390 = vmatmul.f32.gmra.mxu0 %v3312
    %v3391 = vpop.f32.mrf.mxu0
    %v3392 = vadd.f32 0.0, %v3391
    %3393 = vdwg.mxu0
    %v3394 = vadd.f32 %v3243, %v3332
    %v3395 = vadd.f32 %v3244, %v3352
    %v3396 = vadd.f32 %v3245, %v3372
    %v3397 = vadd.f32 %v3246, %v3392
    %v3398 = vxor.u32 %v3394, 2147483648
    %v3399 = vmul.f32 %v3398, 1.442695
    %v3400 = vpow.pop %v3399
    %v3401 = vadd.f32 %v3400, 1.0
    %v3402 = vrcp.pop %v3401
    %v3403 = vmul.f32 %v3401, %v3402
    %v3404 = vsub.f32 1.0, %v3403
    %v3405 = vmul.f32 %v3402, %v3404
    %v3406 = vadd.f32 %v3402, %v3405
    %vm3407 = vweird.f32 %v3401
    %vm3408 = vweird.f32 %v3402
    %vm3409 = vmor %vm3407, %vm3408
    %v3410 = vsel %vm3409, %v3402, %v3406
    %v3411 = vand.u32 2147483647, %v3401
    %vm3412 = vcmp.eq.f32.partialorder %v3411, 8.507059e+37
    %v3413 = vand.u32 %v3401, 2147483648
    %v3414 = vor.u32 1.1754944e-38, %v3413
    %v3415 = vsel %vm3412, %v3414, %v3410
    %v3416 = vmul.f32 1.0, %v3415
    %v3417 = vxor.u32 %v3395, 2147483648
    %v3418 = vmul.f32 %v3417, 1.442695
    %v3419 = vpow.pop %v3418
    %v3420 = vadd.f32 %v3419, 1.0
    %v3421 = vrcp.pop %v3420
    %v3422 = vmul.f32 %v3420, %v3421
    %v3423 = vsub.f32 1.0, %v3422
    %v3424 = vmul.f32 %v3421, %v3423
    %v3425 = vadd.f32 %v3421, %v3424
    %vm3426 = vweird.f32 %v3420
    %vm3427 = vweird.f32 %v3421
    %vm3428 = vmor %vm3426, %vm3427
    %v3429 = vsel %vm3428, %v3421, %v3425
    %v3430 = vand.u32 2147483647, %v3420
    %vm3431 = vcmp.eq.f32.partialorder %v3430, 8.507059e+37
    %v3432 = vand.u32 %v3420, 2147483648
    %v3433 = vor.u32 1.1754944e-38, %v3432
    %v3434 = vsel %vm3431, %v3433, %v3429
    %v3435 = vmul.f32 1.0, %v3434
    %v3436 = vtanh.pop %v3396
    %v3437 = vxor.u32 %v3397, 2147483648
    %v3438 = vmul.f32 %v3437, 1.442695
    %v3439 = vpow.pop %v3438
    %v3440 = vadd.f32 %v3439, 1.0
    %v3441 = vrcp.pop %v3440
    %v3442 = vmul.f32 %v3440, %v3441
    %v3443 = vsub.f32 1.0, %v3442
    %v3444 = vmul.f32 %v3441, %v3443
    %v3445 = vadd.f32 %v3441, %v3444
    %vm3446 = vweird.f32 %v3440
    %vm3447 = vweird.f32 %v3441
    %vm3448 = vmor %vm3446, %vm3447
    %v3449 = vsel %vm3448, %v3441, %v3445
    %v3450 = vand.u32 2147483647, %v3440
    %vm3451 = vcmp.eq.f32.partialorder %v3450, 8.507059e+37
    %v3452 = vand.u32 %v3440, 2147483648
    %v3453 = vor.u32 1.1754944e-38, %v3452
    %v3454 = vsel %vm3451, %v3453, %v3449
    %v3455 = vmul.f32 1.0, %v3454
    %v3457 = vrot.slane %v3239, 6
    %v3459 = vmul.f32 %v3435, %v3457
    %v3460 = vmul.f32 %v3416, %v3436
    %v3461 = vadd.f32 %v3459, %v3460
    %v3462 = vtanh.pop %v3461
    %v3463 = vmul.f32 %v3455, %v3462
    %3464 = vst [vmem:[#allocation3 + $0x8] sm:$0x3] %v3463
    %v3465 = vld [vmem:[#allocation2 + $0x20] sm:$0xc]
    %v3466 = vld [vmem:[#allocation2 + $0x28] sm:$0xc]
    %v3467 = vld [vmem:[#allocation2 + $0x30] sm:$0xc]
    %v3468 = vld [vmem:[#allocation2 + $0x38] sm:$0xc]
    %v3469 = vld [vmem:[#allocation15] sm:$0xff]
    %v3470 = vld [vmem:[#allocation15 + $0x8] sm:$0xff]
    %v3471 = vld [vmem:[#allocation15 + $0x10] sm:$0xff]
    %v3472 = vld [vmem:[#allocation15 + $0x18] sm:$0xff]
    %v3473 = vld [vmem:[#allocation15 + $0x20] sm:$0xff]
    %v3474 = vld [vmem:[#allocation15 + $0x28] sm:$0xff]
    %v3475 = vld [vmem:[#allocation15 + $0x30] sm:$0xff]
    %v3476 = vld [vmem:[#allocation15 + $0x38] sm:$0xff]
    %v3477 = vld [vmem:[#allocation15 + $0x40] sm:$0xff]
    %v3478 = vld [vmem:[#allocation15 + $0x48] sm:$0xff]
    %v3479 = vld [vmem:[#allocation15 + $0x50] sm:$0xff]
    %v3480 = vld [vmem:[#allocation15 + $0x58] sm:$0xff]
    %v3481 = vld [vmem:[#allocation15 + $0x60] sm:$0xff]
    %v3482 = vld [vmem:[#allocation15 + $0x68] sm:$0xff]
    %v3483 = vld [vmem:[#allocation15 + $0x70] sm:$0xff]
    %v3484 = vld [vmem:[#allocation15 + $0x78] sm:$0xff]
    %v3485 = vld [vmem:[#allocation15 + $0x80] sm:$0xff]
    %v3486 = vld [vmem:[#allocation15 + $0x88] sm:$0xff]
    %v3487 = vld [vmem:[#allocation15 + $0x90] sm:$0xff]
    %v3488 = vld [vmem:[#allocation15 + $0x98] sm:$0xff]
    %v3489 = vld [vmem:[#allocation15 + $0xa0] sm:$0xff]
    %v3490 = vld [vmem:[#allocation15 + $0xa8] sm:$0xff]
    %v3491 = vld [vmem:[#allocation15 + $0xb0] sm:$0xff]
    %v3492 = vld [vmem:[#allocation15 + $0xb8] sm:$0xff]
    %v3493 = vld [vmem:[#allocation15 + $0xc0] sm:$0xff]
    %v3494 = vld [vmem:[#allocation15 + $0xc8] sm:$0xff]
    %v3495 = vld [vmem:[#allocation15 + $0xd0] sm:$0xff]
    %v3496 = vld [vmem:[#allocation15 + $0xd8] sm:$0xff]
    %v3497 = vld [vmem:[#allocation15 + $0xe0] sm:$0xff]
    %v3498 = vld [vmem:[#allocation15 + $0xe8] sm:$0xff]
    %v3499 = vld [vmem:[#allocation15 + $0xf0] sm:$0xff]
    %v3500 = vld [vmem:[#allocation15 + $0xf8] sm:$0xff]
    %v3501 = vld [vmem:[#allocation15 + $0x100] sm:$0xff]
    %v3502 = vld [vmem:[#allocation15 + $0x108] sm:$0xff]
    %v3503 = vld [vmem:[#allocation15 + $0x110] sm:$0xff]
    %v3504 = vld [vmem:[#allocation15 + $0x118] sm:$0xff]
    %v3505 = vld [vmem:[#allocation15 + $0x120] sm:$0xff]
    %v3506 = vld [vmem:[#allocation15 + $0x128] sm:$0xff]
    %v3507 = vld [vmem:[#allocation15 + $0x130] sm:$0xff]
    %v3508 = vld [vmem:[#allocation15 + $0x138] sm:$0xff]
    %v3509 = vld [vmem:[#allocation15 + $0x140] sm:$0xff]
    %v3510 = vld [vmem:[#allocation15 + $0x148] sm:$0xff]
    %v3511 = vld [vmem:[#allocation15 + $0x150] sm:$0xff]
    %v3512 = vld [vmem:[#allocation15 + $0x158] sm:$0xff]
    %v3513 = vld [vmem:[#allocation15 + $0x160] sm:$0xff]
    %v3514 = vld [vmem:[#allocation15 + $0x168] sm:$0xff]
    %v3515 = vld [vmem:[#allocation15 + $0x170] sm:$0xff]
    %v3516 = vld [vmem:[#allocation15 + $0x178] sm:$0xff]
    %v3517 = vld [vmem:[#allocation15 + $0x180] sm:$0xff]
    %v3518 = vld [vmem:[#allocation15 + $0x188] sm:$0xff]
    %v3519 = vld [vmem:[#allocation15 + $0x190] sm:$0xff]
    %v3520 = vld [vmem:[#allocation15 + $0x198] sm:$0xff]
    %v3521 = vld [vmem:[#allocation15 + $0x1a0] sm:$0xff]
    %v3522 = vld [vmem:[#allocation15 + $0x1a8] sm:$0xff]
    %v3523 = vld [vmem:[#allocation15 + $0x1b0] sm:$0xff]
    %v3524 = vld [vmem:[#allocation15 + $0x1b8] sm:$0xff]
    %v3525 = vld [vmem:[#allocation15 + $0x1c0] sm:$0xff]
    %v3526 = vld [vmem:[#allocation15 + $0x1c8] sm:$0xff]
    %v3527 = vld [vmem:[#allocation15 + $0x1d0] sm:$0xff]
    %v3528 = vld [vmem:[#allocation15 + $0x1d8] sm:$0xff]
    %v3529 = vld [vmem:[#allocation15 + $0x1e0] sm:$0xff]
    %v3530 = vld [vmem:[#allocation15 + $0x1e8] sm:$0xff]
    %v3531 = vld [vmem:[#allocation15 + $0x1f0] sm:$0xff]
    %v3532 = vld [vmem:[#allocation15 + $0x1f8] sm:$0xff]
    %3533 = vmatpush.msra.mxu0 %v3529
    %3534 = vmatpush.msra.mxu0 %v3525
    %3535 = vmatpush.msra.mxu0 %v3521
    %3536 = vmatpush.msra.mxu0 %v3517
    %3537 = vmatpush.msra.mxu0 %v3513
    %3538 = vmatpush.msra.mxu0 %v3509
    %3539 = vmatpush.msra.mxu0 %v3505
    %3540 = vmatpush.msra.mxu0 %v3501
    %3541 = vmatpush.msra.mxu0 %v3497
    %3542 = vmatpush.msra.mxu0 %v3493
    %3543 = vmatpush.msra.mxu0 %v3489
    %3544 = vmatpush.msra.mxu0 %v3485
    %3545 = vmatpush.msra.mxu0 %v3481
    %3546 = vmatpush.msra.mxu0 %v3477
    %3547 = vmatpush.msra.mxu0 %v3473
    %3548 = vmatpush.msra.mxu0 %v3469
    %3549 = vmatmul.f32.gmra.mxu0 %v3463
    %v3550 = vpop.f32.mrf.mxu0
    %v3551 = vadd.f32 0.0, %v3550
    %3552 = vdwg.mxu0
    %3553 = vmatpush.msra.mxu0 %v3530
    %3554 = vmatpush.msra.mxu0 %v3526
    %3555 = vmatpush.msra.mxu0 %v3522
    %3556 = vmatpush.msra.mxu0 %v3518
    %3557 = vmatpush.msra.mxu0 %v3514
    %3558 = vmatpush.msra.mxu0 %v3510
    %3559 = vmatpush.msra.mxu0 %v3506
    %3560 = vmatpush.msra.mxu0 %v3502
    %3561 = vmatpush.msra.mxu0 %v3498
    %3562 = vmatpush.msra.mxu0 %v3494
    %3563 = vmatpush.msra.mxu0 %v3490
    %3564 = vmatpush.msra.mxu0 %v3486
    %3565 = vmatpush.msra.mxu0 %v3482
    %3566 = vmatpush.msra.mxu0 %v3478
    %3567 = vmatpush.msra.mxu0 %v3474
    %3568 = vmatpush.msra.mxu0 %v3470
    %3569 = vmatmul.f32.gmra.mxu0 %v3463
    %v3570 = vpop.f32.mrf.mxu0
    %v3571 = vadd.f32 0.0, %v3570
    %3572 = vdwg.mxu0
    %3573 = vmatpush.msra.mxu0 %v3531
    %3574 = vmatpush.msra.mxu0 %v3527
    %3575 = vmatpush.msra.mxu0 %v3523
    %3576 = vmatpush.msra.mxu0 %v3519
    %3577 = vmatpush.msra.mxu0 %v3515
    %3578 = vmatpush.msra.mxu0 %v3511
    %3579 = vmatpush.msra.mxu0 %v3507
    %3580 = vmatpush.msra.mxu0 %v3503
    %3581 = vmatpush.msra.mxu0 %v3499
    %3582 = vmatpush.msra.mxu0 %v3495
    %3583 = vmatpush.msra.mxu0 %v3491
    %3584 = vmatpush.msra.mxu0 %v3487
    %3585 = vmatpush.msra.mxu0 %v3483
    %3586 = vmatpush.msra.mxu0 %v3479
    %3587 = vmatpush.msra.mxu0 %v3475
    %3588 = vmatpush.msra.mxu0 %v3471
    %3589 = vmatmul.f32.gmra.mxu0 %v3463
    %v3590 = vpop.f32.mrf.mxu0
    %v3591 = vadd.f32 0.0, %v3590
    %3592 = vdwg.mxu0
    %3593 = vmatpush.msra.mxu0 %v3532
    %3594 = vmatpush.msra.mxu0 %v3528
    %3595 = vmatpush.msra.mxu0 %v3524
    %3596 = vmatpush.msra.mxu0 %v3520
    %3597 = vmatpush.msra.mxu0 %v3516
    %3598 = vmatpush.msra.mxu0 %v3512
    %3599 = vmatpush.msra.mxu0 %v3508
    %3600 = vmatpush.msra.mxu0 %v3504
    %3601 = vmatpush.msra.mxu0 %v3500
    %3602 = vmatpush.msra.mxu0 %v3496
    %3603 = vmatpush.msra.mxu0 %v3492
    %3604 = vmatpush.msra.mxu0 %v3488
    %3605 = vmatpush.msra.mxu0 %v3484
    %3606 = vmatpush.msra.mxu0 %v3480
    %3607 = vmatpush.msra.mxu0 %v3476
    %3608 = vmatpush.msra.mxu0 %v3472
    %3609 = vmatmul.f32.gmra.mxu0 %v3463
    %v3610 = vpop.f32.mrf.mxu0
    %v3611 = vadd.f32 0.0, %v3610
    %3612 = vdwg.mxu0
    %v3617 = vrot.slane %v3551, 6
    %v3618 = vrot.slane %v3571, 6
    %v3619 = vrot.slane %v3591, 6
    %v3620 = vrot.slane %v3611, 6
    %v3625 = vadd.f32 %v3465, %v3617
    %v3626 = vadd.f32 %v3466, %v3618
    %v3627 = vadd.f32 %v3467, %v3619
    %v3628 = vadd.f32 %v3468, %v3620
    %v3629 = vxor.u32 %v3625, 2147483648
    %v3630 = vmul.f32 %v3629, 1.442695
    %v3631 = vpow.pop %v3630
    %v3632 = vadd.f32 %v3631, 1.0
    %v3633 = vrcp.pop %v3632
    %v3634 = vmul.f32 %v3632, %v3633
    %v3635 = vsub.f32 1.0, %v3634
    %v3636 = vmul.f32 %v3633, %v3635
    %v3637 = vadd.f32 %v3633, %v3636
    %vm3638 = vweird.f32 %v3632
    %vm3639 = vweird.f32 %v3633
    %vm3640 = vmor %vm3638, %vm3639
    %v3641 = vsel %vm3640, %v3633, %v3637
    %v3642 = vand.u32 2147483647, %v3632
    %vm3643 = vcmp.eq.f32.partialorder %v3642, 8.507059e+37
    %v3644 = vand.u32 %v3632, 2147483648
    %v3645 = vor.u32 1.1754944e-38, %v3644
    %v3646 = vsel %vm3643, %v3645, %v3641
    %v3647 = vmul.f32 1.0, %v3646
    %v3648 = vxor.u32 %v3626, 2147483648
    %v3649 = vmul.f32 %v3648, 1.442695
    %v3650 = vpow.pop %v3649
    %v3651 = vadd.f32 %v3650, 1.0
    %v3652 = vrcp.pop %v3651
    %v3653 = vmul.f32 %v3651, %v3652
    %v3654 = vsub.f32 1.0, %v3653
    %v3655 = vmul.f32 %v3652, %v3654
    %v3656 = vadd.f32 %v3652, %v3655
    %vm3657 = vweird.f32 %v3651
    %vm3658 = vweird.f32 %v3652
    %vm3659 = vmor %vm3657, %vm3658
    %v3660 = vsel %vm3659, %v3652, %v3656
    %v3661 = vand.u32 2147483647, %v3651
    %vm3662 = vcmp.eq.f32.partialorder %v3661, 8.507059e+37
    %v3663 = vand.u32 %v3651, 2147483648
    %v3664 = vor.u32 1.1754944e-38, %v3663
    %v3665 = vsel %vm3662, %v3664, %v3660
    %v3666 = vmul.f32 1.0, %v3665
    %v3667 = vtanh.pop %v3627
    %v3668 = vxor.u32 %v3628, 2147483648
    %v3669 = vmul.f32 %v3668, 1.442695
    %v3670 = vpow.pop %v3669
    %v3671 = vadd.f32 %v3670, 1.0
    %v3672 = vrcp.pop %v3671
    %v3673 = vmul.f32 %v3671, %v3672
    %v3674 = vsub.f32 1.0, %v3673
    %v3675 = vmul.f32 %v3672, %v3674
    %v3676 = vadd.f32 %v3672, %v3675
    %vm3677 = vweird.f32 %v3671
    %vm3678 = vweird.f32 %v3672
    %vm3679 = vmor %vm3677, %vm3678
    %v3680 = vsel %vm3679, %v3672, %v3676
    %v3681 = vand.u32 2147483647, %v3671
    %vm3682 = vcmp.eq.f32.partialorder %v3681, 8.507059e+37
    %v3683 = vand.u32 %v3671, 2147483648
    %v3684 = vor.u32 1.1754944e-38, %v3683
    %v3685 = vsel %vm3682, %v3684, %v3680
    %v3686 = vmul.f32 1.0, %v3685
    %v3688 = vrot.slane %v3461, 6
    %v3690 = vmul.f32 %v3666, %v3688
    %v3691 = vmul.f32 %v3647, %v3667
    %v3692 = vadd.f32 %v3690, %v3691
    %v3693 = vtanh.pop %v3692
    %v3694 = vmul.f32 %v3686, %v3693
    %3695 = vst [vmem:[#allocation3 + $0x8] sm:$0xc] %v3694
    %v3696 = vld [vmem:[#allocation2 + $0x20] sm:$0x30]
    %v3697 = vld [vmem:[#allocation2 + $0x28] sm:$0x30]
    %v3698 = vld [vmem:[#allocation2 + $0x30] sm:$0x30]
    %v3699 = vld [vmem:[#allocation2 + $0x38] sm:$0x30]
    %v3700 = vld [vmem:[#allocation15] sm:$0xff]
    %v3701 = vld [vmem:[#allocation15 + $0x8] sm:$0xff]
    %v3702 = vld [vmem:[#allocation15 + $0x10] sm:$0xff]
    %v3703 = vld [vmem:[#allocation15 + $0x18] sm:$0xff]
    %v3704 = vld [vmem:[#allocation15 + $0x20] sm:$0xff]
    %v3705 = vld [vmem:[#allocation15 + $0x28] sm:$0xff]
    %v3706 = vld [vmem:[#allocation15 + $0x30] sm:$0xff]
    %v3707 = vld [vmem:[#allocation15 + $0x38] sm:$0xff]
    %v3708 = vld [vmem:[#allocation15 + $0x40] sm:$0xff]
    %v3709 = vld [vmem:[#allocation15 + $0x48] sm:$0xff]
    %v3710 = vld [vmem:[#allocation15 + $0x50] sm:$0xff]
    %v3711 = vld [vmem:[#allocation15 + $0x58] sm:$0xff]
    %v3712 = vld [vmem:[#allocation15 + $0x60] sm:$0xff]
    %v3713 = vld [vmem:[#allocation15 + $0x68] sm:$0xff]
    %v3714 = vld [vmem:[#allocation15 + $0x70] sm:$0xff]
    %v3715 = vld [vmem:[#allocation15 + $0x78] sm:$0xff]
    %v3716 = vld [vmem:[#allocation15 + $0x80] sm:$0xff]
    %v3717 = vld [vmem:[#allocation15 + $0x88] sm:$0xff]
    %v3718 = vld [vmem:[#allocation15 + $0x90] sm:$0xff]
    %v3719 = vld [vmem:[#allocation15 + $0x98] sm:$0xff]
    %v3720 = vld [vmem:[#allocation15 + $0xa0] sm:$0xff]
    %v3721 = vld [vmem:[#allocation15 + $0xa8] sm:$0xff]
    %v3722 = vld [vmem:[#allocation15 + $0xb0] sm:$0xff]
    %v3723 = vld [vmem:[#allocation15 + $0xb8] sm:$0xff]
    %v3724 = vld [vmem:[#allocation15 + $0xc0] sm:$0xff]
    %v3725 = vld [vmem:[#allocation15 + $0xc8] sm:$0xff]
    %v3726 = vld [vmem:[#allocation15 + $0xd0] sm:$0xff]
    %v3727 = vld [vmem:[#allocation15 + $0xd8] sm:$0xff]
    %v3728 = vld [vmem:[#allocation15 + $0xe0] sm:$0xff]
    %v3729 = vld [vmem:[#allocation15 + $0xe8] sm:$0xff]
    %v3730 = vld [vmem:[#allocation15 + $0xf0] sm:$0xff]
    %v3731 = vld [vmem:[#allocation15 + $0xf8] sm:$0xff]
    %v3732 = vld [vmem:[#allocation15 + $0x100] sm:$0xff]
    %v3733 = vld [vmem:[#allocation15 + $0x108] sm:$0xff]
    %v3734 = vld [vmem:[#allocation15 + $0x110] sm:$0xff]
    %v3735 = vld [vmem:[#allocation15 + $0x118] sm:$0xff]
    %v3736 = vld [vmem:[#allocation15 + $0x120] sm:$0xff]
    %v3737 = vld [vmem:[#allocation15 + $0x128] sm:$0xff]
    %v3738 = vld [vmem:[#allocation15 + $0x130] sm:$0xff]
    %v3739 = vld [vmem:[#allocation15 + $0x138] sm:$0xff]
    %v3740 = vld [vmem:[#allocation15 + $0x140] sm:$0xff]
    %v3741 = vld [vmem:[#allocation15 + $0x148] sm:$0xff]
    %v3742 = vld [vmem:[#allocation15 + $0x150] sm:$0xff]
    %v3743 = vld [vmem:[#allocation15 + $0x158] sm:$0xff]
    %v3744 = vld [vmem:[#allocation15 + $0x160] sm:$0xff]
    %v3745 = vld [vmem:[#allocation15 + $0x168] sm:$0xff]
    %v3746 = vld [vmem:[#allocation15 + $0x170] sm:$0xff]
    %v3747 = vld [vmem:[#allocation15 + $0x178] sm:$0xff]
    %v3748 = vld [vmem:[#allocation15 + $0x180] sm:$0xff]
    %v3749 = vld [vmem:[#allocation15 + $0x188] sm:$0xff]
    %v3750 = vld [vmem:[#allocation15 + $0x190] sm:$0xff]
    %v3751 = vld [vmem:[#allocation15 + $0x198] sm:$0xff]
    %v3752 = vld [vmem:[#allocation15 + $0x1a0] sm:$0xff]
    %v3753 = vld [vmem:[#allocation15 + $0x1a8] sm:$0xff]
    %v3754 = vld [vmem:[#allocation15 + $0x1b0] sm:$0xff]
    %v3755 = vld [vmem:[#allocation15 + $0x1b8] sm:$0xff]
    %v3756 = vld [vmem:[#allocation15 + $0x1c0] sm:$0xff]
    %v3757 = vld [vmem:[#allocation15 + $0x1c8] sm:$0xff]
    %v3758 = vld [vmem:[#allocation15 + $0x1d0] sm:$0xff]
    %v3759 = vld [vmem:[#allocation15 + $0x1d8] sm:$0xff]
    %v3760 = vld [vmem:[#allocation15 + $0x1e0] sm:$0xff]
    %v3761 = vld [vmem:[#allocation15 + $0x1e8] sm:$0xff]
    %v3762 = vld [vmem:[#allocation15 + $0x1f0] sm:$0xff]
    %v3763 = vld [vmem:[#allocation15 + $0x1f8] sm:$0xff]
    %v3765 = vrot.slane %v3694, 2
    %3767 = vmatpush.msra.mxu0 %v3760
    %3768 = vmatpush.msra.mxu0 %v3756
    %3769 = vmatpush.msra.mxu0 %v3752
    %3770 = vmatpush.msra.mxu0 %v3748
    %3771 = vmatpush.msra.mxu0 %v3744
    %3772 = vmatpush.msra.mxu0 %v3740
    %3773 = vmatpush.msra.mxu0 %v3736
    %3774 = vmatpush.msra.mxu0 %v3732
    %3775 = vmatpush.msra.mxu0 %v3728
    %3776 = vmatpush.msra.mxu0 %v3724
    %3777 = vmatpush.msra.mxu0 %v3720
    %3778 = vmatpush.msra.mxu0 %v3716
    %3779 = vmatpush.msra.mxu0 %v3712
    %3780 = vmatpush.msra.mxu0 %v3708
    %3781 = vmatpush.msra.mxu0 %v3704
    %3782 = vmatpush.msra.mxu0 %v3700
    %3783 = vmatmul.f32.gmra.mxu0 %v3765
    %v3784 = vpop.f32.mrf.mxu0
    %v3785 = vadd.f32 0.0, %v3784
    %3786 = vdwg.mxu0
    %3787 = vmatpush.msra.mxu0 %v3761
    %3788 = vmatpush.msra.mxu0 %v3757
    %3789 = vmatpush.msra.mxu0 %v3753
    %3790 = vmatpush.msra.mxu0 %v3749
    %3791 = vmatpush.msra.mxu0 %v3745
    %3792 = vmatpush.msra.mxu0 %v3741
    %3793 = vmatpush.msra.mxu0 %v3737
    %3794 = vmatpush.msra.mxu0 %v3733
    %3795 = vmatpush.msra.mxu0 %v3729
    %3796 = vmatpush.msra.mxu0 %v3725
    %3797 = vmatpush.msra.mxu0 %v3721
    %3798 = vmatpush.msra.mxu0 %v3717
    %3799 = vmatpush.msra.mxu0 %v3713
    %3800 = vmatpush.msra.mxu0 %v3709
    %3801 = vmatpush.msra.mxu0 %v3705
    %3802 = vmatpush.msra.mxu0 %v3701
    %3803 = vmatmul.f32.gmra.mxu0 %v3765
    %v3804 = vpop.f32.mrf.mxu0
    %v3805 = vadd.f32 0.0, %v3804
    %3806 = vdwg.mxu0
    %3807 = vmatpush.msra.mxu0 %v3762
    %3808 = vmatpush.msra.mxu0 %v3758
    %3809 = vmatpush.msra.mxu0 %v3754
    %3810 = vmatpush.msra.mxu0 %v3750
    %3811 = vmatpush.msra.mxu0 %v3746
    %3812 = vmatpush.msra.mxu0 %v3742
    %3813 = vmatpush.msra.mxu0 %v3738
    %3814 = vmatpush.msra.mxu0 %v3734
    %3815 = vmatpush.msra.mxu0 %v3730
    %3816 = vmatpush.msra.mxu0 %v3726
    %3817 = vmatpush.msra.mxu0 %v3722
    %3818 = vmatpush.msra.mxu0 %v3718
    %3819 = vmatpush.msra.mxu0 %v3714
    %3820 = vmatpush.msra.mxu0 %v3710
    %3821 = vmatpush.msra.mxu0 %v3706
    %3822 = vmatpush.msra.mxu0 %v3702
    %3823 = vmatmul.f32.gmra.mxu0 %v3765
    %v3824 = vpop.f32.mrf.mxu0
    %v3825 = vadd.f32 0.0, %v3824
    %3826 = vdwg.mxu0
    %3827 = vmatpush.msra.mxu0 %v3763
    %3828 = vmatpush.msra.mxu0 %v3759
    %3829 = vmatpush.msra.mxu0 %v3755
    %3830 = vmatpush.msra.mxu0 %v3751
    %3831 = vmatpush.msra.mxu0 %v3747
    %3832 = vmatpush.msra.mxu0 %v3743
    %3833 = vmatpush.msra.mxu0 %v3739
    %3834 = vmatpush.msra.mxu0 %v3735
    %3835 = vmatpush.msra.mxu0 %v3731
    %3836 = vmatpush.msra.mxu0 %v3727
    %3837 = vmatpush.msra.mxu0 %v3723
    %3838 = vmatpush.msra.mxu0 %v3719
    %3839 = vmatpush.msra.mxu0 %v3715
    %3840 = vmatpush.msra.mxu0 %v3711
    %3841 = vmatpush.msra.mxu0 %v3707
    %3842 = vmatpush.msra.mxu0 %v3703
    %3843 = vmatmul.f32.gmra.mxu0 %v3765
    %v3844 = vpop.f32.mrf.mxu0
    %v3845 = vadd.f32 0.0, %v3844
    %3846 = vdwg.mxu0
    %v3851 = vrot.slane %v3785, 4
    %v3852 = vrot.slane %v3805, 4
    %v3853 = vrot.slane %v3825, 4
    %v3854 = vrot.slane %v3845, 4
    %v3859 = vadd.f32 %v3696, %v3851
    %v3860 = vadd.f32 %v3697, %v3852
    %v3861 = vadd.f32 %v3698, %v3853
    %v3862 = vadd.f32 %v3699, %v3854
    %v3863 = vxor.u32 %v3859, 2147483648
    %v3864 = vmul.f32 %v3863, 1.442695
    %v3865 = vpow.pop %v3864
    %v3866 = vadd.f32 %v3865, 1.0
    %v3867 = vrcp.pop %v3866
    %v3868 = vmul.f32 %v3866, %v3867
    %v3869 = vsub.f32 1.0, %v3868
    %v3870 = vmul.f32 %v3867, %v3869
    %v3871 = vadd.f32 %v3867, %v3870
    %vm3872 = vweird.f32 %v3866
    %vm3873 = vweird.f32 %v3867
    %vm3874 = vmor %vm3872, %vm3873
    %v3875 = vsel %vm3874, %v3867, %v3871
    %v3876 = vand.u32 2147483647, %v3866
    %vm3877 = vcmp.eq.f32.partialorder %v3876, 8.507059e+37
    %v3878 = vand.u32 %v3866, 2147483648
    %v3879 = vor.u32 1.1754944e-38, %v3878
    %v3880 = vsel %vm3877, %v3879, %v3875
    %v3881 = vmul.f32 1.0, %v3880
    %v3882 = vxor.u32 %v3860, 2147483648
    %v3883 = vmul.f32 %v3882, 1.442695
    %v3884 = vpow.pop %v3883
    %v3885 = vadd.f32 %v3884, 1.0
    %v3886 = vrcp.pop %v3885
    %v3887 = vmul.f32 %v3885, %v3886
    %v3888 = vsub.f32 1.0, %v3887
    %v3889 = vmul.f32 %v3886, %v3888
    %v3890 = vadd.f32 %v3886, %v3889
    %vm3891 = vweird.f32 %v3885
    %vm3892 = vweird.f32 %v3886
    %vm3893 = vmor %vm3891, %vm3892
    %v3894 = vsel %vm3893, %v3886, %v3890
    %v3895 = vand.u32 2147483647, %v3885
    %vm3896 = vcmp.eq.f32.partialorder %v3895, 8.507059e+37
    %v3897 = vand.u32 %v3885, 2147483648
    %v3898 = vor.u32 1.1754944e-38, %v3897
    %v3899 = vsel %vm3896, %v3898, %v3894
    %v3900 = vmul.f32 1.0, %v3899
    %v3901 = vtanh.pop %v3861
    %v3902 = vxor.u32 %v3862, 2147483648
    %v3903 = vmul.f32 %v3902, 1.442695
    %v3904 = vpow.pop %v3903
    %v3905 = vadd.f32 %v3904, 1.0
    %v3906 = vrcp.pop %v3905
    %v3907 = vmul.f32 %v3905, %v3906
    %v3908 = vsub.f32 1.0, %v3907
    %v3909 = vmul.f32 %v3906, %v3908
    %v3910 = vadd.f32 %v3906, %v3909
    %vm3911 = vweird.f32 %v3905
    %vm3912 = vweird.f32 %v3906
    %vm3913 = vmor %vm3911, %vm3912
    %v3914 = vsel %vm3913, %v3906, %v3910
    %v3915 = vand.u32 2147483647, %v3905
    %vm3916 = vcmp.eq.f32.partialorder %v3915, 8.507059e+37
    %v3917 = vand.u32 %v3905, 2147483648
    %v3918 = vor.u32 1.1754944e-38, %v3917
    %v3919 = vsel %vm3916, %v3918, %v3914
    %v3920 = vmul.f32 1.0, %v3919
    %v3922 = vrot.slane %v3692, 6
    %v3924 = vmul.f32 %v3900, %v3922
    %v3925 = vmul.f32 %v3881, %v3901
    %v3926 = vadd.f32 %v3924, %v3925
    %v3927 = vtanh.pop %v3926
    %v3928 = vmul.f32 %v3920, %v3927
    %3929 = vst [vmem:[#allocation3 + $0x8] sm:$0x30] %v3928
    %v3930 = vld [vmem:[#allocation2 + $0x20] sm:$0xc0]
    %v3931 = vld [vmem:[#allocation2 + $0x28] sm:$0xc0]
    %v3932 = vld [vmem:[#allocation2 + $0x30] sm:$0xc0]
    %v3933 = vld [vmem:[#allocation2 + $0x38] sm:$0xc0]
    %v3934 = vld [vmem:[#allocation15] sm:$0xff]
    %v3935 = vld [vmem:[#allocation15 + $0x8] sm:$0xff]
    %v3936 = vld [vmem:[#allocation15 + $0x10] sm:$0xff]
    %v3937 = vld [vmem:[#allocation15 + $0x18] sm:$0xff]
    %v3938 = vld [vmem:[#allocation15 + $0x20] sm:$0xff]
    %v3939 = vld [vmem:[#allocation15 + $0x28] sm:$0xff]
    %v3940 = vld [vmem:[#allocation15 + $0x30] sm:$0xff]
    %v3941 = vld [vmem:[#allocation15 + $0x38] sm:$0xff]
    %v3942 = vld [vmem:[#allocation15 + $0x40] sm:$0xff]
    %v3943 = vld [vmem:[#allocation15 + $0x48] sm:$0xff]
    %v3944 = vld [vmem:[#allocation15 + $0x50] sm:$0xff]
    %v3945 = vld [vmem:[#allocation15 + $0x58] sm:$0xff]
    %v3946 = vld [vmem:[#allocation15 + $0x60] sm:$0xff]
    %v3947 = vld [vmem:[#allocation15 + $0x68] sm:$0xff]
    %v3948 = vld [vmem:[#allocation15 + $0x70] sm:$0xff]
    %v3949 = vld [vmem:[#allocation15 + $0x78] sm:$0xff]
    %v3950 = vld [vmem:[#allocation15 + $0x80] sm:$0xff]
    %v3951 = vld [vmem:[#allocation15 + $0x88] sm:$0xff]
    %v3952 = vld [vmem:[#allocation15 + $0x90] sm:$0xff]
    %v3953 = vld [vmem:[#allocation15 + $0x98] sm:$0xff]
    %v3954 = vld [vmem:[#allocation15 + $0xa0] sm:$0xff]
    %v3955 = vld [vmem:[#allocation15 + $0xa8] sm:$0xff]
    %v3956 = vld [vmem:[#allocation15 + $0xb0] sm:$0xff]
    %v3957 = vld [vmem:[#allocation15 + $0xb8] sm:$0xff]
    %v3958 = vld [vmem:[#allocation15 + $0xc0] sm:$0xff]
    %v3959 = vld [vmem:[#allocation15 + $0xc8] sm:$0xff]
    %v3960 = vld [vmem:[#allocation15 + $0xd0] sm:$0xff]
    %v3961 = vld [vmem:[#allocation15 + $0xd8] sm:$0xff]
    %v3962 = vld [vmem:[#allocation15 + $0xe0] sm:$0xff]
    %v3963 = vld [vmem:[#allocation15 + $0xe8] sm:$0xff]
    %v3964 = vld [vmem:[#allocation15 + $0xf0] sm:$0xff]
    %v3965 = vld [vmem:[#allocation15 + $0xf8] sm:$0xff]
    %v3966 = vld [vmem:[#allocation15 + $0x100] sm:$0xff]
    %v3967 = vld [vmem:[#allocation15 + $0x108] sm:$0xff]
    %v3968 = vld [vmem:[#allocation15 + $0x110] sm:$0xff]
    %v3969 = vld [vmem:[#allocation15 + $0x118] sm:$0xff]
    %v3970 = vld [vmem:[#allocation15 + $0x120] sm:$0xff]
    %v3971 = vld [vmem:[#allocation15 + $0x128] sm:$0xff]
    %v3972 = vld [vmem:[#allocation15 + $0x130] sm:$0xff]
    %v3973 = vld [vmem:[#allocation15 + $0x138] sm:$0xff]
    %v3974 = vld [vmem:[#allocation15 + $0x140] sm:$0xff]
    %v3975 = vld [vmem:[#allocation15 + $0x148] sm:$0xff]
    %v3976 = vld [vmem:[#allocation15 + $0x150] sm:$0xff]
    %v3977 = vld [vmem:[#allocation15 + $0x158] sm:$0xff]
    %v3978 = vld [vmem:[#allocation15 + $0x160] sm:$0xff]
    %v3979 = vld [vmem:[#allocation15 + $0x168] sm:$0xff]
    %v3980 = vld [vmem:[#allocation15 + $0x170] sm:$0xff]
    %v3981 = vld [vmem:[#allocation15 + $0x178] sm:$0xff]
    %v3982 = vld [vmem:[#allocation15 + $0x180] sm:$0xff]
    %v3983 = vld [vmem:[#allocation15 + $0x188] sm:$0xff]
    %v3984 = vld [vmem:[#allocation15 + $0x190] sm:$0xff]
    %v3985 = vld [vmem:[#allocation15 + $0x198] sm:$0xff]
    %v3986 = vld [vmem:[#allocation15 + $0x1a0] sm:$0xff]
    %v3987 = vld [vmem:[#allocation15 + $0x1a8] sm:$0xff]
    %v3988 = vld [vmem:[#allocation15 + $0x1b0] sm:$0xff]
    %v3989 = vld [vmem:[#allocation15 + $0x1b8] sm:$0xff]
    %v3990 = vld [vmem:[#allocation15 + $0x1c0] sm:$0xff]
    %v3991 = vld [vmem:[#allocation15 + $0x1c8] sm:$0xff]
    %v3992 = vld [vmem:[#allocation15 + $0x1d0] sm:$0xff]
    %v3993 = vld [vmem:[#allocation15 + $0x1d8] sm:$0xff]
    %v3994 = vld [vmem:[#allocation15 + $0x1e0] sm:$0xff]
    %v3995 = vld [vmem:[#allocation15 + $0x1e8] sm:$0xff]
    %v3996 = vld [vmem:[#allocation15 + $0x1f0] sm:$0xff]
    %v3997 = vld [vmem:[#allocation15 + $0x1f8] sm:$0xff]
    %v3999 = vrot.slane %v3928, 4
    %4001 = vmatpush.msra.mxu0 %v3994
    %4002 = vmatpush.msra.mxu0 %v3990
    %4003 = vmatpush.msra.mxu0 %v3986
    %4004 = vmatpush.msra.mxu0 %v3982
    %4005 = vmatpush.msra.mxu0 %v3978
    %4006 = vmatpush.msra.mxu0 %v3974
    %4007 = vmatpush.msra.mxu0 %v3970
    %4008 = vmatpush.msra.mxu0 %v3966
    %4009 = vmatpush.msra.mxu0 %v3962
    %4010 = vmatpush.msra.mxu0 %v3958
    %4011 = vmatpush.msra.mxu0 %v3954
    %4012 = vmatpush.msra.mxu0 %v3950
    %4013 = vmatpush.msra.mxu0 %v3946
    %4014 = vmatpush.msra.mxu0 %v3942
    %4015 = vmatpush.msra.mxu0 %v3938
    %4016 = vmatpush.msra.mxu0 %v3934
    %4017 = vmatmul.f32.gmra.mxu0 %v3999
    %v4018 = vpop.f32.mrf.mxu0
    %v4019 = vadd.f32 0.0, %v4018
    %4020 = vdwg.mxu0
    %4021 = vmatpush.msra.mxu0 %v3995
    %4022 = vmatpush.msra.mxu0 %v3991
    %4023 = vmatpush.msra.mxu0 %v3987
    %4024 = vmatpush.msra.mxu0 %v3983
    %4025 = vmatpush.msra.mxu0 %v3979
    %4026 = vmatpush.msra.mxu0 %v3975
    %4027 = vmatpush.msra.mxu0 %v3971
    %4028 = vmatpush.msra.mxu0 %v3967
    %4029 = vmatpush.msra.mxu0 %v3963
    %4030 = vmatpush.msra.mxu0 %v3959
    %4031 = vmatpush.msra.mxu0 %v3955
    %4032 = vmatpush.msra.mxu0 %v3951
    %4033 = vmatpush.msra.mxu0 %v3947
    %4034 = vmatpush.msra.mxu0 %v3943
    %4035 = vmatpush.msra.mxu0 %v3939
    %4036 = vmatpush.msra.mxu0 %v3935
    %4037 = vmatmul.f32.gmra.mxu0 %v3999
    %v4038 = vpop.f32.mrf.mxu0
    %v4039 = vadd.f32 0.0, %v4038
    %4040 = vdwg.mxu0
    %4041 = vmatpush.msra.mxu0 %v3996
    %4042 = vmatpush.msra.mxu0 %v3992
    %4043 = vmatpush.msra.mxu0 %v3988
    %4044 = vmatpush.msra.mxu0 %v3984
    %4045 = vmatpush.msra.mxu0 %v3980
    %4046 = vmatpush.msra.mxu0 %v3976
    %4047 = vmatpush.msra.mxu0 %v3972
    %4048 = vmatpush.msra.mxu0 %v3968
    %4049 = vmatpush.msra.mxu0 %v3964
    %4050 = vmatpush.msra.mxu0 %v3960
    %4051 = vmatpush.msra.mxu0 %v3956
    %4052 = vmatpush.msra.mxu0 %v3952
    %4053 = vmatpush.msra.mxu0 %v3948
    %4054 = vmatpush.msra.mxu0 %v3944
    %4055 = vmatpush.msra.mxu0 %v3940
    %4056 = vmatpush.msra.mxu0 %v3936
    %4057 = vmatmul.f32.gmra.mxu0 %v3999
    %v4058 = vpop.f32.mrf.mxu0
    %v4059 = vadd.f32 0.0, %v4058
    %4060 = vdwg.mxu0
    %4061 = vmatpush.msra.mxu0 %v3997
    %4062 = vmatpush.msra.mxu0 %v3993
    %4063 = vmatpush.msra.mxu0 %v3989
    %4064 = vmatpush.msra.mxu0 %v3985
    %4065 = vmatpush.msra.mxu0 %v3981
    %4066 = vmatpush.msra.mxu0 %v3977
    %4067 = vmatpush.msra.mxu0 %v3973
    %4068 = vmatpush.msra.mxu0 %v3969
    %4069 = vmatpush.msra.mxu0 %v3965
    %4070 = vmatpush.msra.mxu0 %v3961
    %4071 = vmatpush.msra.mxu0 %v3957
    %4072 = vmatpush.msra.mxu0 %v3953
    %4073 = vmatpush.msra.mxu0 %v3949
    %4074 = vmatpush.msra.mxu0 %v3945
    %4075 = vmatpush.msra.mxu0 %v3941
    %4076 = vmatpush.msra.mxu0 %v3937
    %4077 = vmatmul.f32.gmra.mxu0 %v3999
    %v4078 = vpop.f32.mrf.mxu0
    %v4079 = vadd.f32 0.0, %v4078
    %4080 = vdwg.mxu0
    %v4085 = vrot.slane %v4019, 2
    %v4086 = vrot.slane %v4039, 2
    %v4087 = vrot.slane %v4059, 2
    %v4088 = vrot.slane %v4079, 2
    %v4093 = vadd.f32 %v3930, %v4085
    %v4094 = vadd.f32 %v3931, %v4086
    %v4095 = vadd.f32 %v3932, %v4087
    %v4096 = vadd.f32 %v3933, %v4088
    %v4097 = vxor.u32 %v4093, 2147483648
    %v4098 = vmul.f32 %v4097, 1.442695
    %v4099 = vpow.pop %v4098
    %v4100 = vadd.f32 %v4099, 1.0
    %v4101 = vrcp.pop %v4100
    %v4102 = vmul.f32 %v4100, %v4101
    %v4103 = vsub.f32 1.0, %v4102
    %v4104 = vmul.f32 %v4101, %v4103
    %v4105 = vadd.f32 %v4101, %v4104
    %vm4106 = vweird.f32 %v4100
    %vm4107 = vweird.f32 %v4101
    %vm4108 = vmor %vm4106, %vm4107
    %v4109 = vsel %vm4108, %v4101, %v4105
    %v4110 = vand.u32 2147483647, %v4100
    %vm4111 = vcmp.eq.f32.partialorder %v4110, 8.507059e+37
    %v4112 = vand.u32 %v4100, 2147483648
    %v4113 = vor.u32 1.1754944e-38, %v4112
    %v4114 = vsel %vm4111, %v4113, %v4109
    %v4115 = vmul.f32 1.0, %v4114
    %v4116 = vxor.u32 %v4094, 2147483648
    %v4117 = vmul.f32 %v4116, 1.442695
    %v4118 = vpow.pop %v4117
    %v4119 = vadd.f32 %v4118, 1.0
    %v4120 = vrcp.pop %v4119
    %v4121 = vmul.f32 %v4119, %v4120
    %v4122 = vsub.f32 1.0, %v4121
    %v4123 = vmul.f32 %v4120, %v4122
    %v4124 = vadd.f32 %v4120, %v4123
    %vm4125 = vweird.f32 %v4119
    %vm4126 = vweird.f32 %v4120
    %vm4127 = vmor %vm4125, %vm4126
    %v4128 = vsel %vm4127, %v4120, %v4124
    %v4129 = vand.u32 2147483647, %v4119
    %vm4130 = vcmp.eq.f32.partialorder %v4129, 8.507059e+37
    %v4131 = vand.u32 %v4119, 2147483648
    %v4132 = vor.u32 1.1754944e-38, %v4131
    %v4133 = vsel %vm4130, %v4132, %v4128
    %v4134 = vmul.f32 1.0, %v4133
    %v4135 = vtanh.pop %v4095
    %v4136 = vxor.u32 %v4096, 2147483648
    %v4137 = vmul.f32 %v4136, 1.442695
    %v4138 = vpow.pop %v4137
    %v4139 = vadd.f32 %v4138, 1.0
    %v4140 = vrcp.pop %v4139
    %v4141 = vmul.f32 %v4139, %v4140
    %v4142 = vsub.f32 1.0, %v4141
    %v4143 = vmul.f32 %v4140, %v4142
    %v4144 = vadd.f32 %v4140, %v4143
    %vm4145 = vweird.f32 %v4139
    %vm4146 = vweird.f32 %v4140
    %vm4147 = vmor %vm4145, %vm4146
    %v4148 = vsel %vm4147, %v4140, %v4144
    %v4149 = vand.u32 2147483647, %v4139
    %vm4150 = vcmp.eq.f32.partialorder %v4149, 8.507059e+37
    %v4151 = vand.u32 %v4139, 2147483648
    %v4152 = vor.u32 1.1754944e-38, %v4151
    %v4153 = vsel %vm4150, %v4152, %v4148
    %v4154 = vmul.f32 1.0, %v4153
    %v4156 = vrot.slane %v3926, 6
    %v4158 = vmul.f32 %v4134, %v4156
    %v4159 = vmul.f32 %v4115, %v4135
    %v4160 = vadd.f32 %v4158, %v4159
    %v4161 = vtanh.pop %v4160
    %v4162 = vmul.f32 %v4154, %v4161
    %4163 = vst [vmem:[#allocation3 + $0x8] sm:$0xc0] %v4162
    %s4164 = scalar_lea.vmem [#allocation20], 2
    %4165 = vst [vmem:[%s4164 - $0x6] sm:$0xc0] %v4162
    %s4166 = scalar_lea.vmem [#allocation22], 2
    %4167 = vst [vmem:[%s4166 - $0x6] sm:$0xc0] %v4160
    %v4168 = vld [vmem:[#allocation3] sm:$0xff]
    %v4169 = vld [vmem:[#allocation3 + $0x8] sm:$0xff]
    %v4170 = vld [vmem:[#allocation18] sm:$0xff]
    %v4171 = vld [vmem:[#allocation18 + $0x8] sm:$0xff]
    %v4172 = vld [vmem:[#allocation18 + $0x10] sm:$0xff]
    %v4173 = vld [vmem:[#allocation18 + $0x18] sm:$0xff]
    %v4174 = vld [vmem:[#allocation18 + $0x20] sm:$0xff]
    %v4175 = vld [vmem:[#allocation18 + $0x28] sm:$0xff]
    %v4176 = vld [vmem:[#allocation18 + $0x30] sm:$0xff]
    %v4177 = vld [vmem:[#allocation18 + $0x38] sm:$0xff]
    %v4178 = vld [vmem:[#allocation18 + $0x40] sm:$0xff]
    %v4179 = vld [vmem:[#allocation18 + $0x48] sm:$0xff]
    %v4180 = vld [vmem:[#allocation18 + $0x50] sm:$0xff]
    %v4181 = vld [vmem:[#allocation18 + $0x58] sm:$0xff]
    %v4182 = vld [vmem:[#allocation18 + $0x60] sm:$0xff]
    %v4183 = vld [vmem:[#allocation18 + $0x68] sm:$0xff]
    %v4184 = vld [vmem:[#allocation18 + $0x70] sm:$0xff]
    %v4185 = vld [vmem:[#allocation18 + $0x78] sm:$0xff]
    %v4186 = vld [vmem:[%s10] sm:$0x1]
    %v4188 = vperm.slane %v4186, 0
    %4190 = vmatpush.msra.mxu0 %v4185
    %4191 = vmatpush.msra.mxu0 %v4184
    %4192 = vmatpush.msra.mxu0 %v4183
    %4193 = vmatpush.msra.mxu0 %v4182
    %4194 = vmatpush.msra.mxu0 %v4181
    %4195 = vmatpush.msra.mxu0 %v4180
    %4196 = vmatpush.msra.mxu0 %v4179
    %4197 = vmatpush.msra.mxu0 %v4178
    %4198 = vmatpush.msra.mxu0 %v4177
    %4199 = vmatpush.msra.mxu0 %v4176
    %4200 = vmatpush.msra.mxu0 %v4175
    %4201 = vmatpush.msra.mxu0 %v4174
    %4202 = vmatpush.msra.mxu0 %v4173
    %4203 = vmatpush.msra.mxu0 %v4172
    %4204 = vmatpush.msra.mxu0 %v4171
    %4205 = vmatpush.msra.mxu0 %v4170
    %4206 = vmatmul.f32.gmra.mxu0 %v4168
    %v4207 = vpop.f32.mrf.mxu0
    %v4208 = vadd.f32 %v4188, %v4207
    %4209 = vmatmul.f32.gmra.mxu0 %v4169
    %v4210 = vpop.f32.mrf.mxu0
    %v4211 = vadd.f32 %v4188, %v4210
    %4212 = vdwg.mxu0
    %4213 = vst [vmem:[#allocation19] sm:$0xff] %v4208
    %4214 = vst [vmem:[#allocation19 + $0x8] sm:$0xff] %v4211
    // Predicated region
    $region82: #{tpu_custom_call.1} parent=1 // pred_check
      _
    $region83: #{tpu_custom_call.1} parent=1 // pred_check_branch
      %4216 = sbr.rel (0) target = $region85
    $region84: #{tpu_custom_call.1} parent=1 // pred_region
      %4218 = vsyncadd [#allocation6], 0
      %s4219 = sshll.u32 [#allocation19], 4
      %s4220 = int_to_ptr.vmem [resolvable:$true] %s4219
      %s4221 = sshll.u32 %s11, 4
      %s4222 = int_to_ptr.hbm [resolvable:$true] %s4221
      %4227 = dma.vmem_to_hbm [thread:$0]  %s4220, 256, %s4222, [#allocation6], 128, 128, 8
    $region85: #{tpu_custom_call.1} parent=1 // pred_fallthru
      _
    // Predicated region
    $region86: #{tpu_custom_call.1} parent=1 // pred_check
      _
    $region87: #{tpu_custom_call.1} parent=1 // pred_check_branch
      %4229 = sbr.rel (0) target = $region89
    $region88: #{tpu_custom_call.1} parent=1 // pred_region
      %4231 = vsyncadd [#allocation21], 0
      %s4232 = sshll.u32 [#allocation20], 4
      %s4233 = int_to_ptr.vmem [resolvable:$true] %s4232
      %s4234 = sshll.u32 %s12, 4
      %s4235 = int_to_ptr.hbm [resolvable:$true] %s4234
      %4240 = dma.vmem_to_hbm [thread:$0]  %s4233, 64, %s4235, [#allocation21], 32, 32, 2
    $region89: #{tpu_custom_call.1} parent=1 // pred_fallthru
      _
    // Predicated region
    $region90: #{tpu_custom_call.1} parent=1 // pred_check
      _
    $region91: #{tpu_custom_call.1} parent=1 // pred_check_branch
      %4242 = sbr.rel (0) target = $region93
    $region92: #{tpu_custom_call.1} parent=1 // pred_region
      %4244 = vsyncadd [#allocation21], 0
      %s4245 = sshll.u32 [#allocation22], 4
      %s4246 = int_to_ptr.vmem [resolvable:$true] %s4245
      %s4247 = sshll.u32 %s13, 4
      %s4248 = int_to_ptr.hbm [resolvable:$true] %s4247
      %4253 = dma.vmem_to_hbm [thread:$0]  %s4246, 64, %s4248, [#allocation21], 32, 32, 2
    $region93: #{tpu_custom_call.1} parent=1 // pred_fallthru
      _
    // Predicated region
    $region94: #{tpu_custom_call.1} parent=1 // pred_check
      _
    $region95: #{tpu_custom_call.1} parent=1 // pred_check_branch
      %4255 = sbr.rel (0) target = $region97
    $region96: #{tpu_custom_call.1} parent=1 // pred_region
      %4257 = dma.done [#allocation6], 256
    $region97: #{tpu_custom_call.1} parent=1 // pred_fallthru
      _
    // Predicated region
    $region98: #{tpu_custom_call.1} parent=1 // pred_check
      _
    $region99: #{tpu_custom_call.1} parent=1 // pred_check_branch
      %4259 = sbr.rel (0) target = $region101
    $region100: #{tpu_custom_call.1} parent=1 // pred_region
      %4261 = dma.done [#allocation21], 64
    $region101: #{tpu_custom_call.1} parent=1 // pred_fallthru
      _
    // Predicated region
    $region102: #{tpu_custom_call.1} parent=1 // pred_check
      _
    $region103: #{tpu_custom_call.1} parent=1 // pred_check_branch
      %4263 = sbr.rel (0) target = $region105
    $region104: #{tpu_custom_call.1} parent=1 // pred_region
      %4265 = dma.done [#allocation21], 64
    $region105: #{tpu_custom_call.1} parent=1 // pred_fallthru
      _
    %4266 = vsyncpa [#allocation5], 1
    %4267 = vsyncpa [#allocation8], 1
    %4268 = vsyncpa [#allocation11], 1
    %4269 = vsyncpa [#allocation14], 1
    %4270 = vsyncpa [#allocation17], 1
    %4271 = vsyncpa [#allocation6], 1
    %4272 = vsyncpa [#allocation21], 1

</llo_original>
